<compile_context>
chip_gen: v5e
topology: v5e:2x2
jax: 0.10.0
libtpu: 0.0.40
codegen_flags: <defaults>
</compile_context>

<pallas_src>
import math

import jax
import jax.numpy as jnp
from jax.experimental import pallas as pl
from jax.experimental.pallas import tpu as pltpu


def fqf_forward_kernel(x_ref, a_ref, wx_ref, wa_ref, b_enc_ref,
                       w_prop_ref, b_prop_ref, tri_ref, pi_steps_ref,
                       w_emb_ref, b_emb_ref, w_fc_ref, b_fc_ref, out_ref):
    x = x_ref[...]                                             # (Bt, obs)
    a = a_ref[...]                                             # (Bt, act)

    # --- encoder: h = relu(x @ Wx + a @ Wa + b_enc) -----------------------
    h = jnp.dot(x, wx_ref[...], preferred_element_type=jnp.float32)
    h = h + jnp.dot(a, wa_ref[...], preferred_element_type=jnp.float32)
    h = jnp.maximum(h + b_enc_ref[...], 0.0)                   # (Bt, F)
    Bt, F = h.shape

    # --- FQF taus: proposal linear + softmax + cumsum ---------------------
    logits = jnp.dot(h, w_prop_ref[...],
                     preferred_element_type=jnp.float32) + b_prop_ref[...]
    m = jnp.max(logits, axis=1, keepdims=True)
    e = jnp.exp(logits - m)
    probs = e / jnp.sum(e, axis=1, keepdims=True)              # (Bt, N)
    N = probs.shape[1]

    # cumsum along lanes via precomputed upper-triangular matmul (MXU)
    taus = jnp.dot(probs, tri_ref[...],
                   preferred_element_type=jnp.float32)         # (Bt, N)
    taus_prime = taus - 0.5 * probs                            # == (taus+taus_minus)/2

    # --- cosine embedding + quantile head ---------------------------------
    pi_steps = pi_steps_ref[...]                               # (1, E) = pi*(k+1)
    E = pi_steps.shape[1]
    prior = jnp.cos(pi_steps[None, :, :] * taus_prime[:, :, None])  # (Bt, N, E)

    phi = jnp.maximum(
        jnp.dot(prior.reshape(Bt * N, E), w_emb_ref[...],
                preferred_element_type=jnp.float32) + b_emb_ref[...], 0.0)
    phi = phi.reshape(Bt, N, F)                                # (Bt, N, F)

    # fold fc weight into h once; contract F without materializing (B,N,F) prod
    hw = h * w_fc_ref[...]                                     # (Bt, F)
    q = jnp.sum(phi * hw[:, None, :], axis=2) + b_fc_ref[0, 0]  # (Bt, N)

    # weight = taus - taus_minus == probs (exact identity)
    out_ref[...] = jnp.sum(probs * q, axis=1, keepdims=True)   # (Bt, 1)


def continuous_fqf_forward(x, action, params, *, block_b=128):
    x = x.astype(jnp.float32)
    action = action.astype(jnp.float32)
    B, obs_dim = x.shape
    act_dim = action.shape[1]

    w_enc = params["w_enc"]
    F = w_enc.shape[1]
    N = params["w_prop"].shape[1]
    E = params["w_emb"].shape[0]

    # split encoder weight so the [x, action] concat never hits HBM
    w_enc_x = w_enc[:obs_dim]
    w_enc_a = w_enc[obs_dim:]

    # constants precomputed once outside the kernel
    row = jnp.arange(N, dtype=jnp.int32)[:, None]
    col = jnp.arange(N, dtype=jnp.int32)[None, :]
    tri = (row <= col).astype(jnp.float32)                     # (N, N)
    pi_steps = (jnp.pi * jnp.arange(1, E + 1, dtype=jnp.float32)).reshape(1, E)

    # batch tile: multiple of 8 sublanes; pad B to a multiple of the tile
    bt = min(block_b, ((B + 7) // 8) * 8)
    bt = max(8, (bt // 8) * 8)
    pad = (-B) % bt
    if pad:
        x = jnp.pad(x, ((0, pad), (0, 0)))
        action = jnp.pad(action, ((0, pad), (0, 0)))
    Bp = B + pad
    grid = (Bp // bt,)

    def const2d(shape):
        return pl.BlockSpec(shape, lambda i: (0, 0))

    out = pl.pallas_call(
        fqf_forward_kernel,
        out_shape=jax.ShapeDtypeStruct((Bp, 1), jnp.float32),
        grid=grid,
        in_specs=[
            pl.BlockSpec((bt, obs_dim), lambda i: (i, 0)),     # x
            pl.BlockSpec((bt, act_dim), lambda i: (i, 0)),     # action
            const2d((obs_dim, F)),                             # w_enc_x
            const2d((act_dim, F)),                             # w_enc_a
            const2d((1, F)),                                   # b_enc
            const2d((F, N)),                                   # w_prop
            const2d((1, N)),                                   # b_prop
            const2d((N, N)),                                   # tri (cumsum)
            const2d((1, E)),                                   # pi * steps
            const2d((E, F)),                                   # w_emb
            const2d((1, F)),                                   # b_emb
            const2d((1, F)),                                   # w_fc (row)
            pl.BlockSpec(memory_space=pltpu.MemorySpace.SMEM),  # b_fc scalar
        ],
        out_specs=pl.BlockSpec((bt, 1), lambda i: (i, 0)),
        compiler_params=pltpu.CompilerParams(
            dimension_semantics=("parallel",),
            vmem_limit_bytes=32 * 1024 * 1024),
    )(x, action, w_enc_x, w_enc_a, params["b_enc"],
      params["w_prop"], params["b_prop"], tri, pi_steps,
      params["w_emb"], params["b_emb"], params["w_fc"], params["b_fc"])
    return out[:B]


def reference_forward(x, action, params):
    """Pure-JAX mirror of the PyTorch forward for verification."""
    xa = jnp.concatenate([x, action], axis=1)
    h = jax.nn.relu(xa @ params["w_enc"] + params["b_enc"])
    logits = h @ params["w_prop"] + params["b_prop"]
    probs = jax.nn.softmax(logits, axis=1)
    taus = jnp.cumsum(probs, axis=1)
    taus_minus = jnp.concatenate(
        [jnp.zeros((xa.shape[0], 1), jnp.float32), taus[:, :-1]], axis=1)
    taus_prime = 0.5 * (taus + taus_minus)
    E = params["w_emb"].shape[0]
    steps = jnp.arange(1, E + 1, dtype=jnp.float32)
    prior = jnp.cos(jnp.pi * steps[None, None, :] * taus_prime[:, :, None])
    phi = jax.nn.relu(prior @ params["w_emb"] + params["b_emb"])
    prod = h[:, None, :] * phi
    q = jnp.sum(prod * params["w_fc"][None, :, :], axis=2) + params["b_fc"][0, 0]
    weight = taus - taus_minus
    return jnp.sum(weight * q, axis=1, keepdims=True)


def init_params(key, obs_dim, action_size, feature_size, embed_size, n_quantiles):
    d_in = obs_dim + action_size
    ks = jax.random.split(key, 8)

    def lin(kw, fan_in, fan_out):
        s = 1.0 / math.sqrt(fan_in)
        return jax.random.uniform(kw, (fan_in, fan_out), jnp.float32, -s, s)

    return {
        "w_enc": lin(ks[0], d_in, feature_size),
        "b_enc": jax.random.uniform(ks[1], (1, feature_size), jnp.float32, -0.1, 0.1),
        "w_prop": lin(ks[2], feature_size, n_quantiles),
        "b_prop": jax.random.uniform(ks[3], (1, n_quantiles), jnp.float32, -0.1, 0.1),
        "w_emb": lin(ks[4], embed_size, feature_size),
        "b_emb": jax.random.uniform(ks[5], (1, feature_size), jnp.float32, -0.1, 0.1),
        # fc: Linear(feature_size, 1) stored as a (1, F) row vector
        "w_fc": lin(ks[6], feature_size, 1).T,
        "b_fc": jax.random.uniform(ks[7], (1, 1), jnp.float32, -0.1, 0.1),
    }


if __name__ == "__main__":
    OBS, ACT = 16, 4
    FEATURE, EMBED, N_QUANTILES = 32, 64, 32

    key = jax.random.PRNGKey(0)
    k_x, k_a, k_p, k_x2, k_a2 = jax.random.split(key, 5)
    params = init_params(k_p, OBS, ACT, FEATURE, EMBED, N_QUANTILES)

    # small batch (single grid step)
    x = jax.random.normal(k_x, (2, OBS), jnp.float32)
    action = jax.random.normal(k_a, (2, ACT), jnp.float32)
    out = jax.block_until_ready(continuous_fqf_forward(x, action, params))
    assert out.shape == (2, 1) and out.dtype == jnp.float32
    ref = jax.block_until_ready(reference_forward(x, action, params))
    assert jnp.allclose(out, ref, rtol=1e-3, atol=1e-3), (out, ref)

    # batch not a multiple of the tile -> exercises padding + multi-step grid
    x2 = jax.random.normal(k_x2, (37, OBS), jnp.float32)
    a2 = jax.random.normal(k_a2, (37, ACT), jnp.float32)
    out2 = jax.block_until_ready(continuous_fqf_forward(x2, a2, params, block_b=16))
    assert out2.shape == (37, 1)
    ref2 = jax.block_until_ready(reference_forward(x2, a2, params))
    assert jnp.allclose(out2, ref2, rtol=1e-3, atol=1e-3), (out2, ref2)

    print("KERNEL_OK")
</pallas_src>

<mosaic_0001>
module attributes {stable_mosaic.version = 11 : i64} {
  func.func @fqf_forward_kernel(%arg0: i32, %arg1: memref<8x16xf32, #tpu.memory_space<vmem>>, %arg2: memref<8x4xf32, #tpu.memory_space<vmem>>, %arg3: memref<16x32xf32, #tpu.memory_space<vmem>>, %arg4: memref<4x32xf32, #tpu.memory_space<vmem>>, %arg5: memref<1x32xf32, #tpu.memory_space<vmem>>, %arg6: memref<32x32xf32, #tpu.memory_space<vmem>>, %arg7: memref<1x32xf32, #tpu.memory_space<vmem>>, %arg8: memref<32x32xf32, #tpu.memory_space<vmem>>, %arg9: memref<1x64xf32, #tpu.memory_space<vmem>>, %arg10: memref<64x32xf32, #tpu.memory_space<vmem>>, %arg11: memref<1x32xf32, #tpu.memory_space<vmem>>, %arg12: memref<1x32xf32, #tpu.memory_space<vmem>>, %arg13: memref<1x1xf32, #tpu.memory_space<smem>>, %arg14: memref<8x1xf32, #tpu.memory_space<vmem>>) attributes {dimension_semantics = [#tpu.dimension_semantics<parallel>], iteration_bounds = array<i64: 1>, scalar_prefetch = 0 : i64, scratch_operands = 0 : i64, tpu.core_type = #tpu.core_type<tc>, window_params = [{transform_indices = @transform_0, window_bounds = array<i64: 8, 16>}, {transform_indices = @transform_1, window_bounds = array<i64: 8, 4>}, {pipeline_mode = #tpu.pipeline_mode<synchronous>, transform_indices = @transform_2, window_bounds = array<i64: 16, 32>}, {pipeline_mode = #tpu.pipeline_mode<synchronous>, transform_indices = @transform_3, window_bounds = array<i64: 4, 32>}, {pipeline_mode = #tpu.pipeline_mode<synchronous>, transform_indices = @transform_4, window_bounds = array<i64: 1, 32>}, {pipeline_mode = #tpu.pipeline_mode<synchronous>, transform_indices = @transform_5, window_bounds = array<i64: 32, 32>}, {pipeline_mode = #tpu.pipeline_mode<synchronous>, transform_indices = @transform_6, window_bounds = array<i64: 1, 32>}, {pipeline_mode = #tpu.pipeline_mode<synchronous>, transform_indices = @transform_7, window_bounds = array<i64: 32, 32>}, {pipeline_mode = #tpu.pipeline_mode<synchronous>, transform_indices = @transform_8, window_bounds = array<i64: 1, 64>}, {pipeline_mode = #tpu.pipeline_mode<synchronous>, transform_indices = @transform_9, window_bounds = array<i64: 64, 32>}, {pipeline_mode = #tpu.pipeline_mode<synchronous>, transform_indices = @transform_10, window_bounds = array<i64: 1, 32>}, {pipeline_mode = #tpu.pipeline_mode<synchronous>, transform_indices = @transform_11, window_bounds = array<i64: 1, 32>}, {transform_indices = @transform_12, window_bounds = array<i64: 1, 1>}, {transform_indices = @transform_13, window_bounds = array<i64: 8, 1>}]} {
    %c0 = arith.constant 0 : index
    %c0_0 = arith.constant 0 : index
    %0 = vector.load %arg1[%c0, %c0_0] : memref<8x16xf32, #tpu.memory_space<vmem>>, vector<8x16xf32>
    %c0_1 = arith.constant 0 : index
    %c0_2 = arith.constant 0 : index
    %1 = vector.load %arg2[%c0_1, %c0_2] : memref<8x4xf32, #tpu.memory_space<vmem>>, vector<8x4xf32>
    %c0_3 = arith.constant 0 : index
    %c0_4 = arith.constant 0 : index
    %2 = vector.load %arg3[%c0_3, %c0_4] : memref<16x32xf32, #tpu.memory_space<vmem>>, vector<16x32xf32>
    %cst = arith.constant dense<0.000000e+00> : vector<8x32xf32>
    %3 = tpu.matmul %0, %2, %cst {dimension_numbers = #tpu.dot_dimension_numbers<[1], [0], [0], [1], [0, 0, 1, 1], [], []>} : vector<8x16xf32>, vector<16x32xf32>, vector<8x32xf32> -> vector<8x32xf32>
    %c0_5 = arith.constant 0 : index
    %c0_6 = arith.constant 0 : index
    %4 = vector.load %arg4[%c0_5, %c0_6] : memref<4x32xf32, #tpu.memory_space<vmem>>, vector<4x32xf32>
    %cst_7 = arith.constant dense<0.000000e+00> : vector<8x32xf32>
    %5 = tpu.matmul %1, %4, %cst_7 {dimension_numbers = #tpu.dot_dimension_numbers<[1], [0], [0], [1], [0, 0, 1, 1], [], []>} : vector<8x4xf32>, vector<4x32xf32>, vector<8x32xf32> -> vector<8x32xf32>
    %6 = arith.addf %3, %5 : vector<8x32xf32>
    %c0_8 = arith.constant 0 : index
    %c0_9 = arith.constant 0 : index
    %7 = vector.load %arg5[%c0_8, %c0_9] : memref<1x32xf32, #tpu.memory_space<vmem>>, vector<1x32xf32>
    %8 = vector.broadcast %7 : vector<1x32xf32> to vector<8x32xf32>
    %9 = arith.addf %6, %8 : vector<8x32xf32>
    %cst_10 = arith.constant 0.000000e+00 : f32
    %10 = vector.broadcast %cst_10 : f32 to vector<8x32xf32>
    %11 = arith.maximumf %9, %10 : vector<8x32xf32>
    %c0_11 = arith.constant 0 : index
    %c0_12 = arith.constant 0 : index
    %12 = vector.load %arg6[%c0_11, %c0_12] : memref<32x32xf32, #tpu.memory_space<vmem>>, vector<32x32xf32>
    %cst_13 = arith.constant dense<0.000000e+00> : vector<8x32xf32>
    %13 = tpu.matmul %11, %12, %cst_13 {dimension_numbers = #tpu.dot_dimension_numbers<[1], [0], [0], [1], [0, 0, 1, 1], [], []>} : vector<8x32xf32>, vector<32x32xf32>, vector<8x32xf32> -> vector<8x32xf32>
    %c0_14 = arith.constant 0 : index
    %c0_15 = arith.constant 0 : index
    %14 = vector.load %arg7[%c0_14, %c0_15] : memref<1x32xf32, #tpu.memory_space<vmem>>, vector<1x32xf32>
    %15 = vector.broadcast %14 : vector<1x32xf32> to vector<8x32xf32>
    %16 = arith.addf %13, %15 : vector<8x32xf32>
    %cst_16 = arith.constant dense<0xFF800000> : vector<8xf32>
    %17 = vector.multi_reduction <maximumf>, %16, %cst_16 [1] : vector<8x32xf32> to vector<8xf32>
    %18 = vector.shape_cast %17 : vector<8xf32> to vector<8x1xf32>
    %19 = vector.broadcast %18 : vector<8x1xf32> to vector<8x32xf32>
    %20 = arith.subf %16, %19 : vector<8x32xf32>
    %21 = math.exp %20 : vector<8x32xf32>
    %cst_17 = arith.constant dense<0.000000e+00> : vector<8xf32>
    %22 = vector.multi_reduction <add>, %21, %cst_17 [1] : vector<8x32xf32> to vector<8xf32>
    %23 = vector.shape_cast %22 : vector<8xf32> to vector<8x1xf32>
    %24 = vector.broadcast %23 : vector<8x1xf32> to vector<8x32xf32>
    %25 = arith.divf %21, %24 : vector<8x32xf32>
    %c0_18 = arith.constant 0 : index
    %c0_19 = arith.constant 0 : index
    %26 = vector.load %arg8[%c0_18, %c0_19] : memref<32x32xf32, #tpu.memory_space<vmem>>, vector<32x32xf32>
    %cst_20 = arith.constant dense<0.000000e+00> : vector<8x32xf32>
    %27 = tpu.matmul %25, %26, %cst_20 {dimension_numbers = #tpu.dot_dimension_numbers<[1], [0], [0], [1], [0, 0, 1, 1], [], []>} : vector<8x32xf32>, vector<32x32xf32>, vector<8x32xf32> -> vector<8x32xf32>
    %cst_21 = arith.constant 5.000000e-01 : f32
    %28 = vector.broadcast %cst_21 : f32 to vector<8x32xf32>
    %29 = arith.mulf %28, %25 : vector<8x32xf32>
    %30 = arith.subf %27, %29 : vector<8x32xf32>
    %c0_22 = arith.constant 0 : index
    %c0_23 = arith.constant 0 : index
    %31 = vector.load %arg9[%c0_22, %c0_23] : memref<1x64xf32, #tpu.memory_space<vmem>>, vector<1x64xf32>
    %32 = vector.shape_cast %31 : vector<1x64xf32> to vector<1x1x64xf32>
    %33 = vector.shape_cast %30 : vector<8x32xf32> to vector<8x32x1xf32>
    %34 = vector.broadcast %32 : vector<1x1x64xf32> to vector<8x32x64xf32>
    %35 = vector.broadcast %33 : vector<8x32x1xf32> to vector<8x32x64xf32>
    %36 = arith.mulf %34, %35 : vector<8x32x64xf32>
    %37 = math.cos %36 : vector<8x32x64xf32>
    %38 = vector.shape_cast %37 : vector<8x32x64xf32> to vector<256x64xf32>
    %c0_24 = arith.constant 0 : index
    %c0_25 = arith.constant 0 : index
    %39 = vector.load %arg10[%c0_24, %c0_25] : memref<64x32xf32, #tpu.memory_space<vmem>>, vector<64x32xf32>
    %cst_26 = arith.constant dense<0.000000e+00> : vector<256x32xf32>
    %40 = tpu.matmul %38, %39, %cst_26 {dimension_numbers = #tpu.dot_dimension_numbers<[1], [0], [0], [1], [0, 0, 1, 1], [], []>} : vector<256x64xf32>, vector<64x32xf32>, vector<256x32xf32> -> vector<256x32xf32>
    %c0_27 = arith.constant 0 : index
    %c0_28 = arith.constant 0 : index
    %41 = vector.load %arg11[%c0_27, %c0_28] : memref<1x32xf32, #tpu.memory_space<vmem>>, vector<1x32xf32>
    %42 = vector.broadcast %41 : vector<1x32xf32> to vector<256x32xf32>
    %43 = arith.addf %40, %42 : vector<256x32xf32>
    %cst_29 = arith.constant 0.000000e+00 : f32
    %44 = vector.broadcast %cst_29 : f32 to vector<256x32xf32>
    %45 = arith.maximumf %43, %44 : vector<256x32xf32>
    %46 = vector.shape_cast %45 : vector<256x32xf32> to vector<8x32x32xf32>
    %c0_30 = arith.constant 0 : index
    %c0_31 = arith.constant 0 : index
    %47 = vector.load %arg12[%c0_30, %c0_31] : memref<1x32xf32, #tpu.memory_space<vmem>>, vector<1x32xf32>
    %48 = vector.broadcast %47 : vector<1x32xf32> to vector<8x32xf32>
    %49 = arith.mulf %11, %48 : vector<8x32xf32>
    %50 = vector.shape_cast %49 : vector<8x32xf32> to vector<8x1x32xf32>
    %51 = vector.broadcast %50 : vector<8x1x32xf32> to vector<8x32x32xf32>
    %52 = arith.mulf %46, %51 : vector<8x32x32xf32>
    %cst_32 = arith.constant dense<0.000000e+00> : vector<8x32xf32>
    %53 = vector.multi_reduction <add>, %52, %cst_32 [2] : vector<8x32x32xf32> to vector<8x32xf32>
    %c0_33 = arith.constant 0 : index
    %c0_34 = arith.constant 0 : index
    %54 = memref.load %arg13[%c0_33, %c0_34] : memref<1x1xf32, #tpu.memory_space<smem>>
    %55 = vector.broadcast %54 : f32 to vector<8x32xf32>
    %56 = arith.addf %53, %55 : vector<8x32xf32>
    %57 = arith.mulf %25, %56 : vector<8x32xf32>
    %cst_35 = arith.constant dense<0.000000e+00> : vector<8xf32>
    %58 = vector.multi_reduction <add>, %57, %cst_35 [1] : vector<8x32xf32> to vector<8xf32>
    %59 = vector.shape_cast %58 : vector<8xf32> to vector<8x1xf32>
    %c0_36 = arith.constant 0 : index
    %c0_37 = arith.constant 0 : index
    %60 = vector.load %arg14[%c0_36, %c0_37] : memref<8x1xf32, #tpu.memory_space<vmem>>, vector<8x1xf32>
    tpu.vector_store %arg14[%c0_36, %c0_37], %59 {strides = array<i32>} : memref<8x1xf32, #tpu.memory_space<vmem>>, vector<8x1xf32>,
    return
  }
  func.func @transform_0(%arg0: i32) -> (i32, i32) {
    %c0_i32 = arith.constant 0 : i32
    %c0_i32_0 = arith.constant 0 : i32
    return %arg0, %c0_i32 : i32, i32
  }
  func.func @transform_1(%arg0: i32) -> (i32, i32) {
    %c0_i32 = arith.constant 0 : i32
    %c0_i32_0 = arith.constant 0 : i32
    return %arg0, %c0_i32 : i32, i32
  }
  func.func @transform_2(%arg0: i32) -> (i32, i32) {
    %c0_i32 = arith.constant 0 : i32
    %c0_i32_0 = arith.constant 0 : i32
    %c0_i32_1 = arith.constant 0 : i32
    return %c0_i32, %c0_i32_0 : i32, i32
  }
  func.func @transform_3(%arg0: i32) -> (i32, i32) {
    %c0_i32 = arith.constant 0 : i32
    %c0_i32_0 = arith.constant 0 : i32
    %c0_i32_1 = arith.constant 0 : i32
    return %c0_i32, %c0_i32_0 : i32, i32
  }
  func.func @transform_4(%arg0: i32) -> (i32, i32) {
    %c0_i32 = arith.constant 0 : i32
    %c0_i32_0 = arith.constant 0 : i32
    %c0_i32_1 = arith.constant 0 : i32
    return %c0_i32, %c0_i32_0 : i32, i32
  }
  func.func @transform_5(%arg0: i32) -> (i32, i32) {
    %c0_i32 = arith.constant 0 : i32
    %c0_i32_0 = arith.constant 0 : i32
    %c0_i32_1 = arith.constant 0 : i32
    return %c0_i32, %c0_i32_0 : i32, i32
  }
  func.func @transform_6(%arg0: i32) -> (i32, i32) {
    %c0_i32 = arith.constant 0 : i32
    %c0_i32_0 = arith.constant 0 : i32
    %c0_i32_1 = arith.constant 0 : i32
    return %c0_i32, %c0_i32_0 : i32, i32
  }
  func.func @transform_7(%arg0: i32) -> (i32, i32) {
    %c0_i32 = arith.constant 0 : i32
    %c0_i32_0 = arith.constant 0 : i32
    %c0_i32_1 = arith.constant 0 : i32
    return %c0_i32, %c0_i32_0 : i32, i32
  }
  func.func @transform_8(%arg0: i32) -> (i32, i32) {
    %c0_i32 = arith.constant 0 : i32
    %c0_i32_0 = arith.constant 0 : i32
    %c0_i32_1 = arith.constant 0 : i32
    return %c0_i32, %c0_i32_0 : i32, i32
  }
  func.func @transform_9(%arg0: i32) -> (i32, i32) {
    %c0_i32 = arith.constant 0 : i32
    %c0_i32_0 = arith.constant 0 : i32
    %c0_i32_1 = arith.constant 0 : i32
    return %c0_i32, %c0_i32_0 : i32, i32
  }
  func.func @transform_10(%arg0: i32) -> (i32, i32) {
    %c0_i32 = arith.constant 0 : i32
    %c0_i32_0 = arith.constant 0 : i32
    %c0_i32_1 = arith.constant 0 : i32
    return %c0_i32, %c0_i32_0 : i32, i32
  }
  func.func @transform_11(%arg0: i32) -> (i32, i32) {
    %c0_i32 = arith.constant 0 : i32
    %c0_i32_0 = arith.constant 0 : i32
    %c0_i32_1 = arith.constant 0 : i32
    return %c0_i32, %c0_i32_0 : i32, i32
  }
  func.func @transform_12(%arg0: i32) -> (i32, i32) {
    %c0_i32 = arith.constant 0 : i32
    %c0_i32_0 = arith.constant 0 : i32
    %c0_i32_1 = arith.constant 0 : i32
    return %c0_i32, %c0_i32_0 : i32, i32
  }
  func.func @transform_13(%arg0: i32) -> (i32, i32) {
    %c0_i32 = arith.constant 0 : i32
    %c0_i32_0 = arith.constant 0 : i32
    return %arg0, %c0_i32 : i32, i32
  }
}

</mosaic_0001>

<llo_original>
// kernel: tpu_custom_call.1
$region0: #{tpu_custom_call.1}
  #allocation0 [shape = 'u32[]', space=smem, size = 0x4, offset = 0x4, fixed_abs, tag = 'smem constant byte address 0x4 - core index']
  #allocation1 [shape = 'u32[72,128]{1,0:T(1,128)}', space=vmem, size = 0x9000, scoped, tag = 'internal scratch']
  #allocation2 [shape = 'f32[1,1]{1,0:T(1,128)S(6)}', space=smem, size = 0x200, scoped, tag = 'scoped memory for tpu_custom_call.1']
  %s0 = inlined_call_operand.vmem [shape: f32[8,16], index: 0, kind: input, shape index: {}]
  %s1 = inlined_call_operand.vmem [shape: f32[8,4], index: 1, kind: input, shape index: {}]
  %s2 = inlined_call_operand.vmem [shape: f32[16,32], index: 2, kind: input, shape index: {}]
  %s3 = inlined_call_operand.vmem [shape: f32[4,32], index: 3, kind: input, shape index: {}]
  %s4 = inlined_call_operand.vmem [shape: f32[1,32], index: 4, kind: input, shape index: {}]
  %s5 = inlined_call_operand.vmem [shape: f32[32,32], index: 5, kind: input, shape index: {}]
  %s6 = inlined_call_operand.vmem [shape: f32[1,32], index: 6, kind: input, shape index: {}]
  %s7 = inlined_call_operand.vmem [shape: f32[32,32], index: 7, kind: input, shape index: {}]
  %s8 = inlined_call_operand.vmem [shape: f32[1,64], index: 8, kind: input, shape index: {}]
  %s9 = inlined_call_operand.vmem [shape: f32[64,32], index: 9, kind: input, shape index: {}]
  %s10 = inlined_call_operand.vmem [shape: f32[1,32], index: 10, kind: input, shape index: {}]
  %s11 = inlined_call_operand.vmem [shape: f32[1,32], index: 11, kind: input, shape index: {}]
  %s12 = inlined_call_operand.<no memory space> [shape: f32[1,1], index: 12, kind: input, shape index: {}]
  %s13 = inlined_call_operand.vmem [shape: f32[8,1], index: 13, kind: output, shape index: {}]
  %s14 = sld [smem:[#allocation0]]
  $region62: #{tpu_custom_call.1} parent=0
    _
  %s16 = ssub.s32 1, %s14
  %s17 = scalar_select 0, %s16, %s14
  %18 = sst [smem:[#allocation2]] %s12
  // Predicated region
  $region2: #{tpu_custom_call.1} parent=0 // pred_check
    _
  $region3: #{tpu_custom_call.1} parent=0 // pred_check_branch
    %20 = sbr.rel (0) target = $region5
  $region4: #{tpu_custom_call.1} parent=0 // pred_region
    _
  $region5: #{tpu_custom_call.1} parent=0 // pred_fallthru
    _
  // Predicated region
  $region6: #{tpu_custom_call.1} parent=0 // pred_check
    _
  $region7: #{tpu_custom_call.1} parent=0 // pred_check_branch
    %22 = sbr.rel (0) target = $region9
  $region8: #{tpu_custom_call.1} parent=0 // pred_region
    _
  $region9: #{tpu_custom_call.1} parent=0 // pred_fallthru
    _
  // Predicated region
  $region10: #{tpu_custom_call.1} parent=0 // pred_check
    _
  $region11: #{tpu_custom_call.1} parent=0 // pred_check_branch
    %24 = sbr.rel (0) target = $region13
  $region12: #{tpu_custom_call.1} parent=0 // pred_region
    _
  $region13: #{tpu_custom_call.1} parent=0 // pred_fallthru
    _
  // Predicated region
  $region14: #{tpu_custom_call.1} parent=0 // pred_check
    _
  $region15: #{tpu_custom_call.1} parent=0 // pred_check_branch
    %26 = sbr.rel (0) target = $region17
  $region16: #{tpu_custom_call.1} parent=0 // pred_region
    _
  $region17: #{tpu_custom_call.1} parent=0 // pred_fallthru
    _
  // Predicated region
  $region18: #{tpu_custom_call.1} parent=0 // pred_check
    _
  $region19: #{tpu_custom_call.1} parent=0 // pred_check_branch
    %28 = sbr.rel (0) target = $region21
  $region20: #{tpu_custom_call.1} parent=0 // pred_region
    _
  $region21: #{tpu_custom_call.1} parent=0 // pred_fallthru
    _
  // Predicated region
  $region22: #{tpu_custom_call.1} parent=0 // pred_check
    _
  $region23: #{tpu_custom_call.1} parent=0 // pred_check_branch
    %30 = sbr.rel (0) target = $region25
  $region24: #{tpu_custom_call.1} parent=0 // pred_region
    _
  $region25: #{tpu_custom_call.1} parent=0 // pred_fallthru
    _
  // Predicated region
  $region26: #{tpu_custom_call.1} parent=0 // pred_check
    _
  $region27: #{tpu_custom_call.1} parent=0 // pred_check_branch
    %32 = sbr.rel (0) target = $region29
  $region28: #{tpu_custom_call.1} parent=0 // pred_region
    _
  $region29: #{tpu_custom_call.1} parent=0 // pred_fallthru
    _
  // Predicated region
  $region30: #{tpu_custom_call.1} parent=0 // pred_check
    _
  $region31: #{tpu_custom_call.1} parent=0 // pred_check_branch
    %34 = sbr.rel (0) target = $region33
  $region32: #{tpu_custom_call.1} parent=0 // pred_region
    _
  $region33: #{tpu_custom_call.1} parent=0 // pred_fallthru
    _
  // Predicated region
  $region34: #{tpu_custom_call.1} parent=0 // pred_check
    _
  $region35: #{tpu_custom_call.1} parent=0 // pred_check_branch
    %36 = sbr.rel (0) target = $region37
  $region36: #{tpu_custom_call.1} parent=0 // pred_region
    _
  $region37: #{tpu_custom_call.1} parent=0 // pred_fallthru
    _
  // Predicated region
  $region38: #{tpu_custom_call.1} parent=0 // pred_check
    _
  $region39: #{tpu_custom_call.1} parent=0 // pred_check_branch
    %38 = sbr.rel (0) target = $region41
  $region40: #{tpu_custom_call.1} parent=0 // pred_region
    _
  $region41: #{tpu_custom_call.1} parent=0 // pred_fallthru
    _
  // Predicated region
  $region42: #{tpu_custom_call.1} parent=0 // pred_check
    _
  $region43: #{tpu_custom_call.1} parent=0 // pred_check_branch
    %40 = sbr.rel (0) target = $region45
  $region44: #{tpu_custom_call.1} parent=0 // pred_region
    _
  $region45: #{tpu_custom_call.1} parent=0 // pred_fallthru
    _
  // Predicated region
  $region46: #{tpu_custom_call.1} parent=0 // pred_check
    _
  $region47: #{tpu_custom_call.1} parent=0 // pred_check_branch
    %42 = sbr.rel (0) target = $region49
  $region48: #{tpu_custom_call.1} parent=0 // pred_region
    _
  $region49: #{tpu_custom_call.1} parent=0 // pred_fallthru
    _
  // Predicated region
  $region50: #{tpu_custom_call.1} parent=0 // pred_check
    _
  $region51: #{tpu_custom_call.1} parent=0 // pred_check_branch
    %44 = sbr.rel (0) target = $region53
  $region52: #{tpu_custom_call.1} parent=0 // pred_region
    _
  $region53: #{tpu_custom_call.1} parent=0 // pred_fallthru
    _
  %v45 = vld [vmem:[%s0] sm:$0xff]
  %v46 = vld [vmem:[%s1] sm:$0xff]
  %v47 = vld [vmem:[%s2] sm:$0xff]
  %v48 = vld [vmem:[%s2 + $0x8] sm:$0xff]
  %v49 = vld [vmem:[%s3] sm:$0xf]
  %vm50 = vcmask 31744
  %v52 = vsel %vm50, %v46, 0
  %vm54 = vcmask 1043456
  %v56 = vsel %vm54, %v49, 0
  %58 = vmatpush.msra.mxu0 0.0
  %59 = vmatpush.msra.mxu0 0.0
  %60 = vmatpush.msra.mxu0 0.0
  %61 = vmatpush.msra.mxu0 0.0
  %62 = vmatpush.msra.mxu0 0.0
  %63 = vmatpush.msra.mxu0 0.0
  %64 = vmatpush.msra.mxu0 0.0
  %65 = vmatpush.msra.mxu0 0.0
  %66 = vmatpush.msra.mxu0 0.0
  %67 = vmatpush.msra.mxu0 0.0
  %68 = vmatpush.msra.mxu0 0.0
  %69 = vmatpush.msra.mxu0 0.0
  %70 = vmatpush.msra.mxu0 0.0
  %71 = vmatpush.msra.mxu0 0.0
  %72 = vmatpush.msra.mxu0 0.0
  %73 = vmatpush.msra.mxu0 %v56
  %74 = vmatmul.f32.gmra.mxu0 %v52
  %v75 = vpop.f32.mrf.mxu0
  %v76 = vadd.f32 0.0, %v75
  %77 = vdwg.mxu0
  %vm78 = vcmask 130048
  %v80 = vsel %vm78, %v45, 0
  %82 = vmatpush.msra.mxu0 0.0
  %83 = vmatpush.msra.mxu0 0.0
  %84 = vmatpush.msra.mxu0 0.0
  %85 = vmatpush.msra.mxu0 0.0
  %86 = vmatpush.msra.mxu0 0.0
  %87 = vmatpush.msra.mxu0 0.0
  %88 = vmatpush.msra.mxu0 0.0
  %89 = vmatpush.msra.mxu0 0.0
  %90 = vmatpush.msra.mxu0 0.0
  %91 = vmatpush.msra.mxu0 0.0
  %92 = vmatpush.msra.mxu0 0.0
  %93 = vmatpush.msra.mxu0 0.0
  %94 = vmatpush.msra.mxu0 0.0
  %95 = vmatpush.msra.mxu0 0.0
  %96 = vmatpush.msra.mxu0 %v48
  %97 = vmatpush.msra.mxu0 %v47
  %98 = vmatmul.f32.gmra.mxu0 %v80
  %v99 = vpop.f32.mrf.mxu0
  %v100 = vadd.f32 %v76, %v99
  %101 = vdwg.mxu0
  %v102 = vld [vmem:[%s4] sm:$0x1]
  %v104 = vperm.slane %v102, 0
  %v106 = vadd.f32 %v100, %v104
  %v107 = vmax.f32 %v106, 0.0
  %v108 = vld [vmem:[%s5] sm:$0xff]
  %v109 = vld [vmem:[%s5 + $0x8] sm:$0xff]
  %v110 = vld [vmem:[%s5 + $0x10] sm:$0xff]
  %v111 = vld [vmem:[%s5 + $0x18] sm:$0xff]
  %v112 = vld [vmem:[%s6] sm:$0x1]
  %v114 = vperm.slane %v112, 0
  %vm116 = vcmask 261120
  %v118 = vsel %vm116, %v107, 0
  %120 = vmatpush.msra.mxu0 0.0
  %121 = vmatpush.msra.mxu0 0.0
  %122 = vmatpush.msra.mxu0 0.0
  %123 = vmatpush.msra.mxu0 0.0
  %124 = vmatpush.msra.mxu0 0.0
  %125 = vmatpush.msra.mxu0 0.0
  %126 = vmatpush.msra.mxu0 0.0
  %127 = vmatpush.msra.mxu0 0.0
  %128 = vmatpush.msra.mxu0 0.0
  %129 = vmatpush.msra.mxu0 0.0
  %130 = vmatpush.msra.mxu0 0.0
  %131 = vmatpush.msra.mxu0 0.0
  %132 = vmatpush.msra.mxu0 %v111
  %133 = vmatpush.msra.mxu0 %v110
  %134 = vmatpush.msra.mxu0 %v109
  %135 = vmatpush.msra.mxu0 %v108
  %136 = vmatmul.f32.gmra.mxu0 %v118
  %v137 = vpop.f32.mrf.mxu0
  %v138 = vadd.f32 %v114, %v137
  %139 = vdwg.mxu0
  %v140 = vsel %vm116, %v138, -inf
  %141 = vmax.xlane.f32.xlu0 %v140
  %v142 = vpop.xlane.xlu0 %141
  %v143 = vsub.f32 %v138, %v142
  %v144 = vmul.f32 %v143, 1.442695
  %v145 = vpow.pop %v144
  %v146 = vsel %vm116, %v145, 0.0
  %147 = vadd.xlane.f32.xlu0 %v146
  %v148 = vpop.xlane.xlu0 %147
  %v149 = vrcp.pop %v148
  %v150 = vmul.f32 %v148, %v149
  %v151 = vsub.f32 1.0, %v150
  %v152 = vmul.f32 %v149, %v151
  %v153 = vadd.f32 %v149, %v152
  %vm154 = vweird.f32 %v148
  %vm155 = vweird.f32 %v149
  %vm156 = vmor %vm154, %vm155
  %v157 = vsel %vm156, %v149, %v153
  %v158 = vand.u32 2147483647, %v148
  %vm159 = vcmp.eq.f32.partialorder %v158, 8.507059e+37
  %v160 = vand.u32 %v148, 2147483648
  %v161 = vor.u32 1.1754944e-38, %v160
  %v162 = vsel %vm159, %v161, %v157
  %v163 = vmul.f32 %v145, %v162
  %v164 = vld [vmem:[%s7] sm:$0xff]
  %v165 = vld [vmem:[%s7 + $0x8] sm:$0xff]
  %v166 = vld [vmem:[%s7 + $0x10] sm:$0xff]
  %v167 = vld [vmem:[%s7 + $0x18] sm:$0xff]
  %v169 = vsel %vm116, %v163, 0
  %171 = vmatpush.msra.mxu0 0.0
  %172 = vmatpush.msra.mxu0 0.0
  %173 = vmatpush.msra.mxu0 0.0
  %174 = vmatpush.msra.mxu0 0.0
  %175 = vmatpush.msra.mxu0 0.0
  %176 = vmatpush.msra.mxu0 0.0
  %177 = vmatpush.msra.mxu0 0.0
  %178 = vmatpush.msra.mxu0 0.0
  %179 = vmatpush.msra.mxu0 0.0
  %180 = vmatpush.msra.mxu0 0.0
  %181 = vmatpush.msra.mxu0 0.0
  %182 = vmatpush.msra.mxu0 0.0
  %183 = vmatpush.msra.mxu0 %v167
  %184 = vmatpush.msra.mxu0 %v166
  %185 = vmatpush.msra.mxu0 %v165
  %186 = vmatpush.msra.mxu0 %v164
  %187 = vmatmul.f32.gmra.mxu0 %v169
  %v188 = vpop.f32.mrf.mxu0
  %v189 = vadd.f32 0.0, %v188
  %190 = vdwg.mxu0
  %v191 = vmul.f32 %v163, 0.5
  %v192 = vsub.f32 %v189, %v191
  %v193 = vld [vmem:[%s8] sm:$0x1]
  %v194 = vperm.slane %v192, 0
  %v195 = vlaneseq
  %v196 = vshrl.u32 %v195, 7
  %198 = vset.pattern.permute.xlu0 %v196
  %199 = vperm.xlu0 %198, %v194
  %v200 = vpop.permute.xlu0 %199
  %v201 = vlaneseq
  %v202 = vshrl.u32 %v201, 7
  %v203 = vadd.s32 %v202, 8
  %204 = vset.pattern.permute.xlu0 %v203
  %205 = vperm.xlu0 %204, %v194
  %v206 = vpop.permute.xlu0 %205
  %v207 = vlaneseq
  %v208 = vshrl.u32 %v207, 7
  %v209 = vadd.s32 %v208, 16
  %210 = vset.pattern.permute.xlu0 %v209
  %211 = vperm.xlu0 %210, %v194
  %v212 = vpop.permute.xlu0 %211
  %v213 = vlaneseq
  %v214 = vshrl.u32 %v213, 7
  %v215 = vadd.s32 %v214, 24
  %216 = vset.pattern.permute.xlu0 %v215
  %217 = vperm.xlu0 %216, %v194
  %v218 = vpop.permute.xlu0 %217
  %v219 = vperm.slane %v192, 1
  %v220 = vlaneseq
  %v221 = vshrl.u32 %v220, 7
  %223 = vset.pattern.permute.xlu0 %v221
  %224 = vperm.xlu0 %223, %v219
  %v225 = vpop.permute.xlu0 %224
  %v226 = vlaneseq
  %v227 = vshrl.u32 %v226, 7
  %v228 = vadd.s32 %v227, 8
  %229 = vset.pattern.permute.xlu0 %v228
  %230 = vperm.xlu0 %229, %v219
  %v231 = vpop.permute.xlu0 %230
  %v232 = vlaneseq
  %v233 = vshrl.u32 %v232, 7
  %v234 = vadd.s32 %v233, 16
  %235 = vset.pattern.permute.xlu0 %v234
  %236 = vperm.xlu0 %235, %v219
  %v237 = vpop.permute.xlu0 %236
  %v238 = vlaneseq
  %v239 = vshrl.u32 %v238, 7
  %v240 = vadd.s32 %v239, 24
  %241 = vset.pattern.permute.xlu0 %v240
  %242 = vperm.xlu0 %241, %v219
  %v243 = vpop.permute.xlu0 %242
  %v244 = vperm.slane %v192, 2
  %v245 = vlaneseq
  %v246 = vshrl.u32 %v245, 7
  %248 = vset.pattern.permute.xlu0 %v246
  %249 = vperm.xlu0 %248, %v244
  %v250 = vpop.permute.xlu0 %249
  %v251 = vlaneseq
  %v252 = vshrl.u32 %v251, 7
  %v253 = vadd.s32 %v252, 8
  %254 = vset.pattern.permute.xlu0 %v253
  %255 = vperm.xlu0 %254, %v244
  %v256 = vpop.permute.xlu0 %255
  %v257 = vlaneseq
  %v258 = vshrl.u32 %v257, 7
  %v259 = vadd.s32 %v258, 16
  %260 = vset.pattern.permute.xlu0 %v259
  %261 = vperm.xlu0 %260, %v244
  %v262 = vpop.permute.xlu0 %261
  %v263 = vlaneseq
  %v264 = vshrl.u32 %v263, 7
  %v265 = vadd.s32 %v264, 24
  %266 = vset.pattern.permute.xlu0 %v265
  %267 = vperm.xlu0 %266, %v244
  %v268 = vpop.permute.xlu0 %267
  %v269 = vperm.slane %v192, 3
  %v270 = vlaneseq
  %v271 = vshrl.u32 %v270, 7
  %273 = vset.pattern.permute.xlu0 %v271
  %274 = vperm.xlu0 %273, %v269
  %v275 = vpop.permute.xlu0 %274
  %v276 = vlaneseq
  %v277 = vshrl.u32 %v276, 7
  %v278 = vadd.s32 %v277, 8
  %279 = vset.pattern.permute.xlu0 %v278
  %280 = vperm.xlu0 %279, %v269
  %v281 = vpop.permute.xlu0 %280
  %v282 = vlaneseq
  %v283 = vshrl.u32 %v282, 7
  %v284 = vadd.s32 %v283, 16
  %285 = vset.pattern.permute.xlu0 %v284
  %286 = vperm.xlu0 %285, %v269
  %v287 = vpop.permute.xlu0 %286
  %v288 = vlaneseq
  %v289 = vshrl.u32 %v288, 7
  %v290 = vadd.s32 %v289, 24
  %291 = vset.pattern.permute.xlu0 %v290
  %292 = vperm.xlu0 %291, %v269
  %v293 = vpop.permute.xlu0 %292
  %v294 = vperm.slane %v192, 4
  %v295 = vlaneseq
  %v296 = vshrl.u32 %v295, 7
  %298 = vset.pattern.permute.xlu0 %v296
  %299 = vperm.xlu0 %298, %v294
  %v300 = vpop.permute.xlu0 %299
  %v301 = vlaneseq
  %v302 = vshrl.u32 %v301, 7
  %v303 = vadd.s32 %v302, 8
  %304 = vset.pattern.permute.xlu0 %v303
  %305 = vperm.xlu0 %304, %v294
  %v306 = vpop.permute.xlu0 %305
  %v307 = vlaneseq
  %v308 = vshrl.u32 %v307, 7
  %v309 = vadd.s32 %v308, 16
  %310 = vset.pattern.permute.xlu0 %v309
  %311 = vperm.xlu0 %310, %v294
  %v312 = vpop.permute.xlu0 %311
  %v313 = vlaneseq
  %v314 = vshrl.u32 %v313, 7
  %v315 = vadd.s32 %v314, 24
  %316 = vset.pattern.permute.xlu0 %v315
  %317 = vperm.xlu0 %316, %v294
  %v318 = vpop.permute.xlu0 %317
  %v319 = vperm.slane %v192, 5
  %v320 = vlaneseq
  %v321 = vshrl.u32 %v320, 7
  %323 = vset.pattern.permute.xlu0 %v321
  %324 = vperm.xlu0 %323, %v319
  %v325 = vpop.permute.xlu0 %324
  %v326 = vlaneseq
  %v327 = vshrl.u32 %v326, 7
  %v328 = vadd.s32 %v327, 8
  %329 = vset.pattern.permute.xlu0 %v328
  %330 = vperm.xlu0 %329, %v319
  %v331 = vpop.permute.xlu0 %330
  %v332 = vlaneseq
  %v333 = vshrl.u32 %v332, 7
  %v334 = vadd.s32 %v333, 16
  %335 = vset.pattern.permute.xlu0 %v334
  %336 = vperm.xlu0 %335, %v319
  %v337 = vpop.permute.xlu0 %336
  %v338 = vlaneseq
  %v339 = vshrl.u32 %v338, 7
  %v340 = vadd.s32 %v339, 24
  %341 = vset.pattern.permute.xlu0 %v340
  %342 = vperm.xlu0 %341, %v319
  %v343 = vpop.permute.xlu0 %342
  %v344 = vperm.slane %v192, 6
  %v345 = vlaneseq
  %v346 = vshrl.u32 %v345, 7
  %348 = vset.pattern.permute.xlu0 %v346
  %349 = vperm.xlu0 %348, %v344
  %v350 = vpop.permute.xlu0 %349
  %v351 = vlaneseq
  %v352 = vshrl.u32 %v351, 7
  %v353 = vadd.s32 %v352, 8
  %354 = vset.pattern.permute.xlu0 %v353
  %355 = vperm.xlu0 %354, %v344
  %v356 = vpop.permute.xlu0 %355
  %v357 = vlaneseq
  %v358 = vshrl.u32 %v357, 7
  %v359 = vadd.s32 %v358, 16
  %360 = vset.pattern.permute.xlu0 %v359
  %361 = vperm.xlu0 %360, %v344
  %v362 = vpop.permute.xlu0 %361
  %v363 = vlaneseq
  %v364 = vshrl.u32 %v363, 7
  %v365 = vadd.s32 %v364, 24
  %366 = vset.pattern.permute.xlu0 %v365
  %367 = vperm.xlu0 %366, %v344
  %v368 = vpop.permute.xlu0 %367
  %v369 = vperm.slane %v192, 7
  %v370 = vlaneseq
  %v371 = vshrl.u32 %v370, 7
  %373 = vset.pattern.permute.xlu0 %v371
  %374 = vperm.xlu0 %373, %v369
  %v375 = vpop.permute.xlu0 %374
  %v376 = vlaneseq
  %v377 = vshrl.u32 %v376, 7
  %v378 = vadd.s32 %v377, 8
  %379 = vset.pattern.permute.xlu0 %v378
  %380 = vperm.xlu0 %379, %v369
  %v381 = vpop.permute.xlu0 %380
  %v382 = vlaneseq
  %v383 = vshrl.u32 %v382, 7
  %v384 = vadd.s32 %v383, 16
  %385 = vset.pattern.permute.xlu0 %v384
  %386 = vperm.xlu0 %385, %v369
  %v387 = vpop.permute.xlu0 %386
  %v388 = vlaneseq
  %v389 = vshrl.u32 %v388, 7
  %v390 = vadd.s32 %v389, 24
  %391 = vset.pattern.permute.xlu0 %v390
  %392 = vperm.xlu0 %391, %v369
  %v393 = vpop.permute.xlu0 %392
  %v395 = vperm.slane %v193, 0
  %v397 = vmul.f32 %v395, %v200
  %v398 = vmul.f32 %v395, %v206
  %v399 = vmul.f32 %v395, %v212
  %v400 = vmul.f32 %v395, %v218
  %v401 = vmul.f32 %v395, %v225
  %v402 = vmul.f32 %v395, %v231
  %v403 = vmul.f32 %v395, %v237
  %v404 = vmul.f32 %v395, %v243
  %v405 = vmul.f32 %v395, %v250
  %v406 = vmul.f32 %v395, %v256
  %v407 = vmul.f32 %v395, %v262
  %v408 = vmul.f32 %v395, %v268
  %v409 = vmul.f32 %v395, %v275
  %v410 = vmul.f32 %v395, %v281
  %v411 = vmul.f32 %v395, %v287
  %v412 = vmul.f32 %v395, %v293
  %v413 = vmul.f32 %v395, %v300
  %v414 = vmul.f32 %v395, %v306
  %v415 = vmul.f32 %v395, %v312
  %v416 = vmul.f32 %v395, %v318
  %v417 = vmul.f32 %v395, %v325
  %v418 = vmul.f32 %v395, %v331
  %v419 = vmul.f32 %v395, %v337
  %v420 = vmul.f32 %v395, %v343
  %v421 = vmul.f32 %v395, %v350
  %v422 = vmul.f32 %v395, %v356
  %v423 = vmul.f32 %v395, %v362
  %v424 = vmul.f32 %v395, %v368
  %v425 = vmul.f32 %v395, %v375
  %v426 = vmul.f32 %v395, %v381
  %v427 = vmul.f32 %v395, %v387
  %v428 = vmul.f32 %v395, %v393
  %v429 = vand.u32 2147483647, %v397
  %vm430 = vcmp.le.f32.partialorder %v429, 0.7853982
  %vm431 = vcmp.lt.s32.totalorder %v397, 0
  %v432 = vand.u32 %v397, 2139095040
  %v433 = vshrl.u32 %v432, 23
  %v434 = vsub.s32 %v433, 127
  %v435 = vand.u32 2147483647, %v397
  %v436 = vand.u32 %v435, 8388607
  %v437 = vor.u32 %v436, 8388608
  %v438 = vsub.s32 0, %v437
  %v439 = vadd.s32 %v434, 1
  %vm440 = vcmp.gt.s32.totalorder %v439, 0
  %v441 = vsel %vm440, %v439, 0
  %v442 = vshrl.u32 %v441, 5
  %v443 = vand.u32 %v441, 31
  %v444 = vsub.s32 32, %v443
  %v445 = vshrl.u32 683565275, %v444
  %v446 = vshll.u32 683565275, %v443
  %v447 = vshrl.u32 2475754826, %v444
  %v448 = vor.u32 %v446, %v447
  %v449 = vshll.u32 2475754826, %v443
  %v450 = vshrl.u32 2131351028, %v444
  %v451 = vor.u32 %v449, %v450
  %v452 = vshll.u32 2131351028, %v443
  %v453 = vshrl.u32 2102212464, %v444
  %v454 = vor.u32 %v452, %v453
  %v455 = vshll.u32 2102212464, %v443
  %v456 = vshrl.u32 920167782, %v444
  %v457 = vor.u32 %v455, %v456
  %v458 = vshll.u32 920167782, %v443
  %v459 = vshrl.u32 1326507024, %v444
  %v460 = vor.u32 %v458, %v459
  %vm461 = vcmp.lt.s32.totalorder %v442, 1
  %vm462 = vcmp.lt.s32.totalorder %v442, 2
  %vm463 = vcmp.lt.s32.totalorder %v442, 3
  %vm464 = vcmp.lt.s32.totalorder %v442, 4
  %v465 = vsel %vm461, %v445, %v448
  %v466 = vsel %vm464, %v454, 2102212464
  %v467 = vsel %vm463, %v451, %v466
  %v468 = vsel %vm462, %v465, %v467
  %v469 = vsel %vm461, %v448, %v451
  %v470 = vsel %vm464, %v457, 920167782
  %v471 = vsel %vm463, %v454, %v470
  %v472 = vsel %vm462, %v469, %v471
  %v473 = vsel %vm461, %v451, %v454
  %v474 = vsel %vm464, %v460, 1326507024
  %v475 = vsel %vm463, %v457, %v474
  %v476 = vsel %vm462, %v473, %v475
  %v477 = vshll.u32 %v437, 8
  %v478 = vand.u32 %v477, 65535
  %v479 = vshrl.u32 %v477, 16
  %v480 = vand.u32 %v476, 65535
  %v481 = vshrl.u32 %v476, 16
  %v482 = vmul.u32 %v478, %v480
  %v483 = vmul.u32 %v478, %v481
  %v484 = vmul.u32 %v479, %v480
  %v485 = vmul.u32 %v479, %v481
  %v486 = vshll.u32 %v483, 16
  %v487 = vshrl.u32 %v483, 16
  %v488 = vshll.u32 %v484, 16
  %v489 = vshrl.u32 %v484, 16
  %vm490 = vc.u32 %v482, %v486
  %v491 = vsel %vm490, 1, 0
  %v492 = vadd.s32 %v482, %v486
  %v493 = vadd.s32 %v485, %v491
  %vm494 = vc.u32 %v492, %v488
  %v495 = vsel %vm494, 1, 0
  %v496 = vadd.s32 %v492, %v488
  %v497 = vadd.s32 %v493, %v495
  %v498 = vadd.s32 %v497, %v487
  %v499 = vadd.s32 %v498, %v489
  %v500 = vand.u32 %v477, 65535
  %v501 = vshrl.u32 %v477, 16
  %v502 = vand.u32 %v472, 65535
  %v503 = vshrl.u32 %v472, 16
  %v504 = vmul.u32 %v500, %v502
  %v505 = vmul.u32 %v500, %v503
  %v506 = vmul.u32 %v501, %v502
  %v507 = vmul.u32 %v501, %v503
  %v508 = vshll.u32 %v505, 16
  %v509 = vshrl.u32 %v505, 16
  %v510 = vshll.u32 %v506, 16
  %v511 = vshrl.u32 %v506, 16
  %vm512 = vc.u32 %v504, %v508
  %v513 = vsel %vm512, 1, 0
  %v514 = vadd.s32 %v504, %v508
  %v515 = vadd.s32 %v507, %v513
  %vm516 = vc.u32 %v514, %v510
  %v517 = vsel %vm516, 1, 0
  %v518 = vadd.s32 %v514, %v510
  %v519 = vadd.s32 %v515, %v517
  %v520 = vadd.s32 %v519, %v509
  %v521 = vadd.s32 %v520, %v511
  %v522 = vmul.u32 %v477, %v468
  %v523 = vadd.s32 %v499, %v518
  %vm524 = vc.u32 %v499, %v518
  %v525 = vadd.s32 %v521, 1
  %v526 = vsel %vm524, %v525, %v521
  %v527 = vadd.s32 %v522, %v526
  %v528 = vadd.s32 %v527, 536870912
  %v529 = vshrl.u32 %v528, 30
  %v530 = vshll.u32 %v529, 30
  %v531 = vsub.s32 %v527, %v530
  %vm532 = vcmp.lt.s32.totalorder %v531, 0
  %v533 = vsub.s32 0, %v531
  %v534 = vsel %vm532, %v533, %v531
  %v535 = vclz %v534
  %v536 = vsub.s32 %v535, 2
  %vm537 = vcmp.gt.s32.totalorder 0, %v536
  %v538 = vsel %vm537, 0, %v536
  %v539 = vsub.s32 32, %v538
  %v540 = vshll.u32 %v531, %v538
  %v541 = vshrl.u32 %v523, %v539
  %v542 = vor.u32 %v540, %v541
  %v543 = vsub.s32 4294967266, %v538
  %v544 = vadd.s32 %v543, 127
  %v545 = vshll.u32 %v544, 23
  %v546 = vor.u32 4788187, %v545
  %v547 = vand.u32 2147483647, %v546
  %v549 = vcvt.s32.f32 %v542
  %v550 = vmul.f32 %v549, %v547
  %v551 = vxor.u32 %v550, 2147483648
  %v552 = vsel %vm431, %v551, %v550
  %v553 = vsub.s32 4, %v529
  %v554 = vsel %vm431, %v553, %v529
  %v555 = vsel %vm430, %v397, %v552
  %v556 = vsel %vm430, 0, %v554
  %v557 = vmul.f32 %v555, %v555
  %v558 = vmul.f32 %v557, -0.001358992
  %v559 = vadd.f32 %v558, 0.041655596
  %v560 = vmul.f32 %v557, %v559
  %v561 = vadd.f32 %v560, -0.4999988
  %v562 = vmul.f32 %v557, %v561
  %v563 = vadd.f32 1.0, %v562
  %v564 = vmul.f32 %v555, %v555
  %v565 = vmul.f32 %v564, -0.00019511016
  %v566 = vadd.f32 %v565, 0.008332121
  %v567 = vmul.f32 %v564, %v566
  %v568 = vadd.f32 %v567, -0.16666654
  %v569 = vmul.f32 %v564, %v568
  %v570 = vadd.f32 %v569, 1.0
  %v571 = vmul.f32 %v570, %v555
  %vm572 = vweird.f32 %v397
  %v573 = vand.u32 %v556, 3
  %vm574 = vcmp.lt.s32.totalorder %v573, 2
  %vm575 = vcmp.eq.s32.totalorder %v573, 0
  %v576 = vxor.u32 %v571, 2147483648
  %v577 = vsel %vm575, %v563, %v576
  %vm578 = vcmp.eq.s32.totalorder %v573, 2
  %v579 = vxor.u32 %v563, 2147483648
  %v580 = vsel %vm578, %v579, %v571
  %v581 = vsel %vm574, %v577, %v580
  %v582 = vsel %vm572, nan, %v581
  %v583 = vand.u32 2147483647, %v398
  %vm584 = vcmp.le.f32.partialorder %v583, 0.7853982
  %vm585 = vcmp.lt.s32.totalorder %v398, 0
  %v586 = vand.u32 %v398, 2139095040
  %v587 = vshrl.u32 %v586, 23
  %v588 = vsub.s32 %v587, 127
  %v589 = vand.u32 2147483647, %v398
  %v590 = vand.u32 %v589, 8388607
  %v591 = vor.u32 %v590, 8388608
  %v592 = vsub.s32 0, %v591
  %v593 = vadd.s32 %v588, 1
  %vm594 = vcmp.gt.s32.totalorder %v593, 0
  %v595 = vsel %vm594, %v593, 0
  %v596 = vshrl.u32 %v595, 5
  %v597 = vand.u32 %v595, 31
  %v598 = vsub.s32 32, %v597
  %v599 = vshrl.u32 683565275, %v598
  %v600 = vshll.u32 683565275, %v597
  %v601 = vshrl.u32 2475754826, %v598
  %v602 = vor.u32 %v600, %v601
  %v603 = vshll.u32 2475754826, %v597
  %v604 = vshrl.u32 2131351028, %v598
  %v605 = vor.u32 %v603, %v604
  %v606 = vshll.u32 2131351028, %v597
  %v607 = vshrl.u32 2102212464, %v598
  %v608 = vor.u32 %v606, %v607
  %v609 = vshll.u32 2102212464, %v597
  %v610 = vshrl.u32 920167782, %v598
  %v611 = vor.u32 %v609, %v610
  %v612 = vshll.u32 920167782, %v597
  %v613 = vshrl.u32 1326507024, %v598
  %v614 = vor.u32 %v612, %v613
  %vm615 = vcmp.lt.s32.totalorder %v596, 1
  %vm616 = vcmp.lt.s32.totalorder %v596, 2
  %vm617 = vcmp.lt.s32.totalorder %v596, 3
  %vm618 = vcmp.lt.s32.totalorder %v596, 4
  %v619 = vsel %vm615, %v599, %v602
  %v620 = vsel %vm618, %v608, 2102212464
  %v621 = vsel %vm617, %v605, %v620
  %v622 = vsel %vm616, %v619, %v621
  %v623 = vsel %vm615, %v602, %v605
  %v624 = vsel %vm618, %v611, 920167782
  %v625 = vsel %vm617, %v608, %v624
  %v626 = vsel %vm616, %v623, %v625
  %v627 = vsel %vm615, %v605, %v608
  %v628 = vsel %vm618, %v614, 1326507024
  %v629 = vsel %vm617, %v611, %v628
  %v630 = vsel %vm616, %v627, %v629
  %v631 = vshll.u32 %v591, 8
  %v632 = vand.u32 %v631, 65535
  %v633 = vshrl.u32 %v631, 16
  %v634 = vand.u32 %v630, 65535
  %v635 = vshrl.u32 %v630, 16
  %v636 = vmul.u32 %v632, %v634
  %v637 = vmul.u32 %v632, %v635
  %v638 = vmul.u32 %v633, %v634
  %v639 = vmul.u32 %v633, %v635
  %v640 = vshll.u32 %v637, 16
  %v641 = vshrl.u32 %v637, 16
  %v642 = vshll.u32 %v638, 16
  %v643 = vshrl.u32 %v638, 16
  %vm644 = vc.u32 %v636, %v640
  %v645 = vsel %vm644, 1, 0
  %v646 = vadd.s32 %v636, %v640
  %v647 = vadd.s32 %v639, %v645
  %vm648 = vc.u32 %v646, %v642
  %v649 = vsel %vm648, 1, 0
  %v650 = vadd.s32 %v646, %v642
  %v651 = vadd.s32 %v647, %v649
  %v652 = vadd.s32 %v651, %v641
  %v653 = vadd.s32 %v652, %v643
  %v654 = vand.u32 %v631, 65535
  %v655 = vshrl.u32 %v631, 16
  %v656 = vand.u32 %v626, 65535
  %v657 = vshrl.u32 %v626, 16
  %v658 = vmul.u32 %v654, %v656
  %v659 = vmul.u32 %v654, %v657
  %v660 = vmul.u32 %v655, %v656
  %v661 = vmul.u32 %v655, %v657
  %v662 = vshll.u32 %v659, 16
  %v663 = vshrl.u32 %v659, 16
  %v664 = vshll.u32 %v660, 16
  %v665 = vshrl.u32 %v660, 16
  %vm666 = vc.u32 %v658, %v662
  %v667 = vsel %vm666, 1, 0
  %v668 = vadd.s32 %v658, %v662
  %v669 = vadd.s32 %v661, %v667
  %vm670 = vc.u32 %v668, %v664
  %v671 = vsel %vm670, 1, 0
  %v672 = vadd.s32 %v668, %v664
  %v673 = vadd.s32 %v669, %v671
  %v674 = vadd.s32 %v673, %v663
  %v675 = vadd.s32 %v674, %v665
  %v676 = vmul.u32 %v631, %v622
  %v677 = vadd.s32 %v653, %v672
  %vm678 = vc.u32 %v653, %v672
  %v679 = vadd.s32 %v675, 1
  %v680 = vsel %vm678, %v679, %v675
  %v681 = vadd.s32 %v676, %v680
  %v682 = vadd.s32 %v681, 536870912
  %v683 = vshrl.u32 %v682, 30
  %v684 = vshll.u32 %v683, 30
  %v685 = vsub.s32 %v681, %v684
  %vm686 = vcmp.lt.s32.totalorder %v685, 0
  %v687 = vsub.s32 0, %v685
  %v688 = vsel %vm686, %v687, %v685
  %v689 = vclz %v688
  %v690 = vsub.s32 %v689, 2
  %vm691 = vcmp.gt.s32.totalorder 0, %v690
  %v692 = vsel %vm691, 0, %v690
  %v693 = vsub.s32 32, %v692
  %v694 = vshll.u32 %v685, %v692
  %v695 = vshrl.u32 %v677, %v693
  %v696 = vor.u32 %v694, %v695
  %v697 = vsub.s32 4294967266, %v692
  %v698 = vadd.s32 %v697, 127
  %v699 = vshll.u32 %v698, 23
  %v700 = vor.u32 4788187, %v699
  %v701 = vand.u32 2147483647, %v700
  %v703 = vcvt.s32.f32 %v696
  %v704 = vmul.f32 %v703, %v701
  %v705 = vxor.u32 %v704, 2147483648
  %v706 = vsel %vm585, %v705, %v704
  %v707 = vsub.s32 4, %v683
  %v708 = vsel %vm585, %v707, %v683
  %v709 = vsel %vm584, %v398, %v706
  %v710 = vsel %vm584, 0, %v708
  %v711 = vmul.f32 %v709, %v709
  %v712 = vmul.f32 %v711, -0.001358992
  %v713 = vadd.f32 %v712, 0.041655596
  %v714 = vmul.f32 %v711, %v713
  %v715 = vadd.f32 %v714, -0.4999988
  %v716 = vmul.f32 %v711, %v715
  %v717 = vadd.f32 1.0, %v716
  %v718 = vmul.f32 %v709, %v709
  %v719 = vmul.f32 %v718, -0.00019511016
  %v720 = vadd.f32 %v719, 0.008332121
  %v721 = vmul.f32 %v718, %v720
  %v722 = vadd.f32 %v721, -0.16666654
  %v723 = vmul.f32 %v718, %v722
  %v724 = vadd.f32 %v723, 1.0
  %v725 = vmul.f32 %v724, %v709
  %vm726 = vweird.f32 %v398
  %v727 = vand.u32 %v710, 3
  %vm728 = vcmp.lt.s32.totalorder %v727, 2
  %vm729 = vcmp.eq.s32.totalorder %v727, 0
  %v730 = vxor.u32 %v725, 2147483648
  %v731 = vsel %vm729, %v717, %v730
  %vm732 = vcmp.eq.s32.totalorder %v727, 2
  %v733 = vxor.u32 %v717, 2147483648
  %v734 = vsel %vm732, %v733, %v725
  %v735 = vsel %vm728, %v731, %v734
  %v736 = vsel %vm726, nan, %v735
  %v737 = vand.u32 2147483647, %v399
  %vm738 = vcmp.le.f32.partialorder %v737, 0.7853982
  %vm739 = vcmp.lt.s32.totalorder %v399, 0
  %v740 = vand.u32 %v399, 2139095040
  %v741 = vshrl.u32 %v740, 23
  %v742 = vsub.s32 %v741, 127
  %v743 = vand.u32 2147483647, %v399
  %v744 = vand.u32 %v743, 8388607
  %v745 = vor.u32 %v744, 8388608
  %v746 = vsub.s32 0, %v745
  %v747 = vadd.s32 %v742, 1
  %vm748 = vcmp.gt.s32.totalorder %v747, 0
  %v749 = vsel %vm748, %v747, 0
  %v750 = vshrl.u32 %v749, 5
  %v751 = vand.u32 %v749, 31
  %v752 = vsub.s32 32, %v751
  %v753 = vshrl.u32 683565275, %v752
  %v754 = vshll.u32 683565275, %v751
  %v755 = vshrl.u32 2475754826, %v752
  %v756 = vor.u32 %v754, %v755
  %v757 = vshll.u32 2475754826, %v751
  %v758 = vshrl.u32 2131351028, %v752
  %v759 = vor.u32 %v757, %v758
  %v760 = vshll.u32 2131351028, %v751
  %v761 = vshrl.u32 2102212464, %v752
  %v762 = vor.u32 %v760, %v761
  %v763 = vshll.u32 2102212464, %v751
  %v764 = vshrl.u32 920167782, %v752
  %v765 = vor.u32 %v763, %v764
  %v766 = vshll.u32 920167782, %v751
  %v767 = vshrl.u32 1326507024, %v752
  %v768 = vor.u32 %v766, %v767
  %vm769 = vcmp.lt.s32.totalorder %v750, 1
  %vm770 = vcmp.lt.s32.totalorder %v750, 2
  %vm771 = vcmp.lt.s32.totalorder %v750, 3
  %vm772 = vcmp.lt.s32.totalorder %v750, 4
  %v773 = vsel %vm769, %v753, %v756
  %v774 = vsel %vm772, %v762, 2102212464
  %v775 = vsel %vm771, %v759, %v774
  %v776 = vsel %vm770, %v773, %v775
  %v777 = vsel %vm769, %v756, %v759
  %v778 = vsel %vm772, %v765, 920167782
  %v779 = vsel %vm771, %v762, %v778
  %v780 = vsel %vm770, %v777, %v779
  %v781 = vsel %vm769, %v759, %v762
  %v782 = vsel %vm772, %v768, 1326507024
  %v783 = vsel %vm771, %v765, %v782
  %v784 = vsel %vm770, %v781, %v783
  %v785 = vshll.u32 %v745, 8
  %v786 = vand.u32 %v785, 65535
  %v787 = vshrl.u32 %v785, 16
  %v788 = vand.u32 %v784, 65535
  %v789 = vshrl.u32 %v784, 16
  %v790 = vmul.u32 %v786, %v788
  %v791 = vmul.u32 %v786, %v789
  %v792 = vmul.u32 %v787, %v788
  %v793 = vmul.u32 %v787, %v789
  %v794 = vshll.u32 %v791, 16
  %v795 = vshrl.u32 %v791, 16
  %v796 = vshll.u32 %v792, 16
  %v797 = vshrl.u32 %v792, 16
  %vm798 = vc.u32 %v790, %v794
  %v799 = vsel %vm798, 1, 0
  %v800 = vadd.s32 %v790, %v794
  %v801 = vadd.s32 %v793, %v799
  %vm802 = vc.u32 %v800, %v796
  %v803 = vsel %vm802, 1, 0
  %v804 = vadd.s32 %v800, %v796
  %v805 = vadd.s32 %v801, %v803
  %v806 = vadd.s32 %v805, %v795
  %v807 = vadd.s32 %v806, %v797
  %v808 = vand.u32 %v785, 65535
  %v809 = vshrl.u32 %v785, 16
  %v810 = vand.u32 %v780, 65535
  %v811 = vshrl.u32 %v780, 16
  %v812 = vmul.u32 %v808, %v810
  %v813 = vmul.u32 %v808, %v811
  %v814 = vmul.u32 %v809, %v810
  %v815 = vmul.u32 %v809, %v811
  %v816 = vshll.u32 %v813, 16
  %v817 = vshrl.u32 %v813, 16
  %v818 = vshll.u32 %v814, 16
  %v819 = vshrl.u32 %v814, 16
  %vm820 = vc.u32 %v812, %v816
  %v821 = vsel %vm820, 1, 0
  %v822 = vadd.s32 %v812, %v816
  %v823 = vadd.s32 %v815, %v821
  %vm824 = vc.u32 %v822, %v818
  %v825 = vsel %vm824, 1, 0
  %v826 = vadd.s32 %v822, %v818
  %v827 = vadd.s32 %v823, %v825
  %v828 = vadd.s32 %v827, %v817
  %v829 = vadd.s32 %v828, %v819
  %v830 = vmul.u32 %v785, %v776
  %v831 = vadd.s32 %v807, %v826
  %vm832 = vc.u32 %v807, %v826
  %v833 = vadd.s32 %v829, 1
  %v834 = vsel %vm832, %v833, %v829
  %v835 = vadd.s32 %v830, %v834
  %v836 = vadd.s32 %v835, 536870912
  %v837 = vshrl.u32 %v836, 30
  %v838 = vshll.u32 %v837, 30
  %v839 = vsub.s32 %v835, %v838
  %vm840 = vcmp.lt.s32.totalorder %v839, 0
  %v841 = vsub.s32 0, %v839
  %v842 = vsel %vm840, %v841, %v839
  %v843 = vclz %v842
  %v844 = vsub.s32 %v843, 2
  %vm845 = vcmp.gt.s32.totalorder 0, %v844
  %v846 = vsel %vm845, 0, %v844
  %v847 = vsub.s32 32, %v846
  %v848 = vshll.u32 %v839, %v846
  %v849 = vshrl.u32 %v831, %v847
  %v850 = vor.u32 %v848, %v849
  %v851 = vsub.s32 4294967266, %v846
  %v852 = vadd.s32 %v851, 127
  %v853 = vshll.u32 %v852, 23
  %v854 = vor.u32 4788187, %v853
  %v855 = vand.u32 2147483647, %v854
  %v857 = vcvt.s32.f32 %v850
  %v858 = vmul.f32 %v857, %v855
  %v859 = vxor.u32 %v858, 2147483648
  %v860 = vsel %vm739, %v859, %v858
  %v861 = vsub.s32 4, %v837
  %v862 = vsel %vm739, %v861, %v837
  %v863 = vsel %vm738, %v399, %v860
  %v864 = vsel %vm738, 0, %v862
  %v865 = vmul.f32 %v863, %v863
  %v866 = vmul.f32 %v865, -0.001358992
  %v867 = vadd.f32 %v866, 0.041655596
  %v868 = vmul.f32 %v865, %v867
  %v869 = vadd.f32 %v868, -0.4999988
  %v870 = vmul.f32 %v865, %v869
  %v871 = vadd.f32 1.0, %v870
  %v872 = vmul.f32 %v863, %v863
  %v873 = vmul.f32 %v872, -0.00019511016
  %v874 = vadd.f32 %v873, 0.008332121
  %v875 = vmul.f32 %v872, %v874
  %v876 = vadd.f32 %v875, -0.16666654
  %v877 = vmul.f32 %v872, %v876
  %v878 = vadd.f32 %v877, 1.0
  %v879 = vmul.f32 %v878, %v863
  %vm880 = vweird.f32 %v399
  %v881 = vand.u32 %v864, 3
  %vm882 = vcmp.lt.s32.totalorder %v881, 2
  %vm883 = vcmp.eq.s32.totalorder %v881, 0
  %v884 = vxor.u32 %v879, 2147483648
  %v885 = vsel %vm883, %v871, %v884
  %vm886 = vcmp.eq.s32.totalorder %v881, 2
  %v887 = vxor.u32 %v871, 2147483648
  %v888 = vsel %vm886, %v887, %v879
  %v889 = vsel %vm882, %v885, %v888
  %v890 = vsel %vm880, nan, %v889
  %v891 = vand.u32 2147483647, %v400
  %vm892 = vcmp.le.f32.partialorder %v891, 0.7853982
  %vm893 = vcmp.lt.s32.totalorder %v400, 0
  %v894 = vand.u32 %v400, 2139095040
  %v895 = vshrl.u32 %v894, 23
  %v896 = vsub.s32 %v895, 127
  %v897 = vand.u32 2147483647, %v400
  %v898 = vand.u32 %v897, 8388607
  %v899 = vor.u32 %v898, 8388608
  %v900 = vsub.s32 0, %v899
  %v901 = vadd.s32 %v896, 1
  %vm902 = vcmp.gt.s32.totalorder %v901, 0
  %v903 = vsel %vm902, %v901, 0
  %v904 = vshrl.u32 %v903, 5
  %v905 = vand.u32 %v903, 31
  %v906 = vsub.s32 32, %v905
  %v907 = vshrl.u32 683565275, %v906
  %v908 = vshll.u32 683565275, %v905
  %v909 = vshrl.u32 2475754826, %v906
  %v910 = vor.u32 %v908, %v909
  %v911 = vshll.u32 2475754826, %v905
  %v912 = vshrl.u32 2131351028, %v906
  %v913 = vor.u32 %v911, %v912
  %v914 = vshll.u32 2131351028, %v905
  %v915 = vshrl.u32 2102212464, %v906
  %v916 = vor.u32 %v914, %v915
  %v917 = vshll.u32 2102212464, %v905
  %v918 = vshrl.u32 920167782, %v906
  %v919 = vor.u32 %v917, %v918
  %v920 = vshll.u32 920167782, %v905
  %v921 = vshrl.u32 1326507024, %v906
  %v922 = vor.u32 %v920, %v921
  %vm923 = vcmp.lt.s32.totalorder %v904, 1
  %vm924 = vcmp.lt.s32.totalorder %v904, 2
  %vm925 = vcmp.lt.s32.totalorder %v904, 3
  %vm926 = vcmp.lt.s32.totalorder %v904, 4
  %v927 = vsel %vm923, %v907, %v910
  %v928 = vsel %vm926, %v916, 2102212464
  %v929 = vsel %vm925, %v913, %v928
  %v930 = vsel %vm924, %v927, %v929
  %v931 = vsel %vm923, %v910, %v913
  %v932 = vsel %vm926, %v919, 920167782
  %v933 = vsel %vm925, %v916, %v932
  %v934 = vsel %vm924, %v931, %v933
  %v935 = vsel %vm923, %v913, %v916
  %v936 = vsel %vm926, %v922, 1326507024
  %v937 = vsel %vm925, %v919, %v936
  %v938 = vsel %vm924, %v935, %v937
  %v939 = vshll.u32 %v899, 8
  %v940 = vand.u32 %v939, 65535
  %v941 = vshrl.u32 %v939, 16
  %v942 = vand.u32 %v938, 65535
  %v943 = vshrl.u32 %v938, 16
  %v944 = vmul.u32 %v940, %v942
  %v945 = vmul.u32 %v940, %v943
  %v946 = vmul.u32 %v941, %v942
  %v947 = vmul.u32 %v941, %v943
  %v948 = vshll.u32 %v945, 16
  %v949 = vshrl.u32 %v945, 16
  %v950 = vshll.u32 %v946, 16
  %v951 = vshrl.u32 %v946, 16
  %vm952 = vc.u32 %v944, %v948
  %v953 = vsel %vm952, 1, 0
  %v954 = vadd.s32 %v944, %v948
  %v955 = vadd.s32 %v947, %v953
  %vm956 = vc.u32 %v954, %v950
  %v957 = vsel %vm956, 1, 0
  %v958 = vadd.s32 %v954, %v950
  %v959 = vadd.s32 %v955, %v957
  %v960 = vadd.s32 %v959, %v949
  %v961 = vadd.s32 %v960, %v951
  %v962 = vand.u32 %v939, 65535
  %v963 = vshrl.u32 %v939, 16
  %v964 = vand.u32 %v934, 65535
  %v965 = vshrl.u32 %v934, 16
  %v966 = vmul.u32 %v962, %v964
  %v967 = vmul.u32 %v962, %v965
  %v968 = vmul.u32 %v963, %v964
  %v969 = vmul.u32 %v963, %v965
  %v970 = vshll.u32 %v967, 16
  %v971 = vshrl.u32 %v967, 16
  %v972 = vshll.u32 %v968, 16
  %v973 = vshrl.u32 %v968, 16
  %vm974 = vc.u32 %v966, %v970
  %v975 = vsel %vm974, 1, 0
  %v976 = vadd.s32 %v966, %v970
  %v977 = vadd.s32 %v969, %v975
  %vm978 = vc.u32 %v976, %v972
  %v979 = vsel %vm978, 1, 0
  %v980 = vadd.s32 %v976, %v972
  %v981 = vadd.s32 %v977, %v979
  %v982 = vadd.s32 %v981, %v971
  %v983 = vadd.s32 %v982, %v973
  %v984 = vmul.u32 %v939, %v930
  %v985 = vadd.s32 %v961, %v980
  %vm986 = vc.u32 %v961, %v980
  %v987 = vadd.s32 %v983, 1
  %v988 = vsel %vm986, %v987, %v983
  %v989 = vadd.s32 %v984, %v988
  %v990 = vadd.s32 %v989, 536870912
  %v991 = vshrl.u32 %v990, 30
  %v992 = vshll.u32 %v991, 30
  %v993 = vsub.s32 %v989, %v992
  %vm994 = vcmp.lt.s32.totalorder %v993, 0
  %v995 = vsub.s32 0, %v993
  %v996 = vsel %vm994, %v995, %v993
  %v997 = vclz %v996
  %v998 = vsub.s32 %v997, 2
  %vm999 = vcmp.gt.s32.totalorder 0, %v998
  %v1000 = vsel %vm999, 0, %v998
  %v1001 = vsub.s32 32, %v1000
  %v1002 = vshll.u32 %v993, %v1000
  %v1003 = vshrl.u32 %v985, %v1001
  %v1004 = vor.u32 %v1002, %v1003
  %v1005 = vsub.s32 4294967266, %v1000
  %v1006 = vadd.s32 %v1005, 127
  %v1007 = vshll.u32 %v1006, 23
  %v1008 = vor.u32 4788187, %v1007
  %v1009 = vand.u32 2147483647, %v1008
  %v1011 = vcvt.s32.f32 %v1004
  %v1012 = vmul.f32 %v1011, %v1009
  %v1013 = vxor.u32 %v1012, 2147483648
  %v1014 = vsel %vm893, %v1013, %v1012
  %v1015 = vsub.s32 4, %v991
  %v1016 = vsel %vm893, %v1015, %v991
  %v1017 = vsel %vm892, %v400, %v1014
  %v1018 = vsel %vm892, 0, %v1016
  %v1019 = vmul.f32 %v1017, %v1017
  %v1020 = vmul.f32 %v1019, -0.001358992
  %v1021 = vadd.f32 %v1020, 0.041655596
  %v1022 = vmul.f32 %v1019, %v1021
  %v1023 = vadd.f32 %v1022, -0.4999988
  %v1024 = vmul.f32 %v1019, %v1023
  %v1025 = vadd.f32 1.0, %v1024
  %v1026 = vmul.f32 %v1017, %v1017
  %v1027 = vmul.f32 %v1026, -0.00019511016
  %v1028 = vadd.f32 %v1027, 0.008332121
  %v1029 = vmul.f32 %v1026, %v1028
  %v1030 = vadd.f32 %v1029, -0.16666654
  %v1031 = vmul.f32 %v1026, %v1030
  %v1032 = vadd.f32 %v1031, 1.0
  %v1033 = vmul.f32 %v1032, %v1017
  %vm1034 = vweird.f32 %v400
  %v1035 = vand.u32 %v1018, 3
  %vm1036 = vcmp.lt.s32.totalorder %v1035, 2
  %vm1037 = vcmp.eq.s32.totalorder %v1035, 0
  %v1038 = vxor.u32 %v1033, 2147483648
  %v1039 = vsel %vm1037, %v1025, %v1038
  %vm1040 = vcmp.eq.s32.totalorder %v1035, 2
  %v1041 = vxor.u32 %v1025, 2147483648
  %v1042 = vsel %vm1040, %v1041, %v1033
  %v1043 = vsel %vm1036, %v1039, %v1042
  %v1044 = vsel %vm1034, nan, %v1043
  %v1045 = vand.u32 2147483647, %v401
  %vm1046 = vcmp.le.f32.partialorder %v1045, 0.7853982
  %vm1047 = vcmp.lt.s32.totalorder %v401, 0
  %v1048 = vand.u32 %v401, 2139095040
  %v1049 = vshrl.u32 %v1048, 23
  %v1050 = vsub.s32 %v1049, 127
  %v1051 = vand.u32 2147483647, %v401
  %v1052 = vand.u32 %v1051, 8388607
  %v1053 = vor.u32 %v1052, 8388608
  %v1054 = vsub.s32 0, %v1053
  %v1055 = vadd.s32 %v1050, 1
  %vm1056 = vcmp.gt.s32.totalorder %v1055, 0
  %v1057 = vsel %vm1056, %v1055, 0
  %v1058 = vshrl.u32 %v1057, 5
  %v1059 = vand.u32 %v1057, 31
  %v1060 = vsub.s32 32, %v1059
  %v1061 = vshrl.u32 683565275, %v1060
  %v1062 = vshll.u32 683565275, %v1059
  %v1063 = vshrl.u32 2475754826, %v1060
  %v1064 = vor.u32 %v1062, %v1063
  %v1065 = vshll.u32 2475754826, %v1059
  %v1066 = vshrl.u32 2131351028, %v1060
  %v1067 = vor.u32 %v1065, %v1066
  %v1068 = vshll.u32 2131351028, %v1059
  %v1069 = vshrl.u32 2102212464, %v1060
  %v1070 = vor.u32 %v1068, %v1069
  %v1071 = vshll.u32 2102212464, %v1059
  %v1072 = vshrl.u32 920167782, %v1060
  %v1073 = vor.u32 %v1071, %v1072
  %v1074 = vshll.u32 920167782, %v1059
  %v1075 = vshrl.u32 1326507024, %v1060
  %v1076 = vor.u32 %v1074, %v1075
  %vm1077 = vcmp.lt.s32.totalorder %v1058, 1
  %vm1078 = vcmp.lt.s32.totalorder %v1058, 2
  %vm1079 = vcmp.lt.s32.totalorder %v1058, 3
  %vm1080 = vcmp.lt.s32.totalorder %v1058, 4
  %v1081 = vsel %vm1077, %v1061, %v1064
  %v1082 = vsel %vm1080, %v1070, 2102212464
  %v1083 = vsel %vm1079, %v1067, %v1082
  %v1084 = vsel %vm1078, %v1081, %v1083
  %v1085 = vsel %vm1077, %v1064, %v1067
  %v1086 = vsel %vm1080, %v1073, 920167782
  %v1087 = vsel %vm1079, %v1070, %v1086
  %v1088 = vsel %vm1078, %v1085, %v1087
  %v1089 = vsel %vm1077, %v1067, %v1070
  %v1090 = vsel %vm1080, %v1076, 1326507024
  %v1091 = vsel %vm1079, %v1073, %v1090
  %v1092 = vsel %vm1078, %v1089, %v1091
  %v1093 = vshll.u32 %v1053, 8
  %v1094 = vand.u32 %v1093, 65535
  %v1095 = vshrl.u32 %v1093, 16
  %v1096 = vand.u32 %v1092, 65535
  %v1097 = vshrl.u32 %v1092, 16
  %v1098 = vmul.u32 %v1094, %v1096
  %v1099 = vmul.u32 %v1094, %v1097
  %v1100 = vmul.u32 %v1095, %v1096
  %v1101 = vmul.u32 %v1095, %v1097
  %v1102 = vshll.u32 %v1099, 16
  %v1103 = vshrl.u32 %v1099, 16
  %v1104 = vshll.u32 %v1100, 16
  %v1105 = vshrl.u32 %v1100, 16
  %vm1106 = vc.u32 %v1098, %v1102
  %v1107 = vsel %vm1106, 1, 0
  %v1108 = vadd.s32 %v1098, %v1102
  %v1109 = vadd.s32 %v1101, %v1107
  %vm1110 = vc.u32 %v1108, %v1104
  %v1111 = vsel %vm1110, 1, 0
  %v1112 = vadd.s32 %v1108, %v1104
  %v1113 = vadd.s32 %v1109, %v1111
  %v1114 = vadd.s32 %v1113, %v1103
  %v1115 = vadd.s32 %v1114, %v1105
  %v1116 = vand.u32 %v1093, 65535
  %v1117 = vshrl.u32 %v1093, 16
  %v1118 = vand.u32 %v1088, 65535
  %v1119 = vshrl.u32 %v1088, 16
  %v1120 = vmul.u32 %v1116, %v1118
  %v1121 = vmul.u32 %v1116, %v1119
  %v1122 = vmul.u32 %v1117, %v1118
  %v1123 = vmul.u32 %v1117, %v1119
  %v1124 = vshll.u32 %v1121, 16
  %v1125 = vshrl.u32 %v1121, 16
  %v1126 = vshll.u32 %v1122, 16
  %v1127 = vshrl.u32 %v1122, 16
  %vm1128 = vc.u32 %v1120, %v1124
  %v1129 = vsel %vm1128, 1, 0
  %v1130 = vadd.s32 %v1120, %v1124
  %v1131 = vadd.s32 %v1123, %v1129
  %vm1132 = vc.u32 %v1130, %v1126
  %v1133 = vsel %vm1132, 1, 0
  %v1134 = vadd.s32 %v1130, %v1126
  %v1135 = vadd.s32 %v1131, %v1133
  %v1136 = vadd.s32 %v1135, %v1125
  %v1137 = vadd.s32 %v1136, %v1127
  %v1138 = vmul.u32 %v1093, %v1084
  %v1139 = vadd.s32 %v1115, %v1134
  %vm1140 = vc.u32 %v1115, %v1134
  %v1141 = vadd.s32 %v1137, 1
  %v1142 = vsel %vm1140, %v1141, %v1137
  %v1143 = vadd.s32 %v1138, %v1142
  %v1144 = vadd.s32 %v1143, 536870912
  %v1145 = vshrl.u32 %v1144, 30
  %v1146 = vshll.u32 %v1145, 30
  %v1147 = vsub.s32 %v1143, %v1146
  %vm1148 = vcmp.lt.s32.totalorder %v1147, 0
  %v1149 = vsub.s32 0, %v1147
  %v1150 = vsel %vm1148, %v1149, %v1147
  %v1151 = vclz %v1150
  %v1152 = vsub.s32 %v1151, 2
  %vm1153 = vcmp.gt.s32.totalorder 0, %v1152
  %v1154 = vsel %vm1153, 0, %v1152
  %v1155 = vsub.s32 32, %v1154
  %v1156 = vshll.u32 %v1147, %v1154
  %v1157 = vshrl.u32 %v1139, %v1155
  %v1158 = vor.u32 %v1156, %v1157
  %v1159 = vsub.s32 4294967266, %v1154
  %v1160 = vadd.s32 %v1159, 127
  %v1161 = vshll.u32 %v1160, 23
  %v1162 = vor.u32 4788187, %v1161
  %v1163 = vand.u32 2147483647, %v1162
  %v1165 = vcvt.s32.f32 %v1158
  %v1166 = vmul.f32 %v1165, %v1163
  %v1167 = vxor.u32 %v1166, 2147483648
  %v1168 = vsel %vm1047, %v1167, %v1166
  %v1169 = vsub.s32 4, %v1145
  %v1170 = vsel %vm1047, %v1169, %v1145
  %v1171 = vsel %vm1046, %v401, %v1168
  %v1172 = vsel %vm1046, 0, %v1170
  %v1173 = vmul.f32 %v1171, %v1171
  %v1174 = vmul.f32 %v1173, -0.001358992
  %v1175 = vadd.f32 %v1174, 0.041655596
  %v1176 = vmul.f32 %v1173, %v1175
  %v1177 = vadd.f32 %v1176, -0.4999988
  %v1178 = vmul.f32 %v1173, %v1177
  %v1179 = vadd.f32 1.0, %v1178
  %v1180 = vmul.f32 %v1171, %v1171
  %v1181 = vmul.f32 %v1180, -0.00019511016
  %v1182 = vadd.f32 %v1181, 0.008332121
  %v1183 = vmul.f32 %v1180, %v1182
  %v1184 = vadd.f32 %v1183, -0.16666654
  %v1185 = vmul.f32 %v1180, %v1184
  %v1186 = vadd.f32 %v1185, 1.0
  %v1187 = vmul.f32 %v1186, %v1171
  %vm1188 = vweird.f32 %v401
  %v1189 = vand.u32 %v1172, 3
  %vm1190 = vcmp.lt.s32.totalorder %v1189, 2
  %vm1191 = vcmp.eq.s32.totalorder %v1189, 0
  %v1192 = vxor.u32 %v1187, 2147483648
  %v1193 = vsel %vm1191, %v1179, %v1192
  %vm1194 = vcmp.eq.s32.totalorder %v1189, 2
  %v1195 = vxor.u32 %v1179, 2147483648
  %v1196 = vsel %vm1194, %v1195, %v1187
  %v1197 = vsel %vm1190, %v1193, %v1196
  %v1198 = vsel %vm1188, nan, %v1197
  %v1199 = vand.u32 2147483647, %v402
  %vm1200 = vcmp.le.f32.partialorder %v1199, 0.7853982
  %vm1201 = vcmp.lt.s32.totalorder %v402, 0
  %v1202 = vand.u32 %v402, 2139095040
  %v1203 = vshrl.u32 %v1202, 23
  %v1204 = vsub.s32 %v1203, 127
  %v1205 = vand.u32 2147483647, %v402
  %v1206 = vand.u32 %v1205, 8388607
  %v1207 = vor.u32 %v1206, 8388608
  %v1208 = vsub.s32 0, %v1207
  %v1209 = vadd.s32 %v1204, 1
  %vm1210 = vcmp.gt.s32.totalorder %v1209, 0
  %v1211 = vsel %vm1210, %v1209, 0
  %v1212 = vshrl.u32 %v1211, 5
  %v1213 = vand.u32 %v1211, 31
  %v1214 = vsub.s32 32, %v1213
  %v1215 = vshrl.u32 683565275, %v1214
  %v1216 = vshll.u32 683565275, %v1213
  %v1217 = vshrl.u32 2475754826, %v1214
  %v1218 = vor.u32 %v1216, %v1217
  %v1219 = vshll.u32 2475754826, %v1213
  %v1220 = vshrl.u32 2131351028, %v1214
  %v1221 = vor.u32 %v1219, %v1220
  %v1222 = vshll.u32 2131351028, %v1213
  %v1223 = vshrl.u32 2102212464, %v1214
  %v1224 = vor.u32 %v1222, %v1223
  %v1225 = vshll.u32 2102212464, %v1213
  %v1226 = vshrl.u32 920167782, %v1214
  %v1227 = vor.u32 %v1225, %v1226
  %v1228 = vshll.u32 920167782, %v1213
  %v1229 = vshrl.u32 1326507024, %v1214
  %v1230 = vor.u32 %v1228, %v1229
  %vm1231 = vcmp.lt.s32.totalorder %v1212, 1
  %vm1232 = vcmp.lt.s32.totalorder %v1212, 2
  %vm1233 = vcmp.lt.s32.totalorder %v1212, 3
  %vm1234 = vcmp.lt.s32.totalorder %v1212, 4
  %v1235 = vsel %vm1231, %v1215, %v1218
  %v1236 = vsel %vm1234, %v1224, 2102212464
  %v1237 = vsel %vm1233, %v1221, %v1236
  %v1238 = vsel %vm1232, %v1235, %v1237
  %v1239 = vsel %vm1231, %v1218, %v1221
  %v1240 = vsel %vm1234, %v1227, 920167782
  %v1241 = vsel %vm1233, %v1224, %v1240
  %v1242 = vsel %vm1232, %v1239, %v1241
  %v1243 = vsel %vm1231, %v1221, %v1224
  %v1244 = vsel %vm1234, %v1230, 1326507024
  %v1245 = vsel %vm1233, %v1227, %v1244
  %v1246 = vsel %vm1232, %v1243, %v1245
  %v1247 = vshll.u32 %v1207, 8
  %v1248 = vand.u32 %v1247, 65535
  %v1249 = vshrl.u32 %v1247, 16
  %v1250 = vand.u32 %v1246, 65535
  %v1251 = vshrl.u32 %v1246, 16
  %v1252 = vmul.u32 %v1248, %v1250
  %v1253 = vmul.u32 %v1248, %v1251
  %v1254 = vmul.u32 %v1249, %v1250
  %v1255 = vmul.u32 %v1249, %v1251
  %v1256 = vshll.u32 %v1253, 16
  %v1257 = vshrl.u32 %v1253, 16
  %v1258 = vshll.u32 %v1254, 16
  %v1259 = vshrl.u32 %v1254, 16
  %vm1260 = vc.u32 %v1252, %v1256
  %v1261 = vsel %vm1260, 1, 0
  %v1262 = vadd.s32 %v1252, %v1256
  %v1263 = vadd.s32 %v1255, %v1261
  %vm1264 = vc.u32 %v1262, %v1258
  %v1265 = vsel %vm1264, 1, 0
  %v1266 = vadd.s32 %v1262, %v1258
  %v1267 = vadd.s32 %v1263, %v1265
  %v1268 = vadd.s32 %v1267, %v1257
  %v1269 = vadd.s32 %v1268, %v1259
  %v1270 = vand.u32 %v1247, 65535
  %v1271 = vshrl.u32 %v1247, 16
  %v1272 = vand.u32 %v1242, 65535
  %v1273 = vshrl.u32 %v1242, 16
  %v1274 = vmul.u32 %v1270, %v1272
  %v1275 = vmul.u32 %v1270, %v1273
  %v1276 = vmul.u32 %v1271, %v1272
  %v1277 = vmul.u32 %v1271, %v1273
  %v1278 = vshll.u32 %v1275, 16
  %v1279 = vshrl.u32 %v1275, 16
  %v1280 = vshll.u32 %v1276, 16
  %v1281 = vshrl.u32 %v1276, 16
  %vm1282 = vc.u32 %v1274, %v1278
  %v1283 = vsel %vm1282, 1, 0
  %v1284 = vadd.s32 %v1274, %v1278
  %v1285 = vadd.s32 %v1277, %v1283
  %vm1286 = vc.u32 %v1284, %v1280
  %v1287 = vsel %vm1286, 1, 0
  %v1288 = vadd.s32 %v1284, %v1280
  %v1289 = vadd.s32 %v1285, %v1287
  %v1290 = vadd.s32 %v1289, %v1279
  %v1291 = vadd.s32 %v1290, %v1281
  %v1292 = vmul.u32 %v1247, %v1238
  %v1293 = vadd.s32 %v1269, %v1288
  %vm1294 = vc.u32 %v1269, %v1288
  %v1295 = vadd.s32 %v1291, 1
  %v1296 = vsel %vm1294, %v1295, %v1291
  %v1297 = vadd.s32 %v1292, %v1296
  %v1298 = vadd.s32 %v1297, 536870912
  %v1299 = vshrl.u32 %v1298, 30
  %v1300 = vshll.u32 %v1299, 30
  %v1301 = vsub.s32 %v1297, %v1300
  %vm1302 = vcmp.lt.s32.totalorder %v1301, 0
  %v1303 = vsub.s32 0, %v1301
  %v1304 = vsel %vm1302, %v1303, %v1301
  %v1305 = vclz %v1304
  %v1306 = vsub.s32 %v1305, 2
  %vm1307 = vcmp.gt.s32.totalorder 0, %v1306
  %v1308 = vsel %vm1307, 0, %v1306
  %v1309 = vsub.s32 32, %v1308
  %v1310 = vshll.u32 %v1301, %v1308
  %v1311 = vshrl.u32 %v1293, %v1309
  %v1312 = vor.u32 %v1310, %v1311
  %v1313 = vsub.s32 4294967266, %v1308
  %v1314 = vadd.s32 %v1313, 127
  %v1315 = vshll.u32 %v1314, 23
  %v1316 = vor.u32 4788187, %v1315
  %v1317 = vand.u32 2147483647, %v1316
  %v1319 = vcvt.s32.f32 %v1312
  %v1320 = vmul.f32 %v1319, %v1317
  %v1321 = vxor.u32 %v1320, 2147483648
  %v1322 = vsel %vm1201, %v1321, %v1320
  %v1323 = vsub.s32 4, %v1299
  %v1324 = vsel %vm1201, %v1323, %v1299
  %v1325 = vsel %vm1200, %v402, %v1322
  %v1326 = vsel %vm1200, 0, %v1324
  %v1327 = vmul.f32 %v1325, %v1325
  %v1328 = vmul.f32 %v1327, -0.001358992
  %v1329 = vadd.f32 %v1328, 0.041655596
  %v1330 = vmul.f32 %v1327, %v1329
  %v1331 = vadd.f32 %v1330, -0.4999988
  %v1332 = vmul.f32 %v1327, %v1331
  %v1333 = vadd.f32 1.0, %v1332
  %v1334 = vmul.f32 %v1325, %v1325
  %v1335 = vmul.f32 %v1334, -0.00019511016
  %v1336 = vadd.f32 %v1335, 0.008332121
  %v1337 = vmul.f32 %v1334, %v1336
  %v1338 = vadd.f32 %v1337, -0.16666654
  %v1339 = vmul.f32 %v1334, %v1338
  %v1340 = vadd.f32 %v1339, 1.0
  %v1341 = vmul.f32 %v1340, %v1325
  %vm1342 = vweird.f32 %v402
  %v1343 = vand.u32 %v1326, 3
  %vm1344 = vcmp.lt.s32.totalorder %v1343, 2
  %vm1345 = vcmp.eq.s32.totalorder %v1343, 0
  %v1346 = vxor.u32 %v1341, 2147483648
  %v1347 = vsel %vm1345, %v1333, %v1346
  %vm1348 = vcmp.eq.s32.totalorder %v1343, 2
  %v1349 = vxor.u32 %v1333, 2147483648
  %v1350 = vsel %vm1348, %v1349, %v1341
  %v1351 = vsel %vm1344, %v1347, %v1350
  %v1352 = vsel %vm1342, nan, %v1351
  %v1353 = vand.u32 2147483647, %v403
  %vm1354 = vcmp.le.f32.partialorder %v1353, 0.7853982
  %vm1355 = vcmp.lt.s32.totalorder %v403, 0
  %v1356 = vand.u32 %v403, 2139095040
  %v1357 = vshrl.u32 %v1356, 23
  %v1358 = vsub.s32 %v1357, 127
  %v1359 = vand.u32 2147483647, %v403
  %v1360 = vand.u32 %v1359, 8388607
  %v1361 = vor.u32 %v1360, 8388608
  %v1362 = vsub.s32 0, %v1361
  %v1363 = vadd.s32 %v1358, 1
  %vm1364 = vcmp.gt.s32.totalorder %v1363, 0
  %v1365 = vsel %vm1364, %v1363, 0
  %v1366 = vshrl.u32 %v1365, 5
  %v1367 = vand.u32 %v1365, 31
  %v1368 = vsub.s32 32, %v1367
  %v1369 = vshrl.u32 683565275, %v1368
  %v1370 = vshll.u32 683565275, %v1367
  %v1371 = vshrl.u32 2475754826, %v1368
  %v1372 = vor.u32 %v1370, %v1371
  %v1373 = vshll.u32 2475754826, %v1367
  %v1374 = vshrl.u32 2131351028, %v1368
  %v1375 = vor.u32 %v1373, %v1374
  %v1376 = vshll.u32 2131351028, %v1367
  %v1377 = vshrl.u32 2102212464, %v1368
  %v1378 = vor.u32 %v1376, %v1377
  %v1379 = vshll.u32 2102212464, %v1367
  %v1380 = vshrl.u32 920167782, %v1368
  %v1381 = vor.u32 %v1379, %v1380
  %v1382 = vshll.u32 920167782, %v1367
  %v1383 = vshrl.u32 1326507024, %v1368
  %v1384 = vor.u32 %v1382, %v1383
  %vm1385 = vcmp.lt.s32.totalorder %v1366, 1
  %vm1386 = vcmp.lt.s32.totalorder %v1366, 2
  %vm1387 = vcmp.lt.s32.totalorder %v1366, 3
  %vm1388 = vcmp.lt.s32.totalorder %v1366, 4
  %v1389 = vsel %vm1385, %v1369, %v1372
  %v1390 = vsel %vm1388, %v1378, 2102212464
  %v1391 = vsel %vm1387, %v1375, %v1390
  %v1392 = vsel %vm1386, %v1389, %v1391
  %v1393 = vsel %vm1385, %v1372, %v1375
  %v1394 = vsel %vm1388, %v1381, 920167782
  %v1395 = vsel %vm1387, %v1378, %v1394
  %v1396 = vsel %vm1386, %v1393, %v1395
  %v1397 = vsel %vm1385, %v1375, %v1378
  %v1398 = vsel %vm1388, %v1384, 1326507024
  %v1399 = vsel %vm1387, %v1381, %v1398
  %v1400 = vsel %vm1386, %v1397, %v1399
  %v1401 = vshll.u32 %v1361, 8
  %v1402 = vand.u32 %v1401, 65535
  %v1403 = vshrl.u32 %v1401, 16
  %v1404 = vand.u32 %v1400, 65535
  %v1405 = vshrl.u32 %v1400, 16
  %v1406 = vmul.u32 %v1402, %v1404
  %v1407 = vmul.u32 %v1402, %v1405
  %v1408 = vmul.u32 %v1403, %v1404
  %v1409 = vmul.u32 %v1403, %v1405
  %v1410 = vshll.u32 %v1407, 16
  %v1411 = vshrl.u32 %v1407, 16
  %v1412 = vshll.u32 %v1408, 16
  %v1413 = vshrl.u32 %v1408, 16
  %vm1414 = vc.u32 %v1406, %v1410
  %v1415 = vsel %vm1414, 1, 0
  %v1416 = vadd.s32 %v1406, %v1410
  %v1417 = vadd.s32 %v1409, %v1415
  %vm1418 = vc.u32 %v1416, %v1412
  %v1419 = vsel %vm1418, 1, 0
  %v1420 = vadd.s32 %v1416, %v1412
  %v1421 = vadd.s32 %v1417, %v1419
  %v1422 = vadd.s32 %v1421, %v1411
  %v1423 = vadd.s32 %v1422, %v1413
  %v1424 = vand.u32 %v1401, 65535
  %v1425 = vshrl.u32 %v1401, 16
  %v1426 = vand.u32 %v1396, 65535
  %v1427 = vshrl.u32 %v1396, 16
  %v1428 = vmul.u32 %v1424, %v1426
  %v1429 = vmul.u32 %v1424, %v1427
  %v1430 = vmul.u32 %v1425, %v1426
  %v1431 = vmul.u32 %v1425, %v1427
  %v1432 = vshll.u32 %v1429, 16
  %v1433 = vshrl.u32 %v1429, 16
  %v1434 = vshll.u32 %v1430, 16
  %v1435 = vshrl.u32 %v1430, 16
  %vm1436 = vc.u32 %v1428, %v1432
  %v1437 = vsel %vm1436, 1, 0
  %v1438 = vadd.s32 %v1428, %v1432
  %v1439 = vadd.s32 %v1431, %v1437
  %vm1440 = vc.u32 %v1438, %v1434
  %v1441 = vsel %vm1440, 1, 0
  %v1442 = vadd.s32 %v1438, %v1434
  %v1443 = vadd.s32 %v1439, %v1441
  %v1444 = vadd.s32 %v1443, %v1433
  %v1445 = vadd.s32 %v1444, %v1435
  %v1446 = vmul.u32 %v1401, %v1392
  %v1447 = vadd.s32 %v1423, %v1442
  %vm1448 = vc.u32 %v1423, %v1442
  %v1449 = vadd.s32 %v1445, 1
  %v1450 = vsel %vm1448, %v1449, %v1445
  %v1451 = vadd.s32 %v1446, %v1450
  %v1452 = vadd.s32 %v1451, 536870912
  %v1453 = vshrl.u32 %v1452, 30
  %v1454 = vshll.u32 %v1453, 30
  %v1455 = vsub.s32 %v1451, %v1454
  %vm1456 = vcmp.lt.s32.totalorder %v1455, 0
  %v1457 = vsub.s32 0, %v1455
  %v1458 = vsel %vm1456, %v1457, %v1455
  %v1459 = vclz %v1458
  %v1460 = vsub.s32 %v1459, 2
  %vm1461 = vcmp.gt.s32.totalorder 0, %v1460
  %v1462 = vsel %vm1461, 0, %v1460
  %v1463 = vsub.s32 32, %v1462
  %v1464 = vshll.u32 %v1455, %v1462
  %v1465 = vshrl.u32 %v1447, %v1463
  %v1466 = vor.u32 %v1464, %v1465
  %v1467 = vsub.s32 4294967266, %v1462
  %v1468 = vadd.s32 %v1467, 127
  %v1469 = vshll.u32 %v1468, 23
  %v1470 = vor.u32 4788187, %v1469
  %v1471 = vand.u32 2147483647, %v1470
  %v1473 = vcvt.s32.f32 %v1466
  %v1474 = vmul.f32 %v1473, %v1471
  %v1475 = vxor.u32 %v1474, 2147483648
  %v1476 = vsel %vm1355, %v1475, %v1474
  %v1477 = vsub.s32 4, %v1453
  %v1478 = vsel %vm1355, %v1477, %v1453
  %v1479 = vsel %vm1354, %v403, %v1476
  %v1480 = vsel %vm1354, 0, %v1478
  %v1481 = vmul.f32 %v1479, %v1479
  %v1482 = vmul.f32 %v1481, -0.001358992
  %v1483 = vadd.f32 %v1482, 0.041655596
  %v1484 = vmul.f32 %v1481, %v1483
  %v1485 = vadd.f32 %v1484, -0.4999988
  %v1486 = vmul.f32 %v1481, %v1485
  %v1487 = vadd.f32 1.0, %v1486
  %v1488 = vmul.f32 %v1479, %v1479
  %v1489 = vmul.f32 %v1488, -0.00019511016
  %v1490 = vadd.f32 %v1489, 0.008332121
  %v1491 = vmul.f32 %v1488, %v1490
  %v1492 = vadd.f32 %v1491, -0.16666654
  %v1493 = vmul.f32 %v1488, %v1492
  %v1494 = vadd.f32 %v1493, 1.0
  %v1495 = vmul.f32 %v1494, %v1479
  %vm1496 = vweird.f32 %v403
  %v1497 = vand.u32 %v1480, 3
  %vm1498 = vcmp.lt.s32.totalorder %v1497, 2
  %vm1499 = vcmp.eq.s32.totalorder %v1497, 0
  %v1500 = vxor.u32 %v1495, 2147483648
  %v1501 = vsel %vm1499, %v1487, %v1500
  %vm1502 = vcmp.eq.s32.totalorder %v1497, 2
  %v1503 = vxor.u32 %v1487, 2147483648
  %v1504 = vsel %vm1502, %v1503, %v1495
  %v1505 = vsel %vm1498, %v1501, %v1504
  %v1506 = vsel %vm1496, nan, %v1505
  %v1507 = vand.u32 2147483647, %v404
  %vm1508 = vcmp.le.f32.partialorder %v1507, 0.7853982
  %vm1509 = vcmp.lt.s32.totalorder %v404, 0
  %v1510 = vand.u32 %v404, 2139095040
  %v1511 = vshrl.u32 %v1510, 23
  %v1512 = vsub.s32 %v1511, 127
  %v1513 = vand.u32 2147483647, %v404
  %v1514 = vand.u32 %v1513, 8388607
  %v1515 = vor.u32 %v1514, 8388608
  %v1516 = vsub.s32 0, %v1515
  %v1517 = vadd.s32 %v1512, 1
  %vm1518 = vcmp.gt.s32.totalorder %v1517, 0
  %v1519 = vsel %vm1518, %v1517, 0
  %v1520 = vshrl.u32 %v1519, 5
  %v1521 = vand.u32 %v1519, 31
  %v1522 = vsub.s32 32, %v1521
  %v1523 = vshrl.u32 683565275, %v1522
  %v1524 = vshll.u32 683565275, %v1521
  %v1525 = vshrl.u32 2475754826, %v1522
  %v1526 = vor.u32 %v1524, %v1525
  %v1527 = vshll.u32 2475754826, %v1521
  %v1528 = vshrl.u32 2131351028, %v1522
  %v1529 = vor.u32 %v1527, %v1528
  %v1530 = vshll.u32 2131351028, %v1521
  %v1531 = vshrl.u32 2102212464, %v1522
  %v1532 = vor.u32 %v1530, %v1531
  %v1533 = vshll.u32 2102212464, %v1521
  %v1534 = vshrl.u32 920167782, %v1522
  %v1535 = vor.u32 %v1533, %v1534
  %v1536 = vshll.u32 920167782, %v1521
  %v1537 = vshrl.u32 1326507024, %v1522
  %v1538 = vor.u32 %v1536, %v1537
  %vm1539 = vcmp.lt.s32.totalorder %v1520, 1
  %vm1540 = vcmp.lt.s32.totalorder %v1520, 2
  %vm1541 = vcmp.lt.s32.totalorder %v1520, 3
  %vm1542 = vcmp.lt.s32.totalorder %v1520, 4
  %v1543 = vsel %vm1539, %v1523, %v1526
  %v1544 = vsel %vm1542, %v1532, 2102212464
  %v1545 = vsel %vm1541, %v1529, %v1544
  %v1546 = vsel %vm1540, %v1543, %v1545
  %v1547 = vsel %vm1539, %v1526, %v1529
  %v1548 = vsel %vm1542, %v1535, 920167782
  %v1549 = vsel %vm1541, %v1532, %v1548
  %v1550 = vsel %vm1540, %v1547, %v1549
  %v1551 = vsel %vm1539, %v1529, %v1532
  %v1552 = vsel %vm1542, %v1538, 1326507024
  %v1553 = vsel %vm1541, %v1535, %v1552
  %v1554 = vsel %vm1540, %v1551, %v1553
  %v1555 = vshll.u32 %v1515, 8
  %v1556 = vand.u32 %v1555, 65535
  %v1557 = vshrl.u32 %v1555, 16
  %v1558 = vand.u32 %v1554, 65535
  %v1559 = vshrl.u32 %v1554, 16
  %v1560 = vmul.u32 %v1556, %v1558
  %v1561 = vmul.u32 %v1556, %v1559
  %v1562 = vmul.u32 %v1557, %v1558
  %v1563 = vmul.u32 %v1557, %v1559
  %v1564 = vshll.u32 %v1561, 16
  %v1565 = vshrl.u32 %v1561, 16
  %v1566 = vshll.u32 %v1562, 16
  %v1567 = vshrl.u32 %v1562, 16
  %vm1568 = vc.u32 %v1560, %v1564
  %v1569 = vsel %vm1568, 1, 0
  %v1570 = vadd.s32 %v1560, %v1564
  %v1571 = vadd.s32 %v1563, %v1569
  %vm1572 = vc.u32 %v1570, %v1566
  %v1573 = vsel %vm1572, 1, 0
  %v1574 = vadd.s32 %v1570, %v1566
  %v1575 = vadd.s32 %v1571, %v1573
  %v1576 = vadd.s32 %v1575, %v1565
  %v1577 = vadd.s32 %v1576, %v1567
  %v1578 = vand.u32 %v1555, 65535
  %v1579 = vshrl.u32 %v1555, 16
  %v1580 = vand.u32 %v1550, 65535
  %v1581 = vshrl.u32 %v1550, 16
  %v1582 = vmul.u32 %v1578, %v1580
  %v1583 = vmul.u32 %v1578, %v1581
  %v1584 = vmul.u32 %v1579, %v1580
  %v1585 = vmul.u32 %v1579, %v1581
  %v1586 = vshll.u32 %v1583, 16
  %v1587 = vshrl.u32 %v1583, 16
  %v1588 = vshll.u32 %v1584, 16
  %v1589 = vshrl.u32 %v1584, 16
  %vm1590 = vc.u32 %v1582, %v1586
  %v1591 = vsel %vm1590, 1, 0
  %v1592 = vadd.s32 %v1582, %v1586
  %v1593 = vadd.s32 %v1585, %v1591
  %vm1594 = vc.u32 %v1592, %v1588
  %v1595 = vsel %vm1594, 1, 0
  %v1596 = vadd.s32 %v1592, %v1588
  %v1597 = vadd.s32 %v1593, %v1595
  %v1598 = vadd.s32 %v1597, %v1587
  %v1599 = vadd.s32 %v1598, %v1589
  %v1600 = vmul.u32 %v1555, %v1546
  %v1601 = vadd.s32 %v1577, %v1596
  %vm1602 = vc.u32 %v1577, %v1596
  %v1603 = vadd.s32 %v1599, 1
  %v1604 = vsel %vm1602, %v1603, %v1599
  %v1605 = vadd.s32 %v1600, %v1604
  %v1606 = vadd.s32 %v1605, 536870912
  %v1607 = vshrl.u32 %v1606, 30
  %v1608 = vshll.u32 %v1607, 30
  %v1609 = vsub.s32 %v1605, %v1608
  %vm1610 = vcmp.lt.s32.totalorder %v1609, 0
  %v1611 = vsub.s32 0, %v1609
  %v1612 = vsel %vm1610, %v1611, %v1609
  %v1613 = vclz %v1612
  %v1614 = vsub.s32 %v1613, 2
  %vm1615 = vcmp.gt.s32.totalorder 0, %v1614
  %v1616 = vsel %vm1615, 0, %v1614
  %v1617 = vsub.s32 32, %v1616
  %v1618 = vshll.u32 %v1609, %v1616
  %v1619 = vshrl.u32 %v1601, %v1617
  %v1620 = vor.u32 %v1618, %v1619
  %v1621 = vsub.s32 4294967266, %v1616
  %v1622 = vadd.s32 %v1621, 127
  %v1623 = vshll.u32 %v1622, 23
  %v1624 = vor.u32 4788187, %v1623
  %v1625 = vand.u32 2147483647, %v1624
  %v1627 = vcvt.s32.f32 %v1620
  %v1628 = vmul.f32 %v1627, %v1625
  %v1629 = vxor.u32 %v1628, 2147483648
  %v1630 = vsel %vm1509, %v1629, %v1628
  %v1631 = vsub.s32 4, %v1607
  %v1632 = vsel %vm1509, %v1631, %v1607
  %v1633 = vsel %vm1508, %v404, %v1630
  %v1634 = vsel %vm1508, 0, %v1632
  %v1635 = vmul.f32 %v1633, %v1633
  %v1636 = vmul.f32 %v1635, -0.001358992
  %v1637 = vadd.f32 %v1636, 0.041655596
  %v1638 = vmul.f32 %v1635, %v1637
  %v1639 = vadd.f32 %v1638, -0.4999988
  %v1640 = vmul.f32 %v1635, %v1639
  %v1641 = vadd.f32 1.0, %v1640
  %v1642 = vmul.f32 %v1633, %v1633
  %v1643 = vmul.f32 %v1642, -0.00019511016
  %v1644 = vadd.f32 %v1643, 0.008332121
  %v1645 = vmul.f32 %v1642, %v1644
  %v1646 = vadd.f32 %v1645, -0.16666654
  %v1647 = vmul.f32 %v1642, %v1646
  %v1648 = vadd.f32 %v1647, 1.0
  %v1649 = vmul.f32 %v1648, %v1633
  %vm1650 = vweird.f32 %v404
  %v1651 = vand.u32 %v1634, 3
  %vm1652 = vcmp.lt.s32.totalorder %v1651, 2
  %vm1653 = vcmp.eq.s32.totalorder %v1651, 0
  %v1654 = vxor.u32 %v1649, 2147483648
  %v1655 = vsel %vm1653, %v1641, %v1654
  %vm1656 = vcmp.eq.s32.totalorder %v1651, 2
  %v1657 = vxor.u32 %v1641, 2147483648
  %v1658 = vsel %vm1656, %v1657, %v1649
  %v1659 = vsel %vm1652, %v1655, %v1658
  %v1660 = vsel %vm1650, nan, %v1659
  %v1661 = vand.u32 2147483647, %v405
  %vm1662 = vcmp.le.f32.partialorder %v1661, 0.7853982
  %vm1663 = vcmp.lt.s32.totalorder %v405, 0
  %v1664 = vand.u32 %v405, 2139095040
  %v1665 = vshrl.u32 %v1664, 23
  %v1666 = vsub.s32 %v1665, 127
  %v1667 = vand.u32 2147483647, %v405
  %v1668 = vand.u32 %v1667, 8388607
  %v1669 = vor.u32 %v1668, 8388608
  %v1670 = vsub.s32 0, %v1669
  %v1671 = vadd.s32 %v1666, 1
  %vm1672 = vcmp.gt.s32.totalorder %v1671, 0
  %v1673 = vsel %vm1672, %v1671, 0
  %v1674 = vshrl.u32 %v1673, 5
  %v1675 = vand.u32 %v1673, 31
  %v1676 = vsub.s32 32, %v1675
  %v1677 = vshrl.u32 683565275, %v1676
  %v1678 = vshll.u32 683565275, %v1675
  %v1679 = vshrl.u32 2475754826, %v1676
  %v1680 = vor.u32 %v1678, %v1679
  %v1681 = vshll.u32 2475754826, %v1675
  %v1682 = vshrl.u32 2131351028, %v1676
  %v1683 = vor.u32 %v1681, %v1682
  %v1684 = vshll.u32 2131351028, %v1675
  %v1685 = vshrl.u32 2102212464, %v1676
  %v1686 = vor.u32 %v1684, %v1685
  %v1687 = vshll.u32 2102212464, %v1675
  %v1688 = vshrl.u32 920167782, %v1676
  %v1689 = vor.u32 %v1687, %v1688
  %v1690 = vshll.u32 920167782, %v1675
  %v1691 = vshrl.u32 1326507024, %v1676
  %v1692 = vor.u32 %v1690, %v1691
  %vm1693 = vcmp.lt.s32.totalorder %v1674, 1
  %vm1694 = vcmp.lt.s32.totalorder %v1674, 2
  %vm1695 = vcmp.lt.s32.totalorder %v1674, 3
  %vm1696 = vcmp.lt.s32.totalorder %v1674, 4
  %v1697 = vsel %vm1693, %v1677, %v1680
  %v1698 = vsel %vm1696, %v1686, 2102212464
  %v1699 = vsel %vm1695, %v1683, %v1698
  %v1700 = vsel %vm1694, %v1697, %v1699
  %v1701 = vsel %vm1693, %v1680, %v1683
  %v1702 = vsel %vm1696, %v1689, 920167782
  %v1703 = vsel %vm1695, %v1686, %v1702
  %v1704 = vsel %vm1694, %v1701, %v1703
  %v1705 = vsel %vm1693, %v1683, %v1686
  %v1706 = vsel %vm1696, %v1692, 1326507024
  %v1707 = vsel %vm1695, %v1689, %v1706
  %v1708 = vsel %vm1694, %v1705, %v1707
  %v1709 = vshll.u32 %v1669, 8
  %v1710 = vand.u32 %v1709, 65535
  %v1711 = vshrl.u32 %v1709, 16
  %v1712 = vand.u32 %v1708, 65535
  %v1713 = vshrl.u32 %v1708, 16
  %v1714 = vmul.u32 %v1710, %v1712
  %v1715 = vmul.u32 %v1710, %v1713
  %v1716 = vmul.u32 %v1711, %v1712
  %v1717 = vmul.u32 %v1711, %v1713
  %v1718 = vshll.u32 %v1715, 16
  %v1719 = vshrl.u32 %v1715, 16
  %v1720 = vshll.u32 %v1716, 16
  %v1721 = vshrl.u32 %v1716, 16
  %vm1722 = vc.u32 %v1714, %v1718
  %v1723 = vsel %vm1722, 1, 0
  %v1724 = vadd.s32 %v1714, %v1718
  %v1725 = vadd.s32 %v1717, %v1723
  %vm1726 = vc.u32 %v1724, %v1720
  %v1727 = vsel %vm1726, 1, 0
  %v1728 = vadd.s32 %v1724, %v1720
  %v1729 = vadd.s32 %v1725, %v1727
  %v1730 = vadd.s32 %v1729, %v1719
  %v1731 = vadd.s32 %v1730, %v1721
  %v1732 = vand.u32 %v1709, 65535
  %v1733 = vshrl.u32 %v1709, 16
  %v1734 = vand.u32 %v1704, 65535
  %v1735 = vshrl.u32 %v1704, 16
  %v1736 = vmul.u32 %v1732, %v1734
  %v1737 = vmul.u32 %v1732, %v1735
  %v1738 = vmul.u32 %v1733, %v1734
  %v1739 = vmul.u32 %v1733, %v1735
  %v1740 = vshll.u32 %v1737, 16
  %v1741 = vshrl.u32 %v1737, 16
  %v1742 = vshll.u32 %v1738, 16
  %v1743 = vshrl.u32 %v1738, 16
  %vm1744 = vc.u32 %v1736, %v1740
  %v1745 = vsel %vm1744, 1, 0
  %v1746 = vadd.s32 %v1736, %v1740
  %v1747 = vadd.s32 %v1739, %v1745
  %vm1748 = vc.u32 %v1746, %v1742
  %v1749 = vsel %vm1748, 1, 0
  %v1750 = vadd.s32 %v1746, %v1742
  %v1751 = vadd.s32 %v1747, %v1749
  %v1752 = vadd.s32 %v1751, %v1741
  %v1753 = vadd.s32 %v1752, %v1743
  %v1754 = vmul.u32 %v1709, %v1700
  %v1755 = vadd.s32 %v1731, %v1750
  %vm1756 = vc.u32 %v1731, %v1750
  %v1757 = vadd.s32 %v1753, 1
  %v1758 = vsel %vm1756, %v1757, %v1753
  %v1759 = vadd.s32 %v1754, %v1758
  %v1760 = vadd.s32 %v1759, 536870912
  %v1761 = vshrl.u32 %v1760, 30
  %v1762 = vshll.u32 %v1761, 30
  %v1763 = vsub.s32 %v1759, %v1762
  %vm1764 = vcmp.lt.s32.totalorder %v1763, 0
  %v1765 = vsub.s32 0, %v1763
  %v1766 = vsel %vm1764, %v1765, %v1763
  %v1767 = vclz %v1766
  %v1768 = vsub.s32 %v1767, 2
  %vm1769 = vcmp.gt.s32.totalorder 0, %v1768
  %v1770 = vsel %vm1769, 0, %v1768
  %v1771 = vsub.s32 32, %v1770
  %v1772 = vshll.u32 %v1763, %v1770
  %v1773 = vshrl.u32 %v1755, %v1771
  %v1774 = vor.u32 %v1772, %v1773
  %v1775 = vsub.s32 4294967266, %v1770
  %v1776 = vadd.s32 %v1775, 127
  %v1777 = vshll.u32 %v1776, 23
  %v1778 = vor.u32 4788187, %v1777
  %v1779 = vand.u32 2147483647, %v1778
  %v1781 = vcvt.s32.f32 %v1774
  %v1782 = vmul.f32 %v1781, %v1779
  %v1783 = vxor.u32 %v1782, 2147483648
  %v1784 = vsel %vm1663, %v1783, %v1782
  %v1785 = vsub.s32 4, %v1761
  %v1786 = vsel %vm1663, %v1785, %v1761
  %v1787 = vsel %vm1662, %v405, %v1784
  %v1788 = vsel %vm1662, 0, %v1786
  %v1789 = vmul.f32 %v1787, %v1787
  %v1790 = vmul.f32 %v1789, -0.001358992
  %v1791 = vadd.f32 %v1790, 0.041655596
  %v1792 = vmul.f32 %v1789, %v1791
  %v1793 = vadd.f32 %v1792, -0.4999988
  %v1794 = vmul.f32 %v1789, %v1793
  %v1795 = vadd.f32 1.0, %v1794
  %v1796 = vmul.f32 %v1787, %v1787
  %v1797 = vmul.f32 %v1796, -0.00019511016
  %v1798 = vadd.f32 %v1797, 0.008332121
  %v1799 = vmul.f32 %v1796, %v1798
  %v1800 = vadd.f32 %v1799, -0.16666654
  %v1801 = vmul.f32 %v1796, %v1800
  %v1802 = vadd.f32 %v1801, 1.0
  %v1803 = vmul.f32 %v1802, %v1787
  %vm1804 = vweird.f32 %v405
  %v1805 = vand.u32 %v1788, 3
  %vm1806 = vcmp.lt.s32.totalorder %v1805, 2
  %vm1807 = vcmp.eq.s32.totalorder %v1805, 0
  %v1808 = vxor.u32 %v1803, 2147483648
  %v1809 = vsel %vm1807, %v1795, %v1808
  %vm1810 = vcmp.eq.s32.totalorder %v1805, 2
  %v1811 = vxor.u32 %v1795, 2147483648
  %v1812 = vsel %vm1810, %v1811, %v1803
  %v1813 = vsel %vm1806, %v1809, %v1812
  %v1814 = vsel %vm1804, nan, %v1813
  %v1815 = vand.u32 2147483647, %v406
  %vm1816 = vcmp.le.f32.partialorder %v1815, 0.7853982
  %vm1817 = vcmp.lt.s32.totalorder %v406, 0
  %v1818 = vand.u32 %v406, 2139095040
  %v1819 = vshrl.u32 %v1818, 23
  %v1820 = vsub.s32 %v1819, 127
  %v1821 = vand.u32 2147483647, %v406
  %v1822 = vand.u32 %v1821, 8388607
  %v1823 = vor.u32 %v1822, 8388608
  %v1824 = vsub.s32 0, %v1823
  %v1825 = vadd.s32 %v1820, 1
  %vm1826 = vcmp.gt.s32.totalorder %v1825, 0
  %v1827 = vsel %vm1826, %v1825, 0
  %v1828 = vshrl.u32 %v1827, 5
  %v1829 = vand.u32 %v1827, 31
  %v1830 = vsub.s32 32, %v1829
  %v1831 = vshrl.u32 683565275, %v1830
  %v1832 = vshll.u32 683565275, %v1829
  %v1833 = vshrl.u32 2475754826, %v1830
  %v1834 = vor.u32 %v1832, %v1833
  %v1835 = vshll.u32 2475754826, %v1829
  %v1836 = vshrl.u32 2131351028, %v1830
  %v1837 = vor.u32 %v1835, %v1836
  %v1838 = vshll.u32 2131351028, %v1829
  %v1839 = vshrl.u32 2102212464, %v1830
  %v1840 = vor.u32 %v1838, %v1839
  %v1841 = vshll.u32 2102212464, %v1829
  %v1842 = vshrl.u32 920167782, %v1830
  %v1843 = vor.u32 %v1841, %v1842
  %v1844 = vshll.u32 920167782, %v1829
  %v1845 = vshrl.u32 1326507024, %v1830
  %v1846 = vor.u32 %v1844, %v1845
  %vm1847 = vcmp.lt.s32.totalorder %v1828, 1
  %vm1848 = vcmp.lt.s32.totalorder %v1828, 2
  %vm1849 = vcmp.lt.s32.totalorder %v1828, 3
  %vm1850 = vcmp.lt.s32.totalorder %v1828, 4
  %v1851 = vsel %vm1847, %v1831, %v1834
  %v1852 = vsel %vm1850, %v1840, 2102212464
  %v1853 = vsel %vm1849, %v1837, %v1852
  %v1854 = vsel %vm1848, %v1851, %v1853
  %v1855 = vsel %vm1847, %v1834, %v1837
  %v1856 = vsel %vm1850, %v1843, 920167782
  %v1857 = vsel %vm1849, %v1840, %v1856
  %v1858 = vsel %vm1848, %v1855, %v1857
  %v1859 = vsel %vm1847, %v1837, %v1840
  %v1860 = vsel %vm1850, %v1846, 1326507024
  %v1861 = vsel %vm1849, %v1843, %v1860
  %v1862 = vsel %vm1848, %v1859, %v1861
  %v1863 = vshll.u32 %v1823, 8
  %v1864 = vand.u32 %v1863, 65535
  %v1865 = vshrl.u32 %v1863, 16
  %v1866 = vand.u32 %v1862, 65535
  %v1867 = vshrl.u32 %v1862, 16
  %v1868 = vmul.u32 %v1864, %v1866
  %v1869 = vmul.u32 %v1864, %v1867
  %v1870 = vmul.u32 %v1865, %v1866
  %v1871 = vmul.u32 %v1865, %v1867
  %v1872 = vshll.u32 %v1869, 16
  %v1873 = vshrl.u32 %v1869, 16
  %v1874 = vshll.u32 %v1870, 16
  %v1875 = vshrl.u32 %v1870, 16
  %vm1876 = vc.u32 %v1868, %v1872
  %v1877 = vsel %vm1876, 1, 0
  %v1878 = vadd.s32 %v1868, %v1872
  %v1879 = vadd.s32 %v1871, %v1877
  %vm1880 = vc.u32 %v1878, %v1874
  %v1881 = vsel %vm1880, 1, 0
  %v1882 = vadd.s32 %v1878, %v1874
  %v1883 = vadd.s32 %v1879, %v1881
  %v1884 = vadd.s32 %v1883, %v1873
  %v1885 = vadd.s32 %v1884, %v1875
  %v1886 = vand.u32 %v1863, 65535
  %v1887 = vshrl.u32 %v1863, 16
  %v1888 = vand.u32 %v1858, 65535
  %v1889 = vshrl.u32 %v1858, 16
  %v1890 = vmul.u32 %v1886, %v1888
  %v1891 = vmul.u32 %v1886, %v1889
  %v1892 = vmul.u32 %v1887, %v1888
  %v1893 = vmul.u32 %v1887, %v1889
  %v1894 = vshll.u32 %v1891, 16
  %v1895 = vshrl.u32 %v1891, 16
  %v1896 = vshll.u32 %v1892, 16
  %v1897 = vshrl.u32 %v1892, 16
  %vm1898 = vc.u32 %v1890, %v1894
  %v1899 = vsel %vm1898, 1, 0
  %v1900 = vadd.s32 %v1890, %v1894
  %v1901 = vadd.s32 %v1893, %v1899
  %vm1902 = vc.u32 %v1900, %v1896
  %v1903 = vsel %vm1902, 1, 0
  %v1904 = vadd.s32 %v1900, %v1896
  %v1905 = vadd.s32 %v1901, %v1903
  %v1906 = vadd.s32 %v1905, %v1895
  %v1907 = vadd.s32 %v1906, %v1897
  %v1908 = vmul.u32 %v1863, %v1854
  %v1909 = vadd.s32 %v1885, %v1904
  %vm1910 = vc.u32 %v1885, %v1904
  %v1911 = vadd.s32 %v1907, 1
  %v1912 = vsel %vm1910, %v1911, %v1907
  %v1913 = vadd.s32 %v1908, %v1912
  %v1914 = vadd.s32 %v1913, 536870912
  %v1915 = vshrl.u32 %v1914, 30
  %v1916 = vshll.u32 %v1915, 30
  %v1917 = vsub.s32 %v1913, %v1916
  %vm1918 = vcmp.lt.s32.totalorder %v1917, 0
  %v1919 = vsub.s32 0, %v1917
  %v1920 = vsel %vm1918, %v1919, %v1917
  %v1921 = vclz %v1920
  %v1922 = vsub.s32 %v1921, 2
  %vm1923 = vcmp.gt.s32.totalorder 0, %v1922
  %v1924 = vsel %vm1923, 0, %v1922
  %v1925 = vsub.s32 32, %v1924
  %v1926 = vshll.u32 %v1917, %v1924
  %v1927 = vshrl.u32 %v1909, %v1925
  %v1928 = vor.u32 %v1926, %v1927
  %v1929 = vsub.s32 4294967266, %v1924
  %v1930 = vadd.s32 %v1929, 127
  %v1931 = vshll.u32 %v1930, 23
  %v1932 = vor.u32 4788187, %v1931
  %v1933 = vand.u32 2147483647, %v1932
  %v1935 = vcvt.s32.f32 %v1928
  %v1936 = vmul.f32 %v1935, %v1933
  %v1937 = vxor.u32 %v1936, 2147483648
  %v1938 = vsel %vm1817, %v1937, %v1936
  %v1939 = vsub.s32 4, %v1915
  %v1940 = vsel %vm1817, %v1939, %v1915
  %v1941 = vsel %vm1816, %v406, %v1938
  %v1942 = vsel %vm1816, 0, %v1940
  %v1943 = vmul.f32 %v1941, %v1941
  %v1944 = vmul.f32 %v1943, -0.001358992
  %v1945 = vadd.f32 %v1944, 0.041655596
  %v1946 = vmul.f32 %v1943, %v1945
  %v1947 = vadd.f32 %v1946, -0.4999988
  %v1948 = vmul.f32 %v1943, %v1947
  %v1949 = vadd.f32 1.0, %v1948
  %v1950 = vmul.f32 %v1941, %v1941
  %v1951 = vmul.f32 %v1950, -0.00019511016
  %v1952 = vadd.f32 %v1951, 0.008332121
  %v1953 = vmul.f32 %v1950, %v1952
  %v1954 = vadd.f32 %v1953, -0.16666654
  %v1955 = vmul.f32 %v1950, %v1954
  %v1956 = vadd.f32 %v1955, 1.0
  %v1957 = vmul.f32 %v1956, %v1941
  %vm1958 = vweird.f32 %v406
  %v1959 = vand.u32 %v1942, 3
  %vm1960 = vcmp.lt.s32.totalorder %v1959, 2
  %vm1961 = vcmp.eq.s32.totalorder %v1959, 0
  %v1962 = vxor.u32 %v1957, 2147483648
  %v1963 = vsel %vm1961, %v1949, %v1962
  %vm1964 = vcmp.eq.s32.totalorder %v1959, 2
  %v1965 = vxor.u32 %v1949, 2147483648
  %v1966 = vsel %vm1964, %v1965, %v1957
  %v1967 = vsel %vm1960, %v1963, %v1966
  %v1968 = vsel %vm1958, nan, %v1967
  %v1969 = vand.u32 2147483647, %v407
  %vm1970 = vcmp.le.f32.partialorder %v1969, 0.7853982
  %vm1971 = vcmp.lt.s32.totalorder %v407, 0
  %v1972 = vand.u32 %v407, 2139095040
  %v1973 = vshrl.u32 %v1972, 23
  %v1974 = vsub.s32 %v1973, 127
  %v1975 = vand.u32 2147483647, %v407
  %v1976 = vand.u32 %v1975, 8388607
  %v1977 = vor.u32 %v1976, 8388608
  %v1978 = vsub.s32 0, %v1977
  %v1979 = vadd.s32 %v1974, 1
  %vm1980 = vcmp.gt.s32.totalorder %v1979, 0
  %v1981 = vsel %vm1980, %v1979, 0
  %v1982 = vshrl.u32 %v1981, 5
  %v1983 = vand.u32 %v1981, 31
  %v1984 = vsub.s32 32, %v1983
  %v1985 = vshrl.u32 683565275, %v1984
  %v1986 = vshll.u32 683565275, %v1983
  %v1987 = vshrl.u32 2475754826, %v1984
  %v1988 = vor.u32 %v1986, %v1987
  %v1989 = vshll.u32 2475754826, %v1983
  %v1990 = vshrl.u32 2131351028, %v1984
  %v1991 = vor.u32 %v1989, %v1990
  %v1992 = vshll.u32 2131351028, %v1983
  %v1993 = vshrl.u32 2102212464, %v1984
  %v1994 = vor.u32 %v1992, %v1993
  %v1995 = vshll.u32 2102212464, %v1983
  %v1996 = vshrl.u32 920167782, %v1984
  %v1997 = vor.u32 %v1995, %v1996
  %v1998 = vshll.u32 920167782, %v1983
  %v1999 = vshrl.u32 1326507024, %v1984
  %v2000 = vor.u32 %v1998, %v1999
  %vm2001 = vcmp.lt.s32.totalorder %v1982, 1
  %vm2002 = vcmp.lt.s32.totalorder %v1982, 2
  %vm2003 = vcmp.lt.s32.totalorder %v1982, 3
  %vm2004 = vcmp.lt.s32.totalorder %v1982, 4
  %v2005 = vsel %vm2001, %v1985, %v1988
  %v2006 = vsel %vm2004, %v1994, 2102212464
  %v2007 = vsel %vm2003, %v1991, %v2006
  %v2008 = vsel %vm2002, %v2005, %v2007
  %v2009 = vsel %vm2001, %v1988, %v1991
  %v2010 = vsel %vm2004, %v1997, 920167782
  %v2011 = vsel %vm2003, %v1994, %v2010
  %v2012 = vsel %vm2002, %v2009, %v2011
  %v2013 = vsel %vm2001, %v1991, %v1994
  %v2014 = vsel %vm2004, %v2000, 1326507024
  %v2015 = vsel %vm2003, %v1997, %v2014
  %v2016 = vsel %vm2002, %v2013, %v2015
  %v2017 = vshll.u32 %v1977, 8
  %v2018 = vand.u32 %v2017, 65535
  %v2019 = vshrl.u32 %v2017, 16
  %v2020 = vand.u32 %v2016, 65535
  %v2021 = vshrl.u32 %v2016, 16
  %v2022 = vmul.u32 %v2018, %v2020
  %v2023 = vmul.u32 %v2018, %v2021
  %v2024 = vmul.u32 %v2019, %v2020
  %v2025 = vmul.u32 %v2019, %v2021
  %v2026 = vshll.u32 %v2023, 16
  %v2027 = vshrl.u32 %v2023, 16
  %v2028 = vshll.u32 %v2024, 16
  %v2029 = vshrl.u32 %v2024, 16
  %vm2030 = vc.u32 %v2022, %v2026
  %v2031 = vsel %vm2030, 1, 0
  %v2032 = vadd.s32 %v2022, %v2026
  %v2033 = vadd.s32 %v2025, %v2031
  %vm2034 = vc.u32 %v2032, %v2028
  %v2035 = vsel %vm2034, 1, 0
  %v2036 = vadd.s32 %v2032, %v2028
  %v2037 = vadd.s32 %v2033, %v2035
  %v2038 = vadd.s32 %v2037, %v2027
  %v2039 = vadd.s32 %v2038, %v2029
  %v2040 = vand.u32 %v2017, 65535
  %v2041 = vshrl.u32 %v2017, 16
  %v2042 = vand.u32 %v2012, 65535
  %v2043 = vshrl.u32 %v2012, 16
  %v2044 = vmul.u32 %v2040, %v2042
  %v2045 = vmul.u32 %v2040, %v2043
  %v2046 = vmul.u32 %v2041, %v2042
  %v2047 = vmul.u32 %v2041, %v2043
  %v2048 = vshll.u32 %v2045, 16
  %v2049 = vshrl.u32 %v2045, 16
  %v2050 = vshll.u32 %v2046, 16
  %v2051 = vshrl.u32 %v2046, 16
  %vm2052 = vc.u32 %v2044, %v2048
  %v2053 = vsel %vm2052, 1, 0
  %v2054 = vadd.s32 %v2044, %v2048
  %v2055 = vadd.s32 %v2047, %v2053
  %vm2056 = vc.u32 %v2054, %v2050
  %v2057 = vsel %vm2056, 1, 0
  %v2058 = vadd.s32 %v2054, %v2050
  %v2059 = vadd.s32 %v2055, %v2057
  %v2060 = vadd.s32 %v2059, %v2049
  %v2061 = vadd.s32 %v2060, %v2051
  %v2062 = vmul.u32 %v2017, %v2008
  %v2063 = vadd.s32 %v2039, %v2058
  %vm2064 = vc.u32 %v2039, %v2058
  %v2065 = vadd.s32 %v2061, 1
  %v2066 = vsel %vm2064, %v2065, %v2061
  %v2067 = vadd.s32 %v2062, %v2066
  %v2068 = vadd.s32 %v2067, 536870912
  %v2069 = vshrl.u32 %v2068, 30
  %v2070 = vshll.u32 %v2069, 30
  %v2071 = vsub.s32 %v2067, %v2070
  %vm2072 = vcmp.lt.s32.totalorder %v2071, 0
  %v2073 = vsub.s32 0, %v2071
  %v2074 = vsel %vm2072, %v2073, %v2071
  %v2075 = vclz %v2074
  %v2076 = vsub.s32 %v2075, 2
  %vm2077 = vcmp.gt.s32.totalorder 0, %v2076
  %v2078 = vsel %vm2077, 0, %v2076
  %v2079 = vsub.s32 32, %v2078
  %v2080 = vshll.u32 %v2071, %v2078
  %v2081 = vshrl.u32 %v2063, %v2079
  %v2082 = vor.u32 %v2080, %v2081
  %v2083 = vsub.s32 4294967266, %v2078
  %v2084 = vadd.s32 %v2083, 127
  %v2085 = vshll.u32 %v2084, 23
  %v2086 = vor.u32 4788187, %v2085
  %v2087 = vand.u32 2147483647, %v2086
  %v2089 = vcvt.s32.f32 %v2082
  %v2090 = vmul.f32 %v2089, %v2087
  %v2091 = vxor.u32 %v2090, 2147483648
  %v2092 = vsel %vm1971, %v2091, %v2090
  %v2093 = vsub.s32 4, %v2069
  %v2094 = vsel %vm1971, %v2093, %v2069
  %v2095 = vsel %vm1970, %v407, %v2092
  %v2096 = vsel %vm1970, 0, %v2094
  %v2097 = vmul.f32 %v2095, %v2095
  %v2098 = vmul.f32 %v2097, -0.001358992
  %v2099 = vadd.f32 %v2098, 0.041655596
  %v2100 = vmul.f32 %v2097, %v2099
  %v2101 = vadd.f32 %v2100, -0.4999988
  %v2102 = vmul.f32 %v2097, %v2101
  %v2103 = vadd.f32 1.0, %v2102
  %v2104 = vmul.f32 %v2095, %v2095
  %v2105 = vmul.f32 %v2104, -0.00019511016
  %v2106 = vadd.f32 %v2105, 0.008332121
  %v2107 = vmul.f32 %v2104, %v2106
  %v2108 = vadd.f32 %v2107, -0.16666654
  %v2109 = vmul.f32 %v2104, %v2108
  %v2110 = vadd.f32 %v2109, 1.0
  %v2111 = vmul.f32 %v2110, %v2095
  %vm2112 = vweird.f32 %v407
  %v2113 = vand.u32 %v2096, 3
  %vm2114 = vcmp.lt.s32.totalorder %v2113, 2
  %vm2115 = vcmp.eq.s32.totalorder %v2113, 0
  %v2116 = vxor.u32 %v2111, 2147483648
  %v2117 = vsel %vm2115, %v2103, %v2116
  %vm2118 = vcmp.eq.s32.totalorder %v2113, 2
  %v2119 = vxor.u32 %v2103, 2147483648
  %v2120 = vsel %vm2118, %v2119, %v2111
  %v2121 = vsel %vm2114, %v2117, %v2120
  %v2122 = vsel %vm2112, nan, %v2121
  %v2123 = vand.u32 2147483647, %v408
  %vm2124 = vcmp.le.f32.partialorder %v2123, 0.7853982
  %vm2125 = vcmp.lt.s32.totalorder %v408, 0
  %v2126 = vand.u32 %v408, 2139095040
  %v2127 = vshrl.u32 %v2126, 23
  %v2128 = vsub.s32 %v2127, 127
  %v2129 = vand.u32 2147483647, %v408
  %v2130 = vand.u32 %v2129, 8388607
  %v2131 = vor.u32 %v2130, 8388608
  %v2132 = vsub.s32 0, %v2131
  %v2133 = vadd.s32 %v2128, 1
  %vm2134 = vcmp.gt.s32.totalorder %v2133, 0
  %v2135 = vsel %vm2134, %v2133, 0
  %v2136 = vshrl.u32 %v2135, 5
  %v2137 = vand.u32 %v2135, 31
  %v2138 = vsub.s32 32, %v2137
  %v2139 = vshrl.u32 683565275, %v2138
  %v2140 = vshll.u32 683565275, %v2137
  %v2141 = vshrl.u32 2475754826, %v2138
  %v2142 = vor.u32 %v2140, %v2141
  %v2143 = vshll.u32 2475754826, %v2137
  %v2144 = vshrl.u32 2131351028, %v2138
  %v2145 = vor.u32 %v2143, %v2144
  %v2146 = vshll.u32 2131351028, %v2137
  %v2147 = vshrl.u32 2102212464, %v2138
  %v2148 = vor.u32 %v2146, %v2147
  %v2149 = vshll.u32 2102212464, %v2137
  %v2150 = vshrl.u32 920167782, %v2138
  %v2151 = vor.u32 %v2149, %v2150
  %v2152 = vshll.u32 920167782, %v2137
  %v2153 = vshrl.u32 1326507024, %v2138
  %v2154 = vor.u32 %v2152, %v2153
  %vm2155 = vcmp.lt.s32.totalorder %v2136, 1
  %vm2156 = vcmp.lt.s32.totalorder %v2136, 2
  %vm2157 = vcmp.lt.s32.totalorder %v2136, 3
  %vm2158 = vcmp.lt.s32.totalorder %v2136, 4
  %v2159 = vsel %vm2155, %v2139, %v2142
  %v2160 = vsel %vm2158, %v2148, 2102212464
  %v2161 = vsel %vm2157, %v2145, %v2160
  %v2162 = vsel %vm2156, %v2159, %v2161
  %v2163 = vsel %vm2155, %v2142, %v2145
  %v2164 = vsel %vm2158, %v2151, 920167782
  %v2165 = vsel %vm2157, %v2148, %v2164
  %v2166 = vsel %vm2156, %v2163, %v2165
  %v2167 = vsel %vm2155, %v2145, %v2148
  %v2168 = vsel %vm2158, %v2154, 1326507024
  %v2169 = vsel %vm2157, %v2151, %v2168
  %v2170 = vsel %vm2156, %v2167, %v2169
  %v2171 = vshll.u32 %v2131, 8
  %v2172 = vand.u32 %v2171, 65535
  %v2173 = vshrl.u32 %v2171, 16
  %v2174 = vand.u32 %v2170, 65535
  %v2175 = vshrl.u32 %v2170, 16
  %v2176 = vmul.u32 %v2172, %v2174
  %v2177 = vmul.u32 %v2172, %v2175
  %v2178 = vmul.u32 %v2173, %v2174
  %v2179 = vmul.u32 %v2173, %v2175
  %v2180 = vshll.u32 %v2177, 16
  %v2181 = vshrl.u32 %v2177, 16
  %v2182 = vshll.u32 %v2178, 16
  %v2183 = vshrl.u32 %v2178, 16
  %vm2184 = vc.u32 %v2176, %v2180
  %v2185 = vsel %vm2184, 1, 0
  %v2186 = vadd.s32 %v2176, %v2180
  %v2187 = vadd.s32 %v2179, %v2185
  %vm2188 = vc.u32 %v2186, %v2182
  %v2189 = vsel %vm2188, 1, 0
  %v2190 = vadd.s32 %v2186, %v2182
  %v2191 = vadd.s32 %v2187, %v2189
  %v2192 = vadd.s32 %v2191, %v2181
  %v2193 = vadd.s32 %v2192, %v2183
  %v2194 = vand.u32 %v2171, 65535
  %v2195 = vshrl.u32 %v2171, 16
  %v2196 = vand.u32 %v2166, 65535
  %v2197 = vshrl.u32 %v2166, 16
  %v2198 = vmul.u32 %v2194, %v2196
  %v2199 = vmul.u32 %v2194, %v2197
  %v2200 = vmul.u32 %v2195, %v2196
  %v2201 = vmul.u32 %v2195, %v2197
  %v2202 = vshll.u32 %v2199, 16
  %v2203 = vshrl.u32 %v2199, 16
  %v2204 = vshll.u32 %v2200, 16
  %v2205 = vshrl.u32 %v2200, 16
  %vm2206 = vc.u32 %v2198, %v2202
  %v2207 = vsel %vm2206, 1, 0
  %v2208 = vadd.s32 %v2198, %v2202
  %v2209 = vadd.s32 %v2201, %v2207
  %vm2210 = vc.u32 %v2208, %v2204
  %v2211 = vsel %vm2210, 1, 0
  %v2212 = vadd.s32 %v2208, %v2204
  %v2213 = vadd.s32 %v2209, %v2211
  %v2214 = vadd.s32 %v2213, %v2203
  %v2215 = vadd.s32 %v2214, %v2205
  %v2216 = vmul.u32 %v2171, %v2162
  %v2217 = vadd.s32 %v2193, %v2212
  %vm2218 = vc.u32 %v2193, %v2212
  %v2219 = vadd.s32 %v2215, 1
  %v2220 = vsel %vm2218, %v2219, %v2215
  %v2221 = vadd.s32 %v2216, %v2220
  %v2222 = vadd.s32 %v2221, 536870912
  %v2223 = vshrl.u32 %v2222, 30
  %v2224 = vshll.u32 %v2223, 30
  %v2225 = vsub.s32 %v2221, %v2224
  %vm2226 = vcmp.lt.s32.totalorder %v2225, 0
  %v2227 = vsub.s32 0, %v2225
  %v2228 = vsel %vm2226, %v2227, %v2225
  %v2229 = vclz %v2228
  %v2230 = vsub.s32 %v2229, 2
  %vm2231 = vcmp.gt.s32.totalorder 0, %v2230
  %v2232 = vsel %vm2231, 0, %v2230
  %v2233 = vsub.s32 32, %v2232
  %v2234 = vshll.u32 %v2225, %v2232
  %v2235 = vshrl.u32 %v2217, %v2233
  %v2236 = vor.u32 %v2234, %v2235
  %v2237 = vsub.s32 4294967266, %v2232
  %v2238 = vadd.s32 %v2237, 127
  %v2239 = vshll.u32 %v2238, 23
  %v2240 = vor.u32 4788187, %v2239
  %v2241 = vand.u32 2147483647, %v2240
  %v2243 = vcvt.s32.f32 %v2236
  %v2244 = vmul.f32 %v2243, %v2241
  %v2245 = vxor.u32 %v2244, 2147483648
  %v2246 = vsel %vm2125, %v2245, %v2244
  %v2247 = vsub.s32 4, %v2223
  %v2248 = vsel %vm2125, %v2247, %v2223
  %v2249 = vsel %vm2124, %v408, %v2246
  %v2250 = vsel %vm2124, 0, %v2248
  %v2251 = vmul.f32 %v2249, %v2249
  %v2252 = vmul.f32 %v2251, -0.001358992
  %v2253 = vadd.f32 %v2252, 0.041655596
  %v2254 = vmul.f32 %v2251, %v2253
  %v2255 = vadd.f32 %v2254, -0.4999988
  %v2256 = vmul.f32 %v2251, %v2255
  %v2257 = vadd.f32 1.0, %v2256
  %v2258 = vmul.f32 %v2249, %v2249
  %v2259 = vmul.f32 %v2258, -0.00019511016
  %v2260 = vadd.f32 %v2259, 0.008332121
  %v2261 = vmul.f32 %v2258, %v2260
  %v2262 = vadd.f32 %v2261, -0.16666654
  %v2263 = vmul.f32 %v2258, %v2262
  %v2264 = vadd.f32 %v2263, 1.0
  %v2265 = vmul.f32 %v2264, %v2249
  %vm2266 = vweird.f32 %v408
  %v2267 = vand.u32 %v2250, 3
  %vm2268 = vcmp.lt.s32.totalorder %v2267, 2
  %vm2269 = vcmp.eq.s32.totalorder %v2267, 0
  %v2270 = vxor.u32 %v2265, 2147483648
  %v2271 = vsel %vm2269, %v2257, %v2270
  %vm2272 = vcmp.eq.s32.totalorder %v2267, 2
  %v2273 = vxor.u32 %v2257, 2147483648
  %v2274 = vsel %vm2272, %v2273, %v2265
  %v2275 = vsel %vm2268, %v2271, %v2274
  %v2276 = vsel %vm2266, nan, %v2275
  %v2277 = vand.u32 2147483647, %v409
  %vm2278 = vcmp.le.f32.partialorder %v2277, 0.7853982
  %vm2279 = vcmp.lt.s32.totalorder %v409, 0
  %v2280 = vand.u32 %v409, 2139095040
  %v2281 = vshrl.u32 %v2280, 23
  %v2282 = vsub.s32 %v2281, 127
  %v2283 = vand.u32 2147483647, %v409
  %v2284 = vand.u32 %v2283, 8388607
  %v2285 = vor.u32 %v2284, 8388608
  %v2286 = vsub.s32 0, %v2285
  %v2287 = vadd.s32 %v2282, 1
  %vm2288 = vcmp.gt.s32.totalorder %v2287, 0
  %v2289 = vsel %vm2288, %v2287, 0
  %v2290 = vshrl.u32 %v2289, 5
  %v2291 = vand.u32 %v2289, 31
  %v2292 = vsub.s32 32, %v2291
  %v2293 = vshrl.u32 683565275, %v2292
  %v2294 = vshll.u32 683565275, %v2291
  %v2295 = vshrl.u32 2475754826, %v2292
  %v2296 = vor.u32 %v2294, %v2295
  %v2297 = vshll.u32 2475754826, %v2291
  %v2298 = vshrl.u32 2131351028, %v2292
  %v2299 = vor.u32 %v2297, %v2298
  %v2300 = vshll.u32 2131351028, %v2291
  %v2301 = vshrl.u32 2102212464, %v2292
  %v2302 = vor.u32 %v2300, %v2301
  %v2303 = vshll.u32 2102212464, %v2291
  %v2304 = vshrl.u32 920167782, %v2292
  %v2305 = vor.u32 %v2303, %v2304
  %v2306 = vshll.u32 920167782, %v2291
  %v2307 = vshrl.u32 1326507024, %v2292
  %v2308 = vor.u32 %v2306, %v2307
  %vm2309 = vcmp.lt.s32.totalorder %v2290, 1
  %vm2310 = vcmp.lt.s32.totalorder %v2290, 2
  %vm2311 = vcmp.lt.s32.totalorder %v2290, 3
  %vm2312 = vcmp.lt.s32.totalorder %v2290, 4
  %v2313 = vsel %vm2309, %v2293, %v2296
  %v2314 = vsel %vm2312, %v2302, 2102212464
  %v2315 = vsel %vm2311, %v2299, %v2314
  %v2316 = vsel %vm2310, %v2313, %v2315
  %v2317 = vsel %vm2309, %v2296, %v2299
  %v2318 = vsel %vm2312, %v2305, 920167782
  %v2319 = vsel %vm2311, %v2302, %v2318
  %v2320 = vsel %vm2310, %v2317, %v2319
  %v2321 = vsel %vm2309, %v2299, %v2302
  %v2322 = vsel %vm2312, %v2308, 1326507024
  %v2323 = vsel %vm2311, %v2305, %v2322
  %v2324 = vsel %vm2310, %v2321, %v2323
  %v2325 = vshll.u32 %v2285, 8
  %v2326 = vand.u32 %v2325, 65535
  %v2327 = vshrl.u32 %v2325, 16
  %v2328 = vand.u32 %v2324, 65535
  %v2329 = vshrl.u32 %v2324, 16
  %v2330 = vmul.u32 %v2326, %v2328
  %v2331 = vmul.u32 %v2326, %v2329
  %v2332 = vmul.u32 %v2327, %v2328
  %v2333 = vmul.u32 %v2327, %v2329
  %v2334 = vshll.u32 %v2331, 16
  %v2335 = vshrl.u32 %v2331, 16
  %v2336 = vshll.u32 %v2332, 16
  %v2337 = vshrl.u32 %v2332, 16
  %vm2338 = vc.u32 %v2330, %v2334
  %v2339 = vsel %vm2338, 1, 0
  %v2340 = vadd.s32 %v2330, %v2334
  %v2341 = vadd.s32 %v2333, %v2339
  %vm2342 = vc.u32 %v2340, %v2336
  %v2343 = vsel %vm2342, 1, 0
  %v2344 = vadd.s32 %v2340, %v2336
  %v2345 = vadd.s32 %v2341, %v2343
  %v2346 = vadd.s32 %v2345, %v2335
  %v2347 = vadd.s32 %v2346, %v2337
  %v2348 = vand.u32 %v2325, 65535
  %v2349 = vshrl.u32 %v2325, 16
  %v2350 = vand.u32 %v2320, 65535
  %v2351 = vshrl.u32 %v2320, 16
  %v2352 = vmul.u32 %v2348, %v2350
  %v2353 = vmul.u32 %v2348, %v2351
  %v2354 = vmul.u32 %v2349, %v2350
  %v2355 = vmul.u32 %v2349, %v2351
  %v2356 = vshll.u32 %v2353, 16
  %v2357 = vshrl.u32 %v2353, 16
  %v2358 = vshll.u32 %v2354, 16
  %v2359 = vshrl.u32 %v2354, 16
  %vm2360 = vc.u32 %v2352, %v2356
  %v2361 = vsel %vm2360, 1, 0
  %v2362 = vadd.s32 %v2352, %v2356
  %v2363 = vadd.s32 %v2355, %v2361
  %vm2364 = vc.u32 %v2362, %v2358
  %v2365 = vsel %vm2364, 1, 0
  %v2366 = vadd.s32 %v2362, %v2358
  %v2367 = vadd.s32 %v2363, %v2365
  %v2368 = vadd.s32 %v2367, %v2357
  %v2369 = vadd.s32 %v2368, %v2359
  %v2370 = vmul.u32 %v2325, %v2316
  %v2371 = vadd.s32 %v2347, %v2366
  %vm2372 = vc.u32 %v2347, %v2366
  %v2373 = vadd.s32 %v2369, 1
  %v2374 = vsel %vm2372, %v2373, %v2369
  %v2375 = vadd.s32 %v2370, %v2374
  %v2376 = vadd.s32 %v2375, 536870912
  %v2377 = vshrl.u32 %v2376, 30
  %v2378 = vshll.u32 %v2377, 30
  %v2379 = vsub.s32 %v2375, %v2378
  %vm2380 = vcmp.lt.s32.totalorder %v2379, 0
  %v2381 = vsub.s32 0, %v2379
  %v2382 = vsel %vm2380, %v2381, %v2379
  %v2383 = vclz %v2382
  %v2384 = vsub.s32 %v2383, 2
  %vm2385 = vcmp.gt.s32.totalorder 0, %v2384
  %v2386 = vsel %vm2385, 0, %v2384
  %v2387 = vsub.s32 32, %v2386
  %v2388 = vshll.u32 %v2379, %v2386
  %v2389 = vshrl.u32 %v2371, %v2387
  %v2390 = vor.u32 %v2388, %v2389
  %v2391 = vsub.s32 4294967266, %v2386
  %v2392 = vadd.s32 %v2391, 127
  %v2393 = vshll.u32 %v2392, 23
  %v2394 = vor.u32 4788187, %v2393
  %v2395 = vand.u32 2147483647, %v2394
  %v2397 = vcvt.s32.f32 %v2390
  %v2398 = vmul.f32 %v2397, %v2395
  %v2399 = vxor.u32 %v2398, 2147483648
  %v2400 = vsel %vm2279, %v2399, %v2398
  %v2401 = vsub.s32 4, %v2377
  %v2402 = vsel %vm2279, %v2401, %v2377
  %v2403 = vsel %vm2278, %v409, %v2400
  %v2404 = vsel %vm2278, 0, %v2402
  %v2405 = vmul.f32 %v2403, %v2403
  %v2406 = vmul.f32 %v2405, -0.001358992
  %v2407 = vadd.f32 %v2406, 0.041655596
  %v2408 = vmul.f32 %v2405, %v2407
  %v2409 = vadd.f32 %v2408, -0.4999988
  %v2410 = vmul.f32 %v2405, %v2409
  %v2411 = vadd.f32 1.0, %v2410
  %v2412 = vmul.f32 %v2403, %v2403
  %v2413 = vmul.f32 %v2412, -0.00019511016
  %v2414 = vadd.f32 %v2413, 0.008332121
  %v2415 = vmul.f32 %v2412, %v2414
  %v2416 = vadd.f32 %v2415, -0.16666654
  %v2417 = vmul.f32 %v2412, %v2416
  %v2418 = vadd.f32 %v2417, 1.0
  %v2419 = vmul.f32 %v2418, %v2403
  %vm2420 = vweird.f32 %v409
  %v2421 = vand.u32 %v2404, 3
  %vm2422 = vcmp.lt.s32.totalorder %v2421, 2
  %vm2423 = vcmp.eq.s32.totalorder %v2421, 0
  %v2424 = vxor.u32 %v2419, 2147483648
  %v2425 = vsel %vm2423, %v2411, %v2424
  %vm2426 = vcmp.eq.s32.totalorder %v2421, 2
  %v2427 = vxor.u32 %v2411, 2147483648
  %v2428 = vsel %vm2426, %v2427, %v2419
  %v2429 = vsel %vm2422, %v2425, %v2428
  %v2430 = vsel %vm2420, nan, %v2429
  %v2431 = vand.u32 2147483647, %v410
  %vm2432 = vcmp.le.f32.partialorder %v2431, 0.7853982
  %vm2433 = vcmp.lt.s32.totalorder %v410, 0
  %v2434 = vand.u32 %v410, 2139095040
  %v2435 = vshrl.u32 %v2434, 23
  %v2436 = vsub.s32 %v2435, 127
  %v2437 = vand.u32 2147483647, %v410
  %v2438 = vand.u32 %v2437, 8388607
  %v2439 = vor.u32 %v2438, 8388608
  %v2440 = vsub.s32 0, %v2439
  %v2441 = vadd.s32 %v2436, 1
  %vm2442 = vcmp.gt.s32.totalorder %v2441, 0
  %v2443 = vsel %vm2442, %v2441, 0
  %v2444 = vshrl.u32 %v2443, 5
  %v2445 = vand.u32 %v2443, 31
  %v2446 = vsub.s32 32, %v2445
  %v2447 = vshrl.u32 683565275, %v2446
  %v2448 = vshll.u32 683565275, %v2445
  %v2449 = vshrl.u32 2475754826, %v2446
  %v2450 = vor.u32 %v2448, %v2449
  %v2451 = vshll.u32 2475754826, %v2445
  %v2452 = vshrl.u32 2131351028, %v2446
  %v2453 = vor.u32 %v2451, %v2452
  %v2454 = vshll.u32 2131351028, %v2445
  %v2455 = vshrl.u32 2102212464, %v2446
  %v2456 = vor.u32 %v2454, %v2455
  %v2457 = vshll.u32 2102212464, %v2445
  %v2458 = vshrl.u32 920167782, %v2446
  %v2459 = vor.u32 %v2457, %v2458
  %v2460 = vshll.u32 920167782, %v2445
  %v2461 = vshrl.u32 1326507024, %v2446
  %v2462 = vor.u32 %v2460, %v2461
  %vm2463 = vcmp.lt.s32.totalorder %v2444, 1
  %vm2464 = vcmp.lt.s32.totalorder %v2444, 2
  %vm2465 = vcmp.lt.s32.totalorder %v2444, 3
  %vm2466 = vcmp.lt.s32.totalorder %v2444, 4
  %v2467 = vsel %vm2463, %v2447, %v2450
  %v2468 = vsel %vm2466, %v2456, 2102212464
  %v2469 = vsel %vm2465, %v2453, %v2468
  %v2470 = vsel %vm2464, %v2467, %v2469
  %v2471 = vsel %vm2463, %v2450, %v2453
  %v2472 = vsel %vm2466, %v2459, 920167782
  %v2473 = vsel %vm2465, %v2456, %v2472
  %v2474 = vsel %vm2464, %v2471, %v2473
  %v2475 = vsel %vm2463, %v2453, %v2456
  %v2476 = vsel %vm2466, %v2462, 1326507024
  %v2477 = vsel %vm2465, %v2459, %v2476
  %v2478 = vsel %vm2464, %v2475, %v2477
  %v2479 = vshll.u32 %v2439, 8
  %v2480 = vand.u32 %v2479, 65535
  %v2481 = vshrl.u32 %v2479, 16
  %v2482 = vand.u32 %v2478, 65535
  %v2483 = vshrl.u32 %v2478, 16
  %v2484 = vmul.u32 %v2480, %v2482
  %v2485 = vmul.u32 %v2480, %v2483
  %v2486 = vmul.u32 %v2481, %v2482
  %v2487 = vmul.u32 %v2481, %v2483
  %v2488 = vshll.u32 %v2485, 16
  %v2489 = vshrl.u32 %v2485, 16
  %v2490 = vshll.u32 %v2486, 16
  %v2491 = vshrl.u32 %v2486, 16
  %vm2492 = vc.u32 %v2484, %v2488
  %v2493 = vsel %vm2492, 1, 0
  %v2494 = vadd.s32 %v2484, %v2488
  %v2495 = vadd.s32 %v2487, %v2493
  %vm2496 = vc.u32 %v2494, %v2490
  %v2497 = vsel %vm2496, 1, 0
  %v2498 = vadd.s32 %v2494, %v2490
  %v2499 = vadd.s32 %v2495, %v2497
  %v2500 = vadd.s32 %v2499, %v2489
  %v2501 = vadd.s32 %v2500, %v2491
  %v2502 = vand.u32 %v2479, 65535
  %v2503 = vshrl.u32 %v2479, 16
  %v2504 = vand.u32 %v2474, 65535
  %v2505 = vshrl.u32 %v2474, 16
  %v2506 = vmul.u32 %v2502, %v2504
  %v2507 = vmul.u32 %v2502, %v2505
  %v2508 = vmul.u32 %v2503, %v2504
  %v2509 = vmul.u32 %v2503, %v2505
  %v2510 = vshll.u32 %v2507, 16
  %v2511 = vshrl.u32 %v2507, 16
  %v2512 = vshll.u32 %v2508, 16
  %v2513 = vshrl.u32 %v2508, 16
  %vm2514 = vc.u32 %v2506, %v2510
  %v2515 = vsel %vm2514, 1, 0
  %v2516 = vadd.s32 %v2506, %v2510
  %v2517 = vadd.s32 %v2509, %v2515
  %vm2518 = vc.u32 %v2516, %v2512
  %v2519 = vsel %vm2518, 1, 0
  %v2520 = vadd.s32 %v2516, %v2512
  %v2521 = vadd.s32 %v2517, %v2519
  %v2522 = vadd.s32 %v2521, %v2511
  %v2523 = vadd.s32 %v2522, %v2513
  %v2524 = vmul.u32 %v2479, %v2470
  %v2525 = vadd.s32 %v2501, %v2520
  %vm2526 = vc.u32 %v2501, %v2520
  %v2527 = vadd.s32 %v2523, 1
  %v2528 = vsel %vm2526, %v2527, %v2523
  %v2529 = vadd.s32 %v2524, %v2528
  %v2530 = vadd.s32 %v2529, 536870912
  %v2531 = vshrl.u32 %v2530, 30
  %v2532 = vshll.u32 %v2531, 30
  %v2533 = vsub.s32 %v2529, %v2532
  %vm2534 = vcmp.lt.s32.totalorder %v2533, 0
  %v2535 = vsub.s32 0, %v2533
  %v2536 = vsel %vm2534, %v2535, %v2533
  %v2537 = vclz %v2536
  %v2538 = vsub.s32 %v2537, 2
  %vm2539 = vcmp.gt.s32.totalorder 0, %v2538
  %v2540 = vsel %vm2539, 0, %v2538
  %v2541 = vsub.s32 32, %v2540
  %v2542 = vshll.u32 %v2533, %v2540
  %v2543 = vshrl.u32 %v2525, %v2541
  %v2544 = vor.u32 %v2542, %v2543
  %v2545 = vsub.s32 4294967266, %v2540
  %v2546 = vadd.s32 %v2545, 127
  %v2547 = vshll.u32 %v2546, 23
  %v2548 = vor.u32 4788187, %v2547
  %v2549 = vand.u32 2147483647, %v2548
  %v2551 = vcvt.s32.f32 %v2544
  %v2552 = vmul.f32 %v2551, %v2549
  %v2553 = vxor.u32 %v2552, 2147483648
  %v2554 = vsel %vm2433, %v2553, %v2552
  %v2555 = vsub.s32 4, %v2531
  %v2556 = vsel %vm2433, %v2555, %v2531
  %v2557 = vsel %vm2432, %v410, %v2554
  %v2558 = vsel %vm2432, 0, %v2556
  %v2559 = vmul.f32 %v2557, %v2557
  %v2560 = vmul.f32 %v2559, -0.001358992
  %v2561 = vadd.f32 %v2560, 0.041655596
  %v2562 = vmul.f32 %v2559, %v2561
  %v2563 = vadd.f32 %v2562, -0.4999988
  %v2564 = vmul.f32 %v2559, %v2563
  %v2565 = vadd.f32 1.0, %v2564
  %v2566 = vmul.f32 %v2557, %v2557
  %v2567 = vmul.f32 %v2566, -0.00019511016
  %v2568 = vadd.f32 %v2567, 0.008332121
  %v2569 = vmul.f32 %v2566, %v2568
  %v2570 = vadd.f32 %v2569, -0.16666654
  %v2571 = vmul.f32 %v2566, %v2570
  %v2572 = vadd.f32 %v2571, 1.0
  %v2573 = vmul.f32 %v2572, %v2557
  %vm2574 = vweird.f32 %v410
  %v2575 = vand.u32 %v2558, 3
  %vm2576 = vcmp.lt.s32.totalorder %v2575, 2
  %vm2577 = vcmp.eq.s32.totalorder %v2575, 0
  %v2578 = vxor.u32 %v2573, 2147483648
  %v2579 = vsel %vm2577, %v2565, %v2578
  %vm2580 = vcmp.eq.s32.totalorder %v2575, 2
  %v2581 = vxor.u32 %v2565, 2147483648
  %v2582 = vsel %vm2580, %v2581, %v2573
  %v2583 = vsel %vm2576, %v2579, %v2582
  %v2584 = vsel %vm2574, nan, %v2583
  %v2585 = vand.u32 2147483647, %v411
  %vm2586 = vcmp.le.f32.partialorder %v2585, 0.7853982
  %vm2587 = vcmp.lt.s32.totalorder %v411, 0
  %v2588 = vand.u32 %v411, 2139095040
  %v2589 = vshrl.u32 %v2588, 23
  %v2590 = vsub.s32 %v2589, 127
  %v2591 = vand.u32 2147483647, %v411
  %v2592 = vand.u32 %v2591, 8388607
  %v2593 = vor.u32 %v2592, 8388608
  %v2594 = vsub.s32 0, %v2593
  %v2595 = vadd.s32 %v2590, 1
  %vm2596 = vcmp.gt.s32.totalorder %v2595, 0
  %v2597 = vsel %vm2596, %v2595, 0
  %v2598 = vshrl.u32 %v2597, 5
  %v2599 = vand.u32 %v2597, 31
  %v2600 = vsub.s32 32, %v2599
  %v2601 = vshrl.u32 683565275, %v2600
  %v2602 = vshll.u32 683565275, %v2599
  %v2603 = vshrl.u32 2475754826, %v2600
  %v2604 = vor.u32 %v2602, %v2603
  %v2605 = vshll.u32 2475754826, %v2599
  %v2606 = vshrl.u32 2131351028, %v2600
  %v2607 = vor.u32 %v2605, %v2606
  %v2608 = vshll.u32 2131351028, %v2599
  %v2609 = vshrl.u32 2102212464, %v2600
  %v2610 = vor.u32 %v2608, %v2609
  %v2611 = vshll.u32 2102212464, %v2599
  %v2612 = vshrl.u32 920167782, %v2600
  %v2613 = vor.u32 %v2611, %v2612
  %v2614 = vshll.u32 920167782, %v2599
  %v2615 = vshrl.u32 1326507024, %v2600
  %v2616 = vor.u32 %v2614, %v2615
  %vm2617 = vcmp.lt.s32.totalorder %v2598, 1
  %vm2618 = vcmp.lt.s32.totalorder %v2598, 2
  %vm2619 = vcmp.lt.s32.totalorder %v2598, 3
  %vm2620 = vcmp.lt.s32.totalorder %v2598, 4
  %v2621 = vsel %vm2617, %v2601, %v2604
  %v2622 = vsel %vm2620, %v2610, 2102212464
  %v2623 = vsel %vm2619, %v2607, %v2622
  %v2624 = vsel %vm2618, %v2621, %v2623
  %v2625 = vsel %vm2617, %v2604, %v2607
  %v2626 = vsel %vm2620, %v2613, 920167782
  %v2627 = vsel %vm2619, %v2610, %v2626
  %v2628 = vsel %vm2618, %v2625, %v2627
  %v2629 = vsel %vm2617, %v2607, %v2610
  %v2630 = vsel %vm2620, %v2616, 1326507024
  %v2631 = vsel %vm2619, %v2613, %v2630
  %v2632 = vsel %vm2618, %v2629, %v2631
  %v2633 = vshll.u32 %v2593, 8
  %v2634 = vand.u32 %v2633, 65535
  %v2635 = vshrl.u32 %v2633, 16
  %v2636 = vand.u32 %v2632, 65535
  %v2637 = vshrl.u32 %v2632, 16
  %v2638 = vmul.u32 %v2634, %v2636
  %v2639 = vmul.u32 %v2634, %v2637
  %v2640 = vmul.u32 %v2635, %v2636
  %v2641 = vmul.u32 %v2635, %v2637
  %v2642 = vshll.u32 %v2639, 16
  %v2643 = vshrl.u32 %v2639, 16
  %v2644 = vshll.u32 %v2640, 16
  %v2645 = vshrl.u32 %v2640, 16
  %vm2646 = vc.u32 %v2638, %v2642
  %v2647 = vsel %vm2646, 1, 0
  %v2648 = vadd.s32 %v2638, %v2642
  %v2649 = vadd.s32 %v2641, %v2647
  %vm2650 = vc.u32 %v2648, %v2644
  %v2651 = vsel %vm2650, 1, 0
  %v2652 = vadd.s32 %v2648, %v2644
  %v2653 = vadd.s32 %v2649, %v2651
  %v2654 = vadd.s32 %v2653, %v2643
  %v2655 = vadd.s32 %v2654, %v2645
  %v2656 = vand.u32 %v2633, 65535
  %v2657 = vshrl.u32 %v2633, 16
  %v2658 = vand.u32 %v2628, 65535
  %v2659 = vshrl.u32 %v2628, 16
  %v2660 = vmul.u32 %v2656, %v2658
  %v2661 = vmul.u32 %v2656, %v2659
  %v2662 = vmul.u32 %v2657, %v2658
  %v2663 = vmul.u32 %v2657, %v2659
  %v2664 = vshll.u32 %v2661, 16
  %v2665 = vshrl.u32 %v2661, 16
  %v2666 = vshll.u32 %v2662, 16
  %v2667 = vshrl.u32 %v2662, 16
  %vm2668 = vc.u32 %v2660, %v2664
  %v2669 = vsel %vm2668, 1, 0
  %v2670 = vadd.s32 %v2660, %v2664
  %v2671 = vadd.s32 %v2663, %v2669
  %vm2672 = vc.u32 %v2670, %v2666
  %v2673 = vsel %vm2672, 1, 0
  %v2674 = vadd.s32 %v2670, %v2666
  %v2675 = vadd.s32 %v2671, %v2673
  %v2676 = vadd.s32 %v2675, %v2665
  %v2677 = vadd.s32 %v2676, %v2667
  %v2678 = vmul.u32 %v2633, %v2624
  %v2679 = vadd.s32 %v2655, %v2674
  %vm2680 = vc.u32 %v2655, %v2674
  %v2681 = vadd.s32 %v2677, 1
  %v2682 = vsel %vm2680, %v2681, %v2677
  %v2683 = vadd.s32 %v2678, %v2682
  %v2684 = vadd.s32 %v2683, 536870912
  %v2685 = vshrl.u32 %v2684, 30
  %v2686 = vshll.u32 %v2685, 30
  %v2687 = vsub.s32 %v2683, %v2686
  %vm2688 = vcmp.lt.s32.totalorder %v2687, 0
  %v2689 = vsub.s32 0, %v2687
  %v2690 = vsel %vm2688, %v2689, %v2687
  %v2691 = vclz %v2690
  %v2692 = vsub.s32 %v2691, 2
  %vm2693 = vcmp.gt.s32.totalorder 0, %v2692
  %v2694 = vsel %vm2693, 0, %v2692
  %v2695 = vsub.s32 32, %v2694
  %v2696 = vshll.u32 %v2687, %v2694
  %v2697 = vshrl.u32 %v2679, %v2695
  %v2698 = vor.u32 %v2696, %v2697
  %v2699 = vsub.s32 4294967266, %v2694
  %v2700 = vadd.s32 %v2699, 127
  %v2701 = vshll.u32 %v2700, 23
  %v2702 = vor.u32 4788187, %v2701
  %v2703 = vand.u32 2147483647, %v2702
  %v2705 = vcvt.s32.f32 %v2698
  %v2706 = vmul.f32 %v2705, %v2703
  %v2707 = vxor.u32 %v2706, 2147483648
  %v2708 = vsel %vm2587, %v2707, %v2706
  %v2709 = vsub.s32 4, %v2685
  %v2710 = vsel %vm2587, %v2709, %v2685
  %v2711 = vsel %vm2586, %v411, %v2708
  %v2712 = vsel %vm2586, 0, %v2710
  %v2713 = vmul.f32 %v2711, %v2711
  %v2714 = vmul.f32 %v2713, -0.001358992
  %v2715 = vadd.f32 %v2714, 0.041655596
  %v2716 = vmul.f32 %v2713, %v2715
  %v2717 = vadd.f32 %v2716, -0.4999988
  %v2718 = vmul.f32 %v2713, %v2717
  %v2719 = vadd.f32 1.0, %v2718
  %v2720 = vmul.f32 %v2711, %v2711
  %v2721 = vmul.f32 %v2720, -0.00019511016
  %v2722 = vadd.f32 %v2721, 0.008332121
  %v2723 = vmul.f32 %v2720, %v2722
  %v2724 = vadd.f32 %v2723, -0.16666654
  %v2725 = vmul.f32 %v2720, %v2724
  %v2726 = vadd.f32 %v2725, 1.0
  %v2727 = vmul.f32 %v2726, %v2711
  %vm2728 = vweird.f32 %v411
  %v2729 = vand.u32 %v2712, 3
  %vm2730 = vcmp.lt.s32.totalorder %v2729, 2
  %vm2731 = vcmp.eq.s32.totalorder %v2729, 0
  %v2732 = vxor.u32 %v2727, 2147483648
  %v2733 = vsel %vm2731, %v2719, %v2732
  %vm2734 = vcmp.eq.s32.totalorder %v2729, 2
  %v2735 = vxor.u32 %v2719, 2147483648
  %v2736 = vsel %vm2734, %v2735, %v2727
  %v2737 = vsel %vm2730, %v2733, %v2736
  %v2738 = vsel %vm2728, nan, %v2737
  %v2739 = vand.u32 2147483647, %v412
  %vm2740 = vcmp.le.f32.partialorder %v2739, 0.7853982
  %vm2741 = vcmp.lt.s32.totalorder %v412, 0
  %v2742 = vand.u32 %v412, 2139095040
  %v2743 = vshrl.u32 %v2742, 23
  %v2744 = vsub.s32 %v2743, 127
  %v2745 = vand.u32 2147483647, %v412
  %v2746 = vand.u32 %v2745, 8388607
  %v2747 = vor.u32 %v2746, 8388608
  %v2748 = vsub.s32 0, %v2747
  %v2749 = vadd.s32 %v2744, 1
  %vm2750 = vcmp.gt.s32.totalorder %v2749, 0
  %v2751 = vsel %vm2750, %v2749, 0
  %v2752 = vshrl.u32 %v2751, 5
  %v2753 = vand.u32 %v2751, 31
  %v2754 = vsub.s32 32, %v2753
  %v2755 = vshrl.u32 683565275, %v2754
  %v2756 = vshll.u32 683565275, %v2753
  %v2757 = vshrl.u32 2475754826, %v2754
  %v2758 = vor.u32 %v2756, %v2757
  %v2759 = vshll.u32 2475754826, %v2753
  %v2760 = vshrl.u32 2131351028, %v2754
  %v2761 = vor.u32 %v2759, %v2760
  %v2762 = vshll.u32 2131351028, %v2753
  %v2763 = vshrl.u32 2102212464, %v2754
  %v2764 = vor.u32 %v2762, %v2763
  %v2765 = vshll.u32 2102212464, %v2753
  %v2766 = vshrl.u32 920167782, %v2754
  %v2767 = vor.u32 %v2765, %v2766
  %v2768 = vshll.u32 920167782, %v2753
  %v2769 = vshrl.u32 1326507024, %v2754
  %v2770 = vor.u32 %v2768, %v2769
  %vm2771 = vcmp.lt.s32.totalorder %v2752, 1
  %vm2772 = vcmp.lt.s32.totalorder %v2752, 2
  %vm2773 = vcmp.lt.s32.totalorder %v2752, 3
  %vm2774 = vcmp.lt.s32.totalorder %v2752, 4
  %v2775 = vsel %vm2771, %v2755, %v2758
  %v2776 = vsel %vm2774, %v2764, 2102212464
  %v2777 = vsel %vm2773, %v2761, %v2776
  %v2778 = vsel %vm2772, %v2775, %v2777
  %v2779 = vsel %vm2771, %v2758, %v2761
  %v2780 = vsel %vm2774, %v2767, 920167782
  %v2781 = vsel %vm2773, %v2764, %v2780
  %v2782 = vsel %vm2772, %v2779, %v2781
  %v2783 = vsel %vm2771, %v2761, %v2764
  %v2784 = vsel %vm2774, %v2770, 1326507024
  %v2785 = vsel %vm2773, %v2767, %v2784
  %v2786 = vsel %vm2772, %v2783, %v2785
  %v2787 = vshll.u32 %v2747, 8
  %v2788 = vand.u32 %v2787, 65535
  %v2789 = vshrl.u32 %v2787, 16
  %v2790 = vand.u32 %v2786, 65535
  %v2791 = vshrl.u32 %v2786, 16
  %v2792 = vmul.u32 %v2788, %v2790
  %v2793 = vmul.u32 %v2788, %v2791
  %v2794 = vmul.u32 %v2789, %v2790
  %v2795 = vmul.u32 %v2789, %v2791
  %v2796 = vshll.u32 %v2793, 16
  %v2797 = vshrl.u32 %v2793, 16
  %v2798 = vshll.u32 %v2794, 16
  %v2799 = vshrl.u32 %v2794, 16
  %vm2800 = vc.u32 %v2792, %v2796
  %v2801 = vsel %vm2800, 1, 0
  %v2802 = vadd.s32 %v2792, %v2796
  %v2803 = vadd.s32 %v2795, %v2801
  %vm2804 = vc.u32 %v2802, %v2798
  %v2805 = vsel %vm2804, 1, 0
  %v2806 = vadd.s32 %v2802, %v2798
  %v2807 = vadd.s32 %v2803, %v2805
  %v2808 = vadd.s32 %v2807, %v2797
  %v2809 = vadd.s32 %v2808, %v2799
  %v2810 = vand.u32 %v2787, 65535
  %v2811 = vshrl.u32 %v2787, 16
  %v2812 = vand.u32 %v2782, 65535
  %v2813 = vshrl.u32 %v2782, 16
  %v2814 = vmul.u32 %v2810, %v2812
  %v2815 = vmul.u32 %v2810, %v2813
  %v2816 = vmul.u32 %v2811, %v2812
  %v2817 = vmul.u32 %v2811, %v2813
  %v2818 = vshll.u32 %v2815, 16
  %v2819 = vshrl.u32 %v2815, 16
  %v2820 = vshll.u32 %v2816, 16
  %v2821 = vshrl.u32 %v2816, 16
  %vm2822 = vc.u32 %v2814, %v2818
  %v2823 = vsel %vm2822, 1, 0
  %v2824 = vadd.s32 %v2814, %v2818
  %v2825 = vadd.s32 %v2817, %v2823
  %vm2826 = vc.u32 %v2824, %v2820
  %v2827 = vsel %vm2826, 1, 0
  %v2828 = vadd.s32 %v2824, %v2820
  %v2829 = vadd.s32 %v2825, %v2827
  %v2830 = vadd.s32 %v2829, %v2819
  %v2831 = vadd.s32 %v2830, %v2821
  %v2832 = vmul.u32 %v2787, %v2778
  %v2833 = vadd.s32 %v2809, %v2828
  %vm2834 = vc.u32 %v2809, %v2828
  %v2835 = vadd.s32 %v2831, 1
  %v2836 = vsel %vm2834, %v2835, %v2831
  %v2837 = vadd.s32 %v2832, %v2836
  %v2838 = vadd.s32 %v2837, 536870912
  %v2839 = vshrl.u32 %v2838, 30
  %v2840 = vshll.u32 %v2839, 30
  %v2841 = vsub.s32 %v2837, %v2840
  %vm2842 = vcmp.lt.s32.totalorder %v2841, 0
  %v2843 = vsub.s32 0, %v2841
  %v2844 = vsel %vm2842, %v2843, %v2841
  %v2845 = vclz %v2844
  %v2846 = vsub.s32 %v2845, 2
  %vm2847 = vcmp.gt.s32.totalorder 0, %v2846
  %v2848 = vsel %vm2847, 0, %v2846
  %v2849 = vsub.s32 32, %v2848
  %v2850 = vshll.u32 %v2841, %v2848
  %v2851 = vshrl.u32 %v2833, %v2849
  %v2852 = vor.u32 %v2850, %v2851
  %v2853 = vsub.s32 4294967266, %v2848
  %v2854 = vadd.s32 %v2853, 127
  %v2855 = vshll.u32 %v2854, 23
  %v2856 = vor.u32 4788187, %v2855
  %v2857 = vand.u32 2147483647, %v2856
  %v2859 = vcvt.s32.f32 %v2852
  %v2860 = vmul.f32 %v2859, %v2857
  %v2861 = vxor.u32 %v2860, 2147483648
  %v2862 = vsel %vm2741, %v2861, %v2860
  %v2863 = vsub.s32 4, %v2839
  %v2864 = vsel %vm2741, %v2863, %v2839
  %v2865 = vsel %vm2740, %v412, %v2862
  %v2866 = vsel %vm2740, 0, %v2864
  %v2867 = vmul.f32 %v2865, %v2865
  %v2868 = vmul.f32 %v2867, -0.001358992
  %v2869 = vadd.f32 %v2868, 0.041655596
  %v2870 = vmul.f32 %v2867, %v2869
  %v2871 = vadd.f32 %v2870, -0.4999988
  %v2872 = vmul.f32 %v2867, %v2871
  %v2873 = vadd.f32 1.0, %v2872
  %v2874 = vmul.f32 %v2865, %v2865
  %v2875 = vmul.f32 %v2874, -0.00019511016
  %v2876 = vadd.f32 %v2875, 0.008332121
  %v2877 = vmul.f32 %v2874, %v2876
  %v2878 = vadd.f32 %v2877, -0.16666654
  %v2879 = vmul.f32 %v2874, %v2878
  %v2880 = vadd.f32 %v2879, 1.0
  %v2881 = vmul.f32 %v2880, %v2865
  %vm2882 = vweird.f32 %v412
  %v2883 = vand.u32 %v2866, 3
  %vm2884 = vcmp.lt.s32.totalorder %v2883, 2
  %vm2885 = vcmp.eq.s32.totalorder %v2883, 0
  %v2886 = vxor.u32 %v2881, 2147483648
  %v2887 = vsel %vm2885, %v2873, %v2886
  %vm2888 = vcmp.eq.s32.totalorder %v2883, 2
  %v2889 = vxor.u32 %v2873, 2147483648
  %v2890 = vsel %vm2888, %v2889, %v2881
  %v2891 = vsel %vm2884, %v2887, %v2890
  %v2892 = vsel %vm2882, nan, %v2891
  %v2893 = vand.u32 2147483647, %v413
  %vm2894 = vcmp.le.f32.partialorder %v2893, 0.7853982
  %vm2895 = vcmp.lt.s32.totalorder %v413, 0
  %v2896 = vand.u32 %v413, 2139095040
  %v2897 = vshrl.u32 %v2896, 23
  %v2898 = vsub.s32 %v2897, 127
  %v2899 = vand.u32 2147483647, %v413
  %v2900 = vand.u32 %v2899, 8388607
  %v2901 = vor.u32 %v2900, 8388608
  %v2902 = vsub.s32 0, %v2901
  %v2903 = vadd.s32 %v2898, 1
  %vm2904 = vcmp.gt.s32.totalorder %v2903, 0
  %v2905 = vsel %vm2904, %v2903, 0
  %v2906 = vshrl.u32 %v2905, 5
  %v2907 = vand.u32 %v2905, 31
  %v2908 = vsub.s32 32, %v2907
  %v2909 = vshrl.u32 683565275, %v2908
  %v2910 = vshll.u32 683565275, %v2907
  %v2911 = vshrl.u32 2475754826, %v2908
  %v2912 = vor.u32 %v2910, %v2911
  %v2913 = vshll.u32 2475754826, %v2907
  %v2914 = vshrl.u32 2131351028, %v2908
  %v2915 = vor.u32 %v2913, %v2914
  %v2916 = vshll.u32 2131351028, %v2907
  %v2917 = vshrl.u32 2102212464, %v2908
  %v2918 = vor.u32 %v2916, %v2917
  %v2919 = vshll.u32 2102212464, %v2907
  %v2920 = vshrl.u32 920167782, %v2908
  %v2921 = vor.u32 %v2919, %v2920
  %v2922 = vshll.u32 920167782, %v2907
  %v2923 = vshrl.u32 1326507024, %v2908
  %v2924 = vor.u32 %v2922, %v2923
  %vm2925 = vcmp.lt.s32.totalorder %v2906, 1
  %vm2926 = vcmp.lt.s32.totalorder %v2906, 2
  %vm2927 = vcmp.lt.s32.totalorder %v2906, 3
  %vm2928 = vcmp.lt.s32.totalorder %v2906, 4
  %v2929 = vsel %vm2925, %v2909, %v2912
  %v2930 = vsel %vm2928, %v2918, 2102212464
  %v2931 = vsel %vm2927, %v2915, %v2930
  %v2932 = vsel %vm2926, %v2929, %v2931
  %v2933 = vsel %vm2925, %v2912, %v2915
  %v2934 = vsel %vm2928, %v2921, 920167782
  %v2935 = vsel %vm2927, %v2918, %v2934
  %v2936 = vsel %vm2926, %v2933, %v2935
  %v2937 = vsel %vm2925, %v2915, %v2918
  %v2938 = vsel %vm2928, %v2924, 1326507024
  %v2939 = vsel %vm2927, %v2921, %v2938
  %v2940 = vsel %vm2926, %v2937, %v2939
  %v2941 = vshll.u32 %v2901, 8
  %v2942 = vand.u32 %v2941, 65535
  %v2943 = vshrl.u32 %v2941, 16
  %v2944 = vand.u32 %v2940, 65535
  %v2945 = vshrl.u32 %v2940, 16
  %v2946 = vmul.u32 %v2942, %v2944
  %v2947 = vmul.u32 %v2942, %v2945
  %v2948 = vmul.u32 %v2943, %v2944
  %v2949 = vmul.u32 %v2943, %v2945
  %v2950 = vshll.u32 %v2947, 16
  %v2951 = vshrl.u32 %v2947, 16
  %v2952 = vshll.u32 %v2948, 16
  %v2953 = vshrl.u32 %v2948, 16
  %vm2954 = vc.u32 %v2946, %v2950
  %v2955 = vsel %vm2954, 1, 0
  %v2956 = vadd.s32 %v2946, %v2950
  %v2957 = vadd.s32 %v2949, %v2955
  %vm2958 = vc.u32 %v2956, %v2952
  %v2959 = vsel %vm2958, 1, 0
  %v2960 = vadd.s32 %v2956, %v2952
  %v2961 = vadd.s32 %v2957, %v2959
  %v2962 = vadd.s32 %v2961, %v2951
  %v2963 = vadd.s32 %v2962, %v2953
  %v2964 = vand.u32 %v2941, 65535
  %v2965 = vshrl.u32 %v2941, 16
  %v2966 = vand.u32 %v2936, 65535
  %v2967 = vshrl.u32 %v2936, 16
  %v2968 = vmul.u32 %v2964, %v2966
  %v2969 = vmul.u32 %v2964, %v2967
  %v2970 = vmul.u32 %v2965, %v2966
  %v2971 = vmul.u32 %v2965, %v2967
  %v2972 = vshll.u32 %v2969, 16
  %v2973 = vshrl.u32 %v2969, 16
  %v2974 = vshll.u32 %v2970, 16
  %v2975 = vshrl.u32 %v2970, 16
  %vm2976 = vc.u32 %v2968, %v2972
  %v2977 = vsel %vm2976, 1, 0
  %v2978 = vadd.s32 %v2968, %v2972
  %v2979 = vadd.s32 %v2971, %v2977
  %vm2980 = vc.u32 %v2978, %v2974
  %v2981 = vsel %vm2980, 1, 0
  %v2982 = vadd.s32 %v2978, %v2974
  %v2983 = vadd.s32 %v2979, %v2981
  %v2984 = vadd.s32 %v2983, %v2973
  %v2985 = vadd.s32 %v2984, %v2975
  %v2986 = vmul.u32 %v2941, %v2932
  %v2987 = vadd.s32 %v2963, %v2982
  %vm2988 = vc.u32 %v2963, %v2982
  %v2989 = vadd.s32 %v2985, 1
  %v2990 = vsel %vm2988, %v2989, %v2985
  %v2991 = vadd.s32 %v2986, %v2990
  %v2992 = vadd.s32 %v2991, 536870912
  %v2993 = vshrl.u32 %v2992, 30
  %v2994 = vshll.u32 %v2993, 30
  %v2995 = vsub.s32 %v2991, %v2994
  %vm2996 = vcmp.lt.s32.totalorder %v2995, 0
  %v2997 = vsub.s32 0, %v2995
  %v2998 = vsel %vm2996, %v2997, %v2995
  %v2999 = vclz %v2998
  %v3000 = vsub.s32 %v2999, 2
  %vm3001 = vcmp.gt.s32.totalorder 0, %v3000
  %v3002 = vsel %vm3001, 0, %v3000
  %v3003 = vsub.s32 32, %v3002
  %v3004 = vshll.u32 %v2995, %v3002
  %v3005 = vshrl.u32 %v2987, %v3003
  %v3006 = vor.u32 %v3004, %v3005
  %v3007 = vsub.s32 4294967266, %v3002
  %v3008 = vadd.s32 %v3007, 127
  %v3009 = vshll.u32 %v3008, 23
  %v3010 = vor.u32 4788187, %v3009
  %v3011 = vand.u32 2147483647, %v3010
  %v3013 = vcvt.s32.f32 %v3006
  %v3014 = vmul.f32 %v3013, %v3011
  %v3015 = vxor.u32 %v3014, 2147483648
  %v3016 = vsel %vm2895, %v3015, %v3014
  %v3017 = vsub.s32 4, %v2993
  %v3018 = vsel %vm2895, %v3017, %v2993
  %v3019 = vsel %vm2894, %v413, %v3016
  %v3020 = vsel %vm2894, 0, %v3018
  %v3021 = vmul.f32 %v3019, %v3019
  %v3022 = vmul.f32 %v3021, -0.001358992
  %v3023 = vadd.f32 %v3022, 0.041655596
  %v3024 = vmul.f32 %v3021, %v3023
  %v3025 = vadd.f32 %v3024, -0.4999988
  %v3026 = vmul.f32 %v3021, %v3025
  %v3027 = vadd.f32 1.0, %v3026
  %v3028 = vmul.f32 %v3019, %v3019
  %v3029 = vmul.f32 %v3028, -0.00019511016
  %v3030 = vadd.f32 %v3029, 0.008332121
  %v3031 = vmul.f32 %v3028, %v3030
  %v3032 = vadd.f32 %v3031, -0.16666654
  %v3033 = vmul.f32 %v3028, %v3032
  %v3034 = vadd.f32 %v3033, 1.0
  %v3035 = vmul.f32 %v3034, %v3019
  %vm3036 = vweird.f32 %v413
  %v3037 = vand.u32 %v3020, 3
  %vm3038 = vcmp.lt.s32.totalorder %v3037, 2
  %vm3039 = vcmp.eq.s32.totalorder %v3037, 0
  %v3040 = vxor.u32 %v3035, 2147483648
  %v3041 = vsel %vm3039, %v3027, %v3040
  %vm3042 = vcmp.eq.s32.totalorder %v3037, 2
  %v3043 = vxor.u32 %v3027, 2147483648
  %v3044 = vsel %vm3042, %v3043, %v3035
  %v3045 = vsel %vm3038, %v3041, %v3044
  %v3046 = vsel %vm3036, nan, %v3045
  %v3047 = vand.u32 2147483647, %v414
  %vm3048 = vcmp.le.f32.partialorder %v3047, 0.7853982
  %vm3049 = vcmp.lt.s32.totalorder %v414, 0
  %v3050 = vand.u32 %v414, 2139095040
  %v3051 = vshrl.u32 %v3050, 23
  %v3052 = vsub.s32 %v3051, 127
  %v3053 = vand.u32 2147483647, %v414
  %v3054 = vand.u32 %v3053, 8388607
  %v3055 = vor.u32 %v3054, 8388608
  %v3056 = vsub.s32 0, %v3055
  %v3057 = vadd.s32 %v3052, 1
  %vm3058 = vcmp.gt.s32.totalorder %v3057, 0
  %v3059 = vsel %vm3058, %v3057, 0
  %v3060 = vshrl.u32 %v3059, 5
  %v3061 = vand.u32 %v3059, 31
  %v3062 = vsub.s32 32, %v3061
  %v3063 = vshrl.u32 683565275, %v3062
  %v3064 = vshll.u32 683565275, %v3061
  %v3065 = vshrl.u32 2475754826, %v3062
  %v3066 = vor.u32 %v3064, %v3065
  %v3067 = vshll.u32 2475754826, %v3061
  %v3068 = vshrl.u32 2131351028, %v3062
  %v3069 = vor.u32 %v3067, %v3068
  %v3070 = vshll.u32 2131351028, %v3061
  %v3071 = vshrl.u32 2102212464, %v3062
  %v3072 = vor.u32 %v3070, %v3071
  %v3073 = vshll.u32 2102212464, %v3061
  %v3074 = vshrl.u32 920167782, %v3062
  %v3075 = vor.u32 %v3073, %v3074
  %v3076 = vshll.u32 920167782, %v3061
  %v3077 = vshrl.u32 1326507024, %v3062
  %v3078 = vor.u32 %v3076, %v3077
  %vm3079 = vcmp.lt.s32.totalorder %v3060, 1
  %vm3080 = vcmp.lt.s32.totalorder %v3060, 2
  %vm3081 = vcmp.lt.s32.totalorder %v3060, 3
  %vm3082 = vcmp.lt.s32.totalorder %v3060, 4
  %v3083 = vsel %vm3079, %v3063, %v3066
  %v3084 = vsel %vm3082, %v3072, 2102212464
  %v3085 = vsel %vm3081, %v3069, %v3084
  %v3086 = vsel %vm3080, %v3083, %v3085
  %v3087 = vsel %vm3079, %v3066, %v3069
  %v3088 = vsel %vm3082, %v3075, 920167782
  %v3089 = vsel %vm3081, %v3072, %v3088
  %v3090 = vsel %vm3080, %v3087, %v3089
  %v3091 = vsel %vm3079, %v3069, %v3072
  %v3092 = vsel %vm3082, %v3078, 1326507024
  %v3093 = vsel %vm3081, %v3075, %v3092
  %v3094 = vsel %vm3080, %v3091, %v3093
  %v3095 = vshll.u32 %v3055, 8
  %v3096 = vand.u32 %v3095, 65535
  %v3097 = vshrl.u32 %v3095, 16
  %v3098 = vand.u32 %v3094, 65535
  %v3099 = vshrl.u32 %v3094, 16
  %v3100 = vmul.u32 %v3096, %v3098
  %v3101 = vmul.u32 %v3096, %v3099
  %v3102 = vmul.u32 %v3097, %v3098
  %v3103 = vmul.u32 %v3097, %v3099
  %v3104 = vshll.u32 %v3101, 16
  %v3105 = vshrl.u32 %v3101, 16
  %v3106 = vshll.u32 %v3102, 16
  %v3107 = vshrl.u32 %v3102, 16
  %vm3108 = vc.u32 %v3100, %v3104
  %v3109 = vsel %vm3108, 1, 0
  %v3110 = vadd.s32 %v3100, %v3104
  %v3111 = vadd.s32 %v3103, %v3109
  %vm3112 = vc.u32 %v3110, %v3106
  %v3113 = vsel %vm3112, 1, 0
  %v3114 = vadd.s32 %v3110, %v3106
  %v3115 = vadd.s32 %v3111, %v3113
  %v3116 = vadd.s32 %v3115, %v3105
  %v3117 = vadd.s32 %v3116, %v3107
  %v3118 = vand.u32 %v3095, 65535
  %v3119 = vshrl.u32 %v3095, 16
  %v3120 = vand.u32 %v3090, 65535
  %v3121 = vshrl.u32 %v3090, 16
  %v3122 = vmul.u32 %v3118, %v3120
  %v3123 = vmul.u32 %v3118, %v3121
  %v3124 = vmul.u32 %v3119, %v3120
  %v3125 = vmul.u32 %v3119, %v3121
  %v3126 = vshll.u32 %v3123, 16
  %v3127 = vshrl.u32 %v3123, 16
  %v3128 = vshll.u32 %v3124, 16
  %v3129 = vshrl.u32 %v3124, 16
  %vm3130 = vc.u32 %v3122, %v3126
  %v3131 = vsel %vm3130, 1, 0
  %v3132 = vadd.s32 %v3122, %v3126
  %v3133 = vadd.s32 %v3125, %v3131
  %vm3134 = vc.u32 %v3132, %v3128
  %v3135 = vsel %vm3134, 1, 0
  %v3136 = vadd.s32 %v3132, %v3128
  %v3137 = vadd.s32 %v3133, %v3135
  %v3138 = vadd.s32 %v3137, %v3127
  %v3139 = vadd.s32 %v3138, %v3129
  %v3140 = vmul.u32 %v3095, %v3086
  %v3141 = vadd.s32 %v3117, %v3136
  %vm3142 = vc.u32 %v3117, %v3136
  %v3143 = vadd.s32 %v3139, 1
  %v3144 = vsel %vm3142, %v3143, %v3139
  %v3145 = vadd.s32 %v3140, %v3144
  %v3146 = vadd.s32 %v3145, 536870912
  %v3147 = vshrl.u32 %v3146, 30
  %v3148 = vshll.u32 %v3147, 30
  %v3149 = vsub.s32 %v3145, %v3148
  %vm3150 = vcmp.lt.s32.totalorder %v3149, 0
  %v3151 = vsub.s32 0, %v3149
  %v3152 = vsel %vm3150, %v3151, %v3149
  %v3153 = vclz %v3152
  %v3154 = vsub.s32 %v3153, 2
  %vm3155 = vcmp.gt.s32.totalorder 0, %v3154
  %v3156 = vsel %vm3155, 0, %v3154
  %v3157 = vsub.s32 32, %v3156
  %v3158 = vshll.u32 %v3149, %v3156
  %v3159 = vshrl.u32 %v3141, %v3157
  %v3160 = vor.u32 %v3158, %v3159
  %v3161 = vsub.s32 4294967266, %v3156
  %v3162 = vadd.s32 %v3161, 127
  %v3163 = vshll.u32 %v3162, 23
  %v3164 = vor.u32 4788187, %v3163
  %v3165 = vand.u32 2147483647, %v3164
  %v3167 = vcvt.s32.f32 %v3160
  %v3168 = vmul.f32 %v3167, %v3165
  %v3169 = vxor.u32 %v3168, 2147483648
  %v3170 = vsel %vm3049, %v3169, %v3168
  %v3171 = vsub.s32 4, %v3147
  %v3172 = vsel %vm3049, %v3171, %v3147
  %v3173 = vsel %vm3048, %v414, %v3170
  %v3174 = vsel %vm3048, 0, %v3172
  %v3175 = vmul.f32 %v3173, %v3173
  %v3176 = vmul.f32 %v3175, -0.001358992
  %v3177 = vadd.f32 %v3176, 0.041655596
  %v3178 = vmul.f32 %v3175, %v3177
  %v3179 = vadd.f32 %v3178, -0.4999988
  %v3180 = vmul.f32 %v3175, %v3179
  %v3181 = vadd.f32 1.0, %v3180
  %v3182 = vmul.f32 %v3173, %v3173
  %v3183 = vmul.f32 %v3182, -0.00019511016
  %v3184 = vadd.f32 %v3183, 0.008332121
  %v3185 = vmul.f32 %v3182, %v3184
  %v3186 = vadd.f32 %v3185, -0.16666654
  %v3187 = vmul.f32 %v3182, %v3186
  %v3188 = vadd.f32 %v3187, 1.0
  %v3189 = vmul.f32 %v3188, %v3173
  %vm3190 = vweird.f32 %v414
  %v3191 = vand.u32 %v3174, 3
  %vm3192 = vcmp.lt.s32.totalorder %v3191, 2
  %vm3193 = vcmp.eq.s32.totalorder %v3191, 0
  %v3194 = vxor.u32 %v3189, 2147483648
  %v3195 = vsel %vm3193, %v3181, %v3194
  %vm3196 = vcmp.eq.s32.totalorder %v3191, 2
  %v3197 = vxor.u32 %v3181, 2147483648
  %v3198 = vsel %vm3196, %v3197, %v3189
  %v3199 = vsel %vm3192, %v3195, %v3198
  %v3200 = vsel %vm3190, nan, %v3199
  %v3201 = vand.u32 2147483647, %v415
  %vm3202 = vcmp.le.f32.partialorder %v3201, 0.7853982
  %vm3203 = vcmp.lt.s32.totalorder %v415, 0
  %v3204 = vand.u32 %v415, 2139095040
  %v3205 = vshrl.u32 %v3204, 23
  %v3206 = vsub.s32 %v3205, 127
  %v3207 = vand.u32 2147483647, %v415
  %v3208 = vand.u32 %v3207, 8388607
  %v3209 = vor.u32 %v3208, 8388608
  %v3210 = vsub.s32 0, %v3209
  %v3211 = vadd.s32 %v3206, 1
  %vm3212 = vcmp.gt.s32.totalorder %v3211, 0
  %v3213 = vsel %vm3212, %v3211, 0
  %v3214 = vshrl.u32 %v3213, 5
  %v3215 = vand.u32 %v3213, 31
  %v3216 = vsub.s32 32, %v3215
  %v3217 = vshrl.u32 683565275, %v3216
  %v3218 = vshll.u32 683565275, %v3215
  %v3219 = vshrl.u32 2475754826, %v3216
  %v3220 = vor.u32 %v3218, %v3219
  %v3221 = vshll.u32 2475754826, %v3215
  %v3222 = vshrl.u32 2131351028, %v3216
  %v3223 = vor.u32 %v3221, %v3222
  %v3224 = vshll.u32 2131351028, %v3215
  %v3225 = vshrl.u32 2102212464, %v3216
  %v3226 = vor.u32 %v3224, %v3225
  %v3227 = vshll.u32 2102212464, %v3215
  %v3228 = vshrl.u32 920167782, %v3216
  %v3229 = vor.u32 %v3227, %v3228
  %v3230 = vshll.u32 920167782, %v3215
  %v3231 = vshrl.u32 1326507024, %v3216
  %v3232 = vor.u32 %v3230, %v3231
  %vm3233 = vcmp.lt.s32.totalorder %v3214, 1
  %vm3234 = vcmp.lt.s32.totalorder %v3214, 2
  %vm3235 = vcmp.lt.s32.totalorder %v3214, 3
  %vm3236 = vcmp.lt.s32.totalorder %v3214, 4
  %v3237 = vsel %vm3233, %v3217, %v3220
  %v3238 = vsel %vm3236, %v3226, 2102212464
  %v3239 = vsel %vm3235, %v3223, %v3238
  %v3240 = vsel %vm3234, %v3237, %v3239
  %v3241 = vsel %vm3233, %v3220, %v3223
  %v3242 = vsel %vm3236, %v3229, 920167782
  %v3243 = vsel %vm3235, %v3226, %v3242
  %v3244 = vsel %vm3234, %v3241, %v3243
  %v3245 = vsel %vm3233, %v3223, %v3226
  %v3246 = vsel %vm3236, %v3232, 1326507024
  %v3247 = vsel %vm3235, %v3229, %v3246
  %v3248 = vsel %vm3234, %v3245, %v3247
  %v3249 = vshll.u32 %v3209, 8
  %v3250 = vand.u32 %v3249, 65535
  %v3251 = vshrl.u32 %v3249, 16
  %v3252 = vand.u32 %v3248, 65535
  %v3253 = vshrl.u32 %v3248, 16
  %v3254 = vmul.u32 %v3250, %v3252
  %v3255 = vmul.u32 %v3250, %v3253
  %v3256 = vmul.u32 %v3251, %v3252
  %v3257 = vmul.u32 %v3251, %v3253
  %v3258 = vshll.u32 %v3255, 16
  %v3259 = vshrl.u32 %v3255, 16
  %v3260 = vshll.u32 %v3256, 16
  %v3261 = vshrl.u32 %v3256, 16
  %vm3262 = vc.u32 %v3254, %v3258
  %v3263 = vsel %vm3262, 1, 0
  %v3264 = vadd.s32 %v3254, %v3258
  %v3265 = vadd.s32 %v3257, %v3263
  %vm3266 = vc.u32 %v3264, %v3260
  %v3267 = vsel %vm3266, 1, 0
  %v3268 = vadd.s32 %v3264, %v3260
  %v3269 = vadd.s32 %v3265, %v3267
  %v3270 = vadd.s32 %v3269, %v3259
  %v3271 = vadd.s32 %v3270, %v3261
  %v3272 = vand.u32 %v3249, 65535
  %v3273 = vshrl.u32 %v3249, 16
  %v3274 = vand.u32 %v3244, 65535
  %v3275 = vshrl.u32 %v3244, 16
  %v3276 = vmul.u32 %v3272, %v3274
  %v3277 = vmul.u32 %v3272, %v3275
  %v3278 = vmul.u32 %v3273, %v3274
  %v3279 = vmul.u32 %v3273, %v3275
  %v3280 = vshll.u32 %v3277, 16
  %v3281 = vshrl.u32 %v3277, 16
  %v3282 = vshll.u32 %v3278, 16
  %v3283 = vshrl.u32 %v3278, 16
  %vm3284 = vc.u32 %v3276, %v3280
  %v3285 = vsel %vm3284, 1, 0
  %v3286 = vadd.s32 %v3276, %v3280
  %v3287 = vadd.s32 %v3279, %v3285
  %vm3288 = vc.u32 %v3286, %v3282
  %v3289 = vsel %vm3288, 1, 0
  %v3290 = vadd.s32 %v3286, %v3282
  %v3291 = vadd.s32 %v3287, %v3289
  %v3292 = vadd.s32 %v3291, %v3281
  %v3293 = vadd.s32 %v3292, %v3283
  %v3294 = vmul.u32 %v3249, %v3240
  %v3295 = vadd.s32 %v3271, %v3290
  %vm3296 = vc.u32 %v3271, %v3290
  %v3297 = vadd.s32 %v3293, 1
  %v3298 = vsel %vm3296, %v3297, %v3293
  %v3299 = vadd.s32 %v3294, %v3298
  %v3300 = vadd.s32 %v3299, 536870912
  %v3301 = vshrl.u32 %v3300, 30
  %v3302 = vshll.u32 %v3301, 30
  %v3303 = vsub.s32 %v3299, %v3302
  %vm3304 = vcmp.lt.s32.totalorder %v3303, 0
  %v3305 = vsub.s32 0, %v3303
  %v3306 = vsel %vm3304, %v3305, %v3303
  %v3307 = vclz %v3306
  %v3308 = vsub.s32 %v3307, 2
  %vm3309 = vcmp.gt.s32.totalorder 0, %v3308
  %v3310 = vsel %vm3309, 0, %v3308
  %v3311 = vsub.s32 32, %v3310
  %v3312 = vshll.u32 %v3303, %v3310
  %v3313 = vshrl.u32 %v3295, %v3311
  %v3314 = vor.u32 %v3312, %v3313
  %v3315 = vsub.s32 4294967266, %v3310
  %v3316 = vadd.s32 %v3315, 127
  %v3317 = vshll.u32 %v3316, 23
  %v3318 = vor.u32 4788187, %v3317
  %v3319 = vand.u32 2147483647, %v3318
  %v3321 = vcvt.s32.f32 %v3314
  %v3322 = vmul.f32 %v3321, %v3319
  %v3323 = vxor.u32 %v3322, 2147483648
  %v3324 = vsel %vm3203, %v3323, %v3322
  %v3325 = vsub.s32 4, %v3301
  %v3326 = vsel %vm3203, %v3325, %v3301
  %v3327 = vsel %vm3202, %v415, %v3324
  %v3328 = vsel %vm3202, 0, %v3326
  %v3329 = vmul.f32 %v3327, %v3327
  %v3330 = vmul.f32 %v3329, -0.001358992
  %v3331 = vadd.f32 %v3330, 0.041655596
  %v3332 = vmul.f32 %v3329, %v3331
  %v3333 = vadd.f32 %v3332, -0.4999988
  %v3334 = vmul.f32 %v3329, %v3333
  %v3335 = vadd.f32 1.0, %v3334
  %v3336 = vmul.f32 %v3327, %v3327
  %v3337 = vmul.f32 %v3336, -0.00019511016
  %v3338 = vadd.f32 %v3337, 0.008332121
  %v3339 = vmul.f32 %v3336, %v3338
  %v3340 = vadd.f32 %v3339, -0.16666654
  %v3341 = vmul.f32 %v3336, %v3340
  %v3342 = vadd.f32 %v3341, 1.0
  %v3343 = vmul.f32 %v3342, %v3327
  %vm3344 = vweird.f32 %v415
  %v3345 = vand.u32 %v3328, 3
  %vm3346 = vcmp.lt.s32.totalorder %v3345, 2
  %vm3347 = vcmp.eq.s32.totalorder %v3345, 0
  %v3348 = vxor.u32 %v3343, 2147483648
  %v3349 = vsel %vm3347, %v3335, %v3348
  %vm3350 = vcmp.eq.s32.totalorder %v3345, 2
  %v3351 = vxor.u32 %v3335, 2147483648
  %v3352 = vsel %vm3350, %v3351, %v3343
  %v3353 = vsel %vm3346, %v3349, %v3352
  %v3354 = vsel %vm3344, nan, %v3353
  %v3355 = vand.u32 2147483647, %v416
  %vm3356 = vcmp.le.f32.partialorder %v3355, 0.7853982
  %vm3357 = vcmp.lt.s32.totalorder %v416, 0
  %v3358 = vand.u32 %v416, 2139095040
  %v3359 = vshrl.u32 %v3358, 23
  %v3360 = vsub.s32 %v3359, 127
  %v3361 = vand.u32 2147483647, %v416
  %v3362 = vand.u32 %v3361, 8388607
  %v3363 = vor.u32 %v3362, 8388608
  %v3364 = vsub.s32 0, %v3363
  %v3365 = vadd.s32 %v3360, 1
  %vm3366 = vcmp.gt.s32.totalorder %v3365, 0
  %v3367 = vsel %vm3366, %v3365, 0
  %v3368 = vshrl.u32 %v3367, 5
  %v3369 = vand.u32 %v3367, 31
  %v3370 = vsub.s32 32, %v3369
  %v3371 = vshrl.u32 683565275, %v3370
  %v3372 = vshll.u32 683565275, %v3369
  %v3373 = vshrl.u32 2475754826, %v3370
  %v3374 = vor.u32 %v3372, %v3373
  %v3375 = vshll.u32 2475754826, %v3369
  %v3376 = vshrl.u32 2131351028, %v3370
  %v3377 = vor.u32 %v3375, %v3376
  %v3378 = vshll.u32 2131351028, %v3369
  %v3379 = vshrl.u32 2102212464, %v3370
  %v3380 = vor.u32 %v3378, %v3379
  %v3381 = vshll.u32 2102212464, %v3369
  %v3382 = vshrl.u32 920167782, %v3370
  %v3383 = vor.u32 %v3381, %v3382
  %v3384 = vshll.u32 920167782, %v3369
  %v3385 = vshrl.u32 1326507024, %v3370
  %v3386 = vor.u32 %v3384, %v3385
  %vm3387 = vcmp.lt.s32.totalorder %v3368, 1
  %vm3388 = vcmp.lt.s32.totalorder %v3368, 2
  %vm3389 = vcmp.lt.s32.totalorder %v3368, 3
  %vm3390 = vcmp.lt.s32.totalorder %v3368, 4
  %v3391 = vsel %vm3387, %v3371, %v3374
  %v3392 = vsel %vm3390, %v3380, 2102212464
  %v3393 = vsel %vm3389, %v3377, %v3392
  %v3394 = vsel %vm3388, %v3391, %v3393
  %v3395 = vsel %vm3387, %v3374, %v3377
  %v3396 = vsel %vm3390, %v3383, 920167782
  %v3397 = vsel %vm3389, %v3380, %v3396
  %v3398 = vsel %vm3388, %v3395, %v3397
  %v3399 = vsel %vm3387, %v3377, %v3380
  %v3400 = vsel %vm3390, %v3386, 1326507024
  %v3401 = vsel %vm3389, %v3383, %v3400
  %v3402 = vsel %vm3388, %v3399, %v3401
  %v3403 = vshll.u32 %v3363, 8
  %v3404 = vand.u32 %v3403, 65535
  %v3405 = vshrl.u32 %v3403, 16
  %v3406 = vand.u32 %v3402, 65535
  %v3407 = vshrl.u32 %v3402, 16
  %v3408 = vmul.u32 %v3404, %v3406
  %v3409 = vmul.u32 %v3404, %v3407
  %v3410 = vmul.u32 %v3405, %v3406
  %v3411 = vmul.u32 %v3405, %v3407
  %v3412 = vshll.u32 %v3409, 16
  %v3413 = vshrl.u32 %v3409, 16
  %v3414 = vshll.u32 %v3410, 16
  %v3415 = vshrl.u32 %v3410, 16
  %vm3416 = vc.u32 %v3408, %v3412
  %v3417 = vsel %vm3416, 1, 0
  %v3418 = vadd.s32 %v3408, %v3412
  %v3419 = vadd.s32 %v3411, %v3417
  %vm3420 = vc.u32 %v3418, %v3414
  %v3421 = vsel %vm3420, 1, 0
  %v3422 = vadd.s32 %v3418, %v3414
  %v3423 = vadd.s32 %v3419, %v3421
  %v3424 = vadd.s32 %v3423, %v3413
  %v3425 = vadd.s32 %v3424, %v3415
  %v3426 = vand.u32 %v3403, 65535
  %v3427 = vshrl.u32 %v3403, 16
  %v3428 = vand.u32 %v3398, 65535
  %v3429 = vshrl.u32 %v3398, 16
  %v3430 = vmul.u32 %v3426, %v3428
  %v3431 = vmul.u32 %v3426, %v3429
  %v3432 = vmul.u32 %v3427, %v3428
  %v3433 = vmul.u32 %v3427, %v3429
  %v3434 = vshll.u32 %v3431, 16
  %v3435 = vshrl.u32 %v3431, 16
  %v3436 = vshll.u32 %v3432, 16
  %v3437 = vshrl.u32 %v3432, 16
  %vm3438 = vc.u32 %v3430, %v3434
  %v3439 = vsel %vm3438, 1, 0
  %v3440 = vadd.s32 %v3430, %v3434
  %v3441 = vadd.s32 %v3433, %v3439
  %vm3442 = vc.u32 %v3440, %v3436
  %v3443 = vsel %vm3442, 1, 0
  %v3444 = vadd.s32 %v3440, %v3436
  %v3445 = vadd.s32 %v3441, %v3443
  %v3446 = vadd.s32 %v3445, %v3435
  %v3447 = vadd.s32 %v3446, %v3437
  %v3448 = vmul.u32 %v3403, %v3394
  %v3449 = vadd.s32 %v3425, %v3444
  %vm3450 = vc.u32 %v3425, %v3444
  %v3451 = vadd.s32 %v3447, 1
  %v3452 = vsel %vm3450, %v3451, %v3447
  %v3453 = vadd.s32 %v3448, %v3452
  %v3454 = vadd.s32 %v3453, 536870912
  %v3455 = vshrl.u32 %v3454, 30
  %v3456 = vshll.u32 %v3455, 30
  %v3457 = vsub.s32 %v3453, %v3456
  %vm3458 = vcmp.lt.s32.totalorder %v3457, 0
  %v3459 = vsub.s32 0, %v3457
  %v3460 = vsel %vm3458, %v3459, %v3457
  %v3461 = vclz %v3460
  %v3462 = vsub.s32 %v3461, 2
  %vm3463 = vcmp.gt.s32.totalorder 0, %v3462
  %v3464 = vsel %vm3463, 0, %v3462
  %v3465 = vsub.s32 32, %v3464
  %v3466 = vshll.u32 %v3457, %v3464
  %v3467 = vshrl.u32 %v3449, %v3465
  %v3468 = vor.u32 %v3466, %v3467
  %v3469 = vsub.s32 4294967266, %v3464
  %v3470 = vadd.s32 %v3469, 127
  %v3471 = vshll.u32 %v3470, 23
  %v3472 = vor.u32 4788187, %v3471
  %v3473 = vand.u32 2147483647, %v3472
  %v3475 = vcvt.s32.f32 %v3468
  %v3476 = vmul.f32 %v3475, %v3473
  %v3477 = vxor.u32 %v3476, 2147483648
  %v3478 = vsel %vm3357, %v3477, %v3476
  %v3479 = vsub.s32 4, %v3455
  %v3480 = vsel %vm3357, %v3479, %v3455
  %v3481 = vsel %vm3356, %v416, %v3478
  %v3482 = vsel %vm3356, 0, %v3480
  %v3483 = vmul.f32 %v3481, %v3481
  %v3484 = vmul.f32 %v3483, -0.001358992
  %v3485 = vadd.f32 %v3484, 0.041655596
  %v3486 = vmul.f32 %v3483, %v3485
  %v3487 = vadd.f32 %v3486, -0.4999988
  %v3488 = vmul.f32 %v3483, %v3487
  %v3489 = vadd.f32 1.0, %v3488
  %v3490 = vmul.f32 %v3481, %v3481
  %v3491 = vmul.f32 %v3490, -0.00019511016
  %v3492 = vadd.f32 %v3491, 0.008332121
  %v3493 = vmul.f32 %v3490, %v3492
  %v3494 = vadd.f32 %v3493, -0.16666654
  %v3495 = vmul.f32 %v3490, %v3494
  %v3496 = vadd.f32 %v3495, 1.0
  %v3497 = vmul.f32 %v3496, %v3481
  %vm3498 = vweird.f32 %v416
  %v3499 = vand.u32 %v3482, 3
  %vm3500 = vcmp.lt.s32.totalorder %v3499, 2
  %vm3501 = vcmp.eq.s32.totalorder %v3499, 0
  %v3502 = vxor.u32 %v3497, 2147483648
  %v3503 = vsel %vm3501, %v3489, %v3502
  %vm3504 = vcmp.eq.s32.totalorder %v3499, 2
  %v3505 = vxor.u32 %v3489, 2147483648
  %v3506 = vsel %vm3504, %v3505, %v3497
  %v3507 = vsel %vm3500, %v3503, %v3506
  %v3508 = vsel %vm3498, nan, %v3507
  %v3509 = vand.u32 2147483647, %v417
  %vm3510 = vcmp.le.f32.partialorder %v3509, 0.7853982
  %vm3511 = vcmp.lt.s32.totalorder %v417, 0
  %v3512 = vand.u32 %v417, 2139095040
  %v3513 = vshrl.u32 %v3512, 23
  %v3514 = vsub.s32 %v3513, 127
  %v3515 = vand.u32 2147483647, %v417
  %v3516 = vand.u32 %v3515, 8388607
  %v3517 = vor.u32 %v3516, 8388608
  %v3518 = vsub.s32 0, %v3517
  %v3519 = vadd.s32 %v3514, 1
  %vm3520 = vcmp.gt.s32.totalorder %v3519, 0
  %v3521 = vsel %vm3520, %v3519, 0
  %v3522 = vshrl.u32 %v3521, 5
  %v3523 = vand.u32 %v3521, 31
  %v3524 = vsub.s32 32, %v3523
  %v3525 = vshrl.u32 683565275, %v3524
  %v3526 = vshll.u32 683565275, %v3523
  %v3527 = vshrl.u32 2475754826, %v3524
  %v3528 = vor.u32 %v3526, %v3527
  %v3529 = vshll.u32 2475754826, %v3523
  %v3530 = vshrl.u32 2131351028, %v3524
  %v3531 = vor.u32 %v3529, %v3530
  %v3532 = vshll.u32 2131351028, %v3523
  %v3533 = vshrl.u32 2102212464, %v3524
  %v3534 = vor.u32 %v3532, %v3533
  %v3535 = vshll.u32 2102212464, %v3523
  %v3536 = vshrl.u32 920167782, %v3524
  %v3537 = vor.u32 %v3535, %v3536
  %v3538 = vshll.u32 920167782, %v3523
  %v3539 = vshrl.u32 1326507024, %v3524
  %v3540 = vor.u32 %v3538, %v3539
  %vm3541 = vcmp.lt.s32.totalorder %v3522, 1
  %vm3542 = vcmp.lt.s32.totalorder %v3522, 2
  %vm3543 = vcmp.lt.s32.totalorder %v3522, 3
  %vm3544 = vcmp.lt.s32.totalorder %v3522, 4
  %v3545 = vsel %vm3541, %v3525, %v3528
  %v3546 = vsel %vm3544, %v3534, 2102212464
  %v3547 = vsel %vm3543, %v3531, %v3546
  %v3548 = vsel %vm3542, %v3545, %v3547
  %v3549 = vsel %vm3541, %v3528, %v3531
  %v3550 = vsel %vm3544, %v3537, 920167782
  %v3551 = vsel %vm3543, %v3534, %v3550
  %v3552 = vsel %vm3542, %v3549, %v3551
  %v3553 = vsel %vm3541, %v3531, %v3534
  %v3554 = vsel %vm3544, %v3540, 1326507024
  %v3555 = vsel %vm3543, %v3537, %v3554
  %v3556 = vsel %vm3542, %v3553, %v3555
  %v3557 = vshll.u32 %v3517, 8
  %v3558 = vand.u32 %v3557, 65535
  %v3559 = vshrl.u32 %v3557, 16
  %v3560 = vand.u32 %v3556, 65535
  %v3561 = vshrl.u32 %v3556, 16
  %v3562 = vmul.u32 %v3558, %v3560
  %v3563 = vmul.u32 %v3558, %v3561
  %v3564 = vmul.u32 %v3559, %v3560
  %v3565 = vmul.u32 %v3559, %v3561
  %v3566 = vshll.u32 %v3563, 16
  %v3567 = vshrl.u32 %v3563, 16
  %v3568 = vshll.u32 %v3564, 16
  %v3569 = vshrl.u32 %v3564, 16
  %vm3570 = vc.u32 %v3562, %v3566
  %v3571 = vsel %vm3570, 1, 0
  %v3572 = vadd.s32 %v3562, %v3566
  %v3573 = vadd.s32 %v3565, %v3571
  %vm3574 = vc.u32 %v3572, %v3568
  %v3575 = vsel %vm3574, 1, 0
  %v3576 = vadd.s32 %v3572, %v3568
  %v3577 = vadd.s32 %v3573, %v3575
  %v3578 = vadd.s32 %v3577, %v3567
  %v3579 = vadd.s32 %v3578, %v3569
  %v3580 = vand.u32 %v3557, 65535
  %v3581 = vshrl.u32 %v3557, 16
  %v3582 = vand.u32 %v3552, 65535
  %v3583 = vshrl.u32 %v3552, 16
  %v3584 = vmul.u32 %v3580, %v3582
  %v3585 = vmul.u32 %v3580, %v3583
  %v3586 = vmul.u32 %v3581, %v3582
  %v3587 = vmul.u32 %v3581, %v3583
  %v3588 = vshll.u32 %v3585, 16
  %v3589 = vshrl.u32 %v3585, 16
  %v3590 = vshll.u32 %v3586, 16
  %v3591 = vshrl.u32 %v3586, 16
  %vm3592 = vc.u32 %v3584, %v3588
  %v3593 = vsel %vm3592, 1, 0
  %v3594 = vadd.s32 %v3584, %v3588
  %v3595 = vadd.s32 %v3587, %v3593
  %vm3596 = vc.u32 %v3594, %v3590
  %v3597 = vsel %vm3596, 1, 0
  %v3598 = vadd.s32 %v3594, %v3590
  %v3599 = vadd.s32 %v3595, %v3597
  %v3600 = vadd.s32 %v3599, %v3589
  %v3601 = vadd.s32 %v3600, %v3591
  %v3602 = vmul.u32 %v3557, %v3548
  %v3603 = vadd.s32 %v3579, %v3598
  %vm3604 = vc.u32 %v3579, %v3598
  %v3605 = vadd.s32 %v3601, 1
  %v3606 = vsel %vm3604, %v3605, %v3601
  %v3607 = vadd.s32 %v3602, %v3606
  %v3608 = vadd.s32 %v3607, 536870912
  %v3609 = vshrl.u32 %v3608, 30
  %v3610 = vshll.u32 %v3609, 30
  %v3611 = vsub.s32 %v3607, %v3610
  %vm3612 = vcmp.lt.s32.totalorder %v3611, 0
  %v3613 = vsub.s32 0, %v3611
  %v3614 = vsel %vm3612, %v3613, %v3611
  %v3615 = vclz %v3614
  %v3616 = vsub.s32 %v3615, 2
  %vm3617 = vcmp.gt.s32.totalorder 0, %v3616
  %v3618 = vsel %vm3617, 0, %v3616
  %v3619 = vsub.s32 32, %v3618
  %v3620 = vshll.u32 %v3611, %v3618
  %v3621 = vshrl.u32 %v3603, %v3619
  %v3622 = vor.u32 %v3620, %v3621
  %v3623 = vsub.s32 4294967266, %v3618
  %v3624 = vadd.s32 %v3623, 127
  %v3625 = vshll.u32 %v3624, 23
  %v3626 = vor.u32 4788187, %v3625
  %v3627 = vand.u32 2147483647, %v3626
  %v3629 = vcvt.s32.f32 %v3622
  %v3630 = vmul.f32 %v3629, %v3627
  %v3631 = vxor.u32 %v3630, 2147483648
  %v3632 = vsel %vm3511, %v3631, %v3630
  %v3633 = vsub.s32 4, %v3609
  %v3634 = vsel %vm3511, %v3633, %v3609
  %v3635 = vsel %vm3510, %v417, %v3632
  %v3636 = vsel %vm3510, 0, %v3634
  %v3637 = vmul.f32 %v3635, %v3635
  %v3638 = vmul.f32 %v3637, -0.001358992
  %v3639 = vadd.f32 %v3638, 0.041655596
  %v3640 = vmul.f32 %v3637, %v3639
  %v3641 = vadd.f32 %v3640, -0.4999988
  %v3642 = vmul.f32 %v3637, %v3641
  %v3643 = vadd.f32 1.0, %v3642
  %v3644 = vmul.f32 %v3635, %v3635
  %v3645 = vmul.f32 %v3644, -0.00019511016
  %v3646 = vadd.f32 %v3645, 0.008332121
  %v3647 = vmul.f32 %v3644, %v3646
  %v3648 = vadd.f32 %v3647, -0.16666654
  %v3649 = vmul.f32 %v3644, %v3648
  %v3650 = vadd.f32 %v3649, 1.0
  %v3651 = vmul.f32 %v3650, %v3635
  %vm3652 = vweird.f32 %v417
  %v3653 = vand.u32 %v3636, 3
  %vm3654 = vcmp.lt.s32.totalorder %v3653, 2
  %vm3655 = vcmp.eq.s32.totalorder %v3653, 0
  %v3656 = vxor.u32 %v3651, 2147483648
  %v3657 = vsel %vm3655, %v3643, %v3656
  %vm3658 = vcmp.eq.s32.totalorder %v3653, 2
  %v3659 = vxor.u32 %v3643, 2147483648
  %v3660 = vsel %vm3658, %v3659, %v3651
  %v3661 = vsel %vm3654, %v3657, %v3660
  %v3662 = vsel %vm3652, nan, %v3661
  %v3663 = vand.u32 2147483647, %v418
  %vm3664 = vcmp.le.f32.partialorder %v3663, 0.7853982
  %vm3665 = vcmp.lt.s32.totalorder %v418, 0
  %v3666 = vand.u32 %v418, 2139095040
  %v3667 = vshrl.u32 %v3666, 23
  %v3668 = vsub.s32 %v3667, 127
  %v3669 = vand.u32 2147483647, %v418
  %v3670 = vand.u32 %v3669, 8388607
  %v3671 = vor.u32 %v3670, 8388608
  %v3672 = vsub.s32 0, %v3671
  %v3673 = vadd.s32 %v3668, 1
  %vm3674 = vcmp.gt.s32.totalorder %v3673, 0
  %v3675 = vsel %vm3674, %v3673, 0
  %v3676 = vshrl.u32 %v3675, 5
  %v3677 = vand.u32 %v3675, 31
  %v3678 = vsub.s32 32, %v3677
  %v3679 = vshrl.u32 683565275, %v3678
  %v3680 = vshll.u32 683565275, %v3677
  %v3681 = vshrl.u32 2475754826, %v3678
  %v3682 = vor.u32 %v3680, %v3681
  %v3683 = vshll.u32 2475754826, %v3677
  %v3684 = vshrl.u32 2131351028, %v3678
  %v3685 = vor.u32 %v3683, %v3684
  %v3686 = vshll.u32 2131351028, %v3677
  %v3687 = vshrl.u32 2102212464, %v3678
  %v3688 = vor.u32 %v3686, %v3687
  %v3689 = vshll.u32 2102212464, %v3677
  %v3690 = vshrl.u32 920167782, %v3678
  %v3691 = vor.u32 %v3689, %v3690
  %v3692 = vshll.u32 920167782, %v3677
  %v3693 = vshrl.u32 1326507024, %v3678
  %v3694 = vor.u32 %v3692, %v3693
  %vm3695 = vcmp.lt.s32.totalorder %v3676, 1
  %vm3696 = vcmp.lt.s32.totalorder %v3676, 2
  %vm3697 = vcmp.lt.s32.totalorder %v3676, 3
  %vm3698 = vcmp.lt.s32.totalorder %v3676, 4
  %v3699 = vsel %vm3695, %v3679, %v3682
  %v3700 = vsel %vm3698, %v3688, 2102212464
  %v3701 = vsel %vm3697, %v3685, %v3700
  %v3702 = vsel %vm3696, %v3699, %v3701
  %v3703 = vsel %vm3695, %v3682, %v3685
  %v3704 = vsel %vm3698, %v3691, 920167782
  %v3705 = vsel %vm3697, %v3688, %v3704
  %v3706 = vsel %vm3696, %v3703, %v3705
  %v3707 = vsel %vm3695, %v3685, %v3688
  %v3708 = vsel %vm3698, %v3694, 1326507024
  %v3709 = vsel %vm3697, %v3691, %v3708
  %v3710 = vsel %vm3696, %v3707, %v3709
  %v3711 = vshll.u32 %v3671, 8
  %v3712 = vand.u32 %v3711, 65535
  %v3713 = vshrl.u32 %v3711, 16
  %v3714 = vand.u32 %v3710, 65535
  %v3715 = vshrl.u32 %v3710, 16
  %v3716 = vmul.u32 %v3712, %v3714
  %v3717 = vmul.u32 %v3712, %v3715
  %v3718 = vmul.u32 %v3713, %v3714
  %v3719 = vmul.u32 %v3713, %v3715
  %v3720 = vshll.u32 %v3717, 16
  %v3721 = vshrl.u32 %v3717, 16
  %v3722 = vshll.u32 %v3718, 16
  %v3723 = vshrl.u32 %v3718, 16
  %vm3724 = vc.u32 %v3716, %v3720
  %v3725 = vsel %vm3724, 1, 0
  %v3726 = vadd.s32 %v3716, %v3720
  %v3727 = vadd.s32 %v3719, %v3725
  %vm3728 = vc.u32 %v3726, %v3722
  %v3729 = vsel %vm3728, 1, 0
  %v3730 = vadd.s32 %v3726, %v3722
  %v3731 = vadd.s32 %v3727, %v3729
  %v3732 = vadd.s32 %v3731, %v3721
  %v3733 = vadd.s32 %v3732, %v3723
  %v3734 = vand.u32 %v3711, 65535
  %v3735 = vshrl.u32 %v3711, 16
  %v3736 = vand.u32 %v3706, 65535
  %v3737 = vshrl.u32 %v3706, 16
  %v3738 = vmul.u32 %v3734, %v3736
  %v3739 = vmul.u32 %v3734, %v3737
  %v3740 = vmul.u32 %v3735, %v3736
  %v3741 = vmul.u32 %v3735, %v3737
  %v3742 = vshll.u32 %v3739, 16
  %v3743 = vshrl.u32 %v3739, 16
  %v3744 = vshll.u32 %v3740, 16
  %v3745 = vshrl.u32 %v3740, 16
  %vm3746 = vc.u32 %v3738, %v3742
  %v3747 = vsel %vm3746, 1, 0
  %v3748 = vadd.s32 %v3738, %v3742
  %v3749 = vadd.s32 %v3741, %v3747
  %vm3750 = vc.u32 %v3748, %v3744
  %v3751 = vsel %vm3750, 1, 0
  %v3752 = vadd.s32 %v3748, %v3744
  %v3753 = vadd.s32 %v3749, %v3751
  %v3754 = vadd.s32 %v3753, %v3743
  %v3755 = vadd.s32 %v3754, %v3745
  %v3756 = vmul.u32 %v3711, %v3702
  %v3757 = vadd.s32 %v3733, %v3752
  %vm3758 = vc.u32 %v3733, %v3752
  %v3759 = vadd.s32 %v3755, 1
  %v3760 = vsel %vm3758, %v3759, %v3755
  %v3761 = vadd.s32 %v3756, %v3760
  %v3762 = vadd.s32 %v3761, 536870912
  %v3763 = vshrl.u32 %v3762, 30
  %v3764 = vshll.u32 %v3763, 30
  %v3765 = vsub.s32 %v3761, %v3764
  %vm3766 = vcmp.lt.s32.totalorder %v3765, 0
  %v3767 = vsub.s32 0, %v3765
  %v3768 = vsel %vm3766, %v3767, %v3765
  %v3769 = vclz %v3768
  %v3770 = vsub.s32 %v3769, 2
  %vm3771 = vcmp.gt.s32.totalorder 0, %v3770
  %v3772 = vsel %vm3771, 0, %v3770
  %v3773 = vsub.s32 32, %v3772
  %v3774 = vshll.u32 %v3765, %v3772
  %v3775 = vshrl.u32 %v3757, %v3773
  %v3776 = vor.u32 %v3774, %v3775
  %v3777 = vsub.s32 4294967266, %v3772
  %v3778 = vadd.s32 %v3777, 127
  %v3779 = vshll.u32 %v3778, 23
  %v3780 = vor.u32 4788187, %v3779
  %v3781 = vand.u32 2147483647, %v3780
  %v3783 = vcvt.s32.f32 %v3776
  %v3784 = vmul.f32 %v3783, %v3781
  %v3785 = vxor.u32 %v3784, 2147483648
  %v3786 = vsel %vm3665, %v3785, %v3784
  %v3787 = vsub.s32 4, %v3763
  %v3788 = vsel %vm3665, %v3787, %v3763
  %v3789 = vsel %vm3664, %v418, %v3786
  %v3790 = vsel %vm3664, 0, %v3788
  %v3791 = vmul.f32 %v3789, %v3789
  %v3792 = vmul.f32 %v3791, -0.001358992
  %v3793 = vadd.f32 %v3792, 0.041655596
  %v3794 = vmul.f32 %v3791, %v3793
  %v3795 = vadd.f32 %v3794, -0.4999988
  %v3796 = vmul.f32 %v3791, %v3795
  %v3797 = vadd.f32 1.0, %v3796
  %v3798 = vmul.f32 %v3789, %v3789
  %v3799 = vmul.f32 %v3798, -0.00019511016
  %v3800 = vadd.f32 %v3799, 0.008332121
  %v3801 = vmul.f32 %v3798, %v3800
  %v3802 = vadd.f32 %v3801, -0.16666654
  %v3803 = vmul.f32 %v3798, %v3802
  %v3804 = vadd.f32 %v3803, 1.0
  %v3805 = vmul.f32 %v3804, %v3789
  %vm3806 = vweird.f32 %v418
  %v3807 = vand.u32 %v3790, 3
  %vm3808 = vcmp.lt.s32.totalorder %v3807, 2
  %vm3809 = vcmp.eq.s32.totalorder %v3807, 0
  %v3810 = vxor.u32 %v3805, 2147483648
  %v3811 = vsel %vm3809, %v3797, %v3810
  %vm3812 = vcmp.eq.s32.totalorder %v3807, 2
  %v3813 = vxor.u32 %v3797, 2147483648
  %v3814 = vsel %vm3812, %v3813, %v3805
  %v3815 = vsel %vm3808, %v3811, %v3814
  %v3816 = vsel %vm3806, nan, %v3815
  %v3817 = vand.u32 2147483647, %v419
  %vm3818 = vcmp.le.f32.partialorder %v3817, 0.7853982
  %vm3819 = vcmp.lt.s32.totalorder %v419, 0
  %v3820 = vand.u32 %v419, 2139095040
  %v3821 = vshrl.u32 %v3820, 23
  %v3822 = vsub.s32 %v3821, 127
  %v3823 = vand.u32 2147483647, %v419
  %v3824 = vand.u32 %v3823, 8388607
  %v3825 = vor.u32 %v3824, 8388608
  %v3826 = vsub.s32 0, %v3825
  %v3827 = vadd.s32 %v3822, 1
  %vm3828 = vcmp.gt.s32.totalorder %v3827, 0
  %v3829 = vsel %vm3828, %v3827, 0
  %v3830 = vshrl.u32 %v3829, 5
  %v3831 = vand.u32 %v3829, 31
  %v3832 = vsub.s32 32, %v3831
  %v3833 = vshrl.u32 683565275, %v3832
  %v3834 = vshll.u32 683565275, %v3831
  %v3835 = vshrl.u32 2475754826, %v3832
  %v3836 = vor.u32 %v3834, %v3835
  %v3837 = vshll.u32 2475754826, %v3831
  %v3838 = vshrl.u32 2131351028, %v3832
  %v3839 = vor.u32 %v3837, %v3838
  %v3840 = vshll.u32 2131351028, %v3831
  %v3841 = vshrl.u32 2102212464, %v3832
  %v3842 = vor.u32 %v3840, %v3841
  %v3843 = vshll.u32 2102212464, %v3831
  %v3844 = vshrl.u32 920167782, %v3832
  %v3845 = vor.u32 %v3843, %v3844
  %v3846 = vshll.u32 920167782, %v3831
  %v3847 = vshrl.u32 1326507024, %v3832
  %v3848 = vor.u32 %v3846, %v3847
  %vm3849 = vcmp.lt.s32.totalorder %v3830, 1
  %vm3850 = vcmp.lt.s32.totalorder %v3830, 2
  %vm3851 = vcmp.lt.s32.totalorder %v3830, 3
  %vm3852 = vcmp.lt.s32.totalorder %v3830, 4
  %v3853 = vsel %vm3849, %v3833, %v3836
  %v3854 = vsel %vm3852, %v3842, 2102212464
  %v3855 = vsel %vm3851, %v3839, %v3854
  %v3856 = vsel %vm3850, %v3853, %v3855
  %v3857 = vsel %vm3849, %v3836, %v3839
  %v3858 = vsel %vm3852, %v3845, 920167782
  %v3859 = vsel %vm3851, %v3842, %v3858
  %v3860 = vsel %vm3850, %v3857, %v3859
  %v3861 = vsel %vm3849, %v3839, %v3842
  %v3862 = vsel %vm3852, %v3848, 1326507024
  %v3863 = vsel %vm3851, %v3845, %v3862
  %v3864 = vsel %vm3850, %v3861, %v3863
  %v3865 = vshll.u32 %v3825, 8
  %v3866 = vand.u32 %v3865, 65535
  %v3867 = vshrl.u32 %v3865, 16
  %v3868 = vand.u32 %v3864, 65535
  %v3869 = vshrl.u32 %v3864, 16
  %v3870 = vmul.u32 %v3866, %v3868
  %v3871 = vmul.u32 %v3866, %v3869
  %v3872 = vmul.u32 %v3867, %v3868
  %v3873 = vmul.u32 %v3867, %v3869
  %v3874 = vshll.u32 %v3871, 16
  %v3875 = vshrl.u32 %v3871, 16
  %v3876 = vshll.u32 %v3872, 16
  %v3877 = vshrl.u32 %v3872, 16
  %vm3878 = vc.u32 %v3870, %v3874
  %v3879 = vsel %vm3878, 1, 0
  %v3880 = vadd.s32 %v3870, %v3874
  %v3881 = vadd.s32 %v3873, %v3879
  %vm3882 = vc.u32 %v3880, %v3876
  %v3883 = vsel %vm3882, 1, 0
  %v3884 = vadd.s32 %v3880, %v3876
  %v3885 = vadd.s32 %v3881, %v3883
  %v3886 = vadd.s32 %v3885, %v3875
  %v3887 = vadd.s32 %v3886, %v3877
  %v3888 = vand.u32 %v3865, 65535
  %v3889 = vshrl.u32 %v3865, 16
  %v3890 = vand.u32 %v3860, 65535
  %v3891 = vshrl.u32 %v3860, 16
  %v3892 = vmul.u32 %v3888, %v3890
  %v3893 = vmul.u32 %v3888, %v3891
  %v3894 = vmul.u32 %v3889, %v3890
  %v3895 = vmul.u32 %v3889, %v3891
  %v3896 = vshll.u32 %v3893, 16
  %v3897 = vshrl.u32 %v3893, 16
  %v3898 = vshll.u32 %v3894, 16
  %v3899 = vshrl.u32 %v3894, 16
  %vm3900 = vc.u32 %v3892, %v3896
  %v3901 = vsel %vm3900, 1, 0
  %v3902 = vadd.s32 %v3892, %v3896
  %v3903 = vadd.s32 %v3895, %v3901
  %vm3904 = vc.u32 %v3902, %v3898
  %v3905 = vsel %vm3904, 1, 0
  %v3906 = vadd.s32 %v3902, %v3898
  %v3907 = vadd.s32 %v3903, %v3905
  %v3908 = vadd.s32 %v3907, %v3897
  %v3909 = vadd.s32 %v3908, %v3899
  %v3910 = vmul.u32 %v3865, %v3856
  %v3911 = vadd.s32 %v3887, %v3906
  %vm3912 = vc.u32 %v3887, %v3906
  %v3913 = vadd.s32 %v3909, 1
  %v3914 = vsel %vm3912, %v3913, %v3909
  %v3915 = vadd.s32 %v3910, %v3914
  %v3916 = vadd.s32 %v3915, 536870912
  %v3917 = vshrl.u32 %v3916, 30
  %v3918 = vshll.u32 %v3917, 30
  %v3919 = vsub.s32 %v3915, %v3918
  %vm3920 = vcmp.lt.s32.totalorder %v3919, 0
  %v3921 = vsub.s32 0, %v3919
  %v3922 = vsel %vm3920, %v3921, %v3919
  %v3923 = vclz %v3922
  %v3924 = vsub.s32 %v3923, 2
  %vm3925 = vcmp.gt.s32.totalorder 0, %v3924
  %v3926 = vsel %vm3925, 0, %v3924
  %v3927 = vsub.s32 32, %v3926
  %v3928 = vshll.u32 %v3919, %v3926
  %v3929 = vshrl.u32 %v3911, %v3927
  %v3930 = vor.u32 %v3928, %v3929
  %v3931 = vsub.s32 4294967266, %v3926
  %v3932 = vadd.s32 %v3931, 127
  %v3933 = vshll.u32 %v3932, 23
  %v3934 = vor.u32 4788187, %v3933
  %v3935 = vand.u32 2147483647, %v3934
  %v3937 = vcvt.s32.f32 %v3930
  %v3938 = vmul.f32 %v3937, %v3935
  %v3939 = vxor.u32 %v3938, 2147483648
  %v3940 = vsel %vm3819, %v3939, %v3938
  %v3941 = vsub.s32 4, %v3917
  %v3942 = vsel %vm3819, %v3941, %v3917
  %v3943 = vsel %vm3818, %v419, %v3940
  %v3944 = vsel %vm3818, 0, %v3942
  %v3945 = vmul.f32 %v3943, %v3943
  %v3946 = vmul.f32 %v3945, -0.001358992
  %v3947 = vadd.f32 %v3946, 0.041655596
  %v3948 = vmul.f32 %v3945, %v3947
  %v3949 = vadd.f32 %v3948, -0.4999988
  %v3950 = vmul.f32 %v3945, %v3949
  %v3951 = vadd.f32 1.0, %v3950
  %v3952 = vmul.f32 %v3943, %v3943
  %v3953 = vmul.f32 %v3952, -0.00019511016
  %v3954 = vadd.f32 %v3953, 0.008332121
  %v3955 = vmul.f32 %v3952, %v3954
  %v3956 = vadd.f32 %v3955, -0.16666654
  %v3957 = vmul.f32 %v3952, %v3956
  %v3958 = vadd.f32 %v3957, 1.0
  %v3959 = vmul.f32 %v3958, %v3943
  %vm3960 = vweird.f32 %v419
  %v3961 = vand.u32 %v3944, 3
  %vm3962 = vcmp.lt.s32.totalorder %v3961, 2
  %vm3963 = vcmp.eq.s32.totalorder %v3961, 0
  %v3964 = vxor.u32 %v3959, 2147483648
  %v3965 = vsel %vm3963, %v3951, %v3964
  %vm3966 = vcmp.eq.s32.totalorder %v3961, 2
  %v3967 = vxor.u32 %v3951, 2147483648
  %v3968 = vsel %vm3966, %v3967, %v3959
  %v3969 = vsel %vm3962, %v3965, %v3968
  %v3970 = vsel %vm3960, nan, %v3969
  %v3971 = vand.u32 2147483647, %v420
  %vm3972 = vcmp.le.f32.partialorder %v3971, 0.7853982
  %vm3973 = vcmp.lt.s32.totalorder %v420, 0
  %v3974 = vand.u32 %v420, 2139095040
  %v3975 = vshrl.u32 %v3974, 23
  %v3976 = vsub.s32 %v3975, 127
  %v3977 = vand.u32 2147483647, %v420
  %v3978 = vand.u32 %v3977, 8388607
  %v3979 = vor.u32 %v3978, 8388608
  %v3980 = vsub.s32 0, %v3979
  %v3981 = vadd.s32 %v3976, 1
  %vm3982 = vcmp.gt.s32.totalorder %v3981, 0
  %v3983 = vsel %vm3982, %v3981, 0
  %v3984 = vshrl.u32 %v3983, 5
  %v3985 = vand.u32 %v3983, 31
  %v3986 = vsub.s32 32, %v3985
  %v3987 = vshrl.u32 683565275, %v3986
  %v3988 = vshll.u32 683565275, %v3985
  %v3989 = vshrl.u32 2475754826, %v3986
  %v3990 = vor.u32 %v3988, %v3989
  %v3991 = vshll.u32 2475754826, %v3985
  %v3992 = vshrl.u32 2131351028, %v3986
  %v3993 = vor.u32 %v3991, %v3992
  %v3994 = vshll.u32 2131351028, %v3985
  %v3995 = vshrl.u32 2102212464, %v3986
  %v3996 = vor.u32 %v3994, %v3995
  %v3997 = vshll.u32 2102212464, %v3985
  %v3998 = vshrl.u32 920167782, %v3986
  %v3999 = vor.u32 %v3997, %v3998
  %v4000 = vshll.u32 920167782, %v3985
  %v4001 = vshrl.u32 1326507024, %v3986
  %v4002 = vor.u32 %v4000, %v4001
  %vm4003 = vcmp.lt.s32.totalorder %v3984, 1
  %vm4004 = vcmp.lt.s32.totalorder %v3984, 2
  %vm4005 = vcmp.lt.s32.totalorder %v3984, 3
  %vm4006 = vcmp.lt.s32.totalorder %v3984, 4
  %v4007 = vsel %vm4003, %v3987, %v3990
  %v4008 = vsel %vm4006, %v3996, 2102212464
  %v4009 = vsel %vm4005, %v3993, %v4008
  %v4010 = vsel %vm4004, %v4007, %v4009
  %v4011 = vsel %vm4003, %v3990, %v3993
  %v4012 = vsel %vm4006, %v3999, 920167782
  %v4013 = vsel %vm4005, %v3996, %v4012
  %v4014 = vsel %vm4004, %v4011, %v4013
  %v4015 = vsel %vm4003, %v3993, %v3996
  %v4016 = vsel %vm4006, %v4002, 1326507024
  %v4017 = vsel %vm4005, %v3999, %v4016
  %v4018 = vsel %vm4004, %v4015, %v4017
  %v4019 = vshll.u32 %v3979, 8
  %v4020 = vand.u32 %v4019, 65535
  %v4021 = vshrl.u32 %v4019, 16
  %v4022 = vand.u32 %v4018, 65535
  %v4023 = vshrl.u32 %v4018, 16
  %v4024 = vmul.u32 %v4020, %v4022
  %v4025 = vmul.u32 %v4020, %v4023
  %v4026 = vmul.u32 %v4021, %v4022
  %v4027 = vmul.u32 %v4021, %v4023
  %v4028 = vshll.u32 %v4025, 16
  %v4029 = vshrl.u32 %v4025, 16
  %v4030 = vshll.u32 %v4026, 16
  %v4031 = vshrl.u32 %v4026, 16
  %vm4032 = vc.u32 %v4024, %v4028
  %v4033 = vsel %vm4032, 1, 0
  %v4034 = vadd.s32 %v4024, %v4028
  %v4035 = vadd.s32 %v4027, %v4033
  %vm4036 = vc.u32 %v4034, %v4030
  %v4037 = vsel %vm4036, 1, 0
  %v4038 = vadd.s32 %v4034, %v4030
  %v4039 = vadd.s32 %v4035, %v4037
  %v4040 = vadd.s32 %v4039, %v4029
  %v4041 = vadd.s32 %v4040, %v4031
  %v4042 = vand.u32 %v4019, 65535
  %v4043 = vshrl.u32 %v4019, 16
  %v4044 = vand.u32 %v4014, 65535
  %v4045 = vshrl.u32 %v4014, 16
  %v4046 = vmul.u32 %v4042, %v4044
  %v4047 = vmul.u32 %v4042, %v4045
  %v4048 = vmul.u32 %v4043, %v4044
  %v4049 = vmul.u32 %v4043, %v4045
  %v4050 = vshll.u32 %v4047, 16
  %v4051 = vshrl.u32 %v4047, 16
  %v4052 = vshll.u32 %v4048, 16
  %v4053 = vshrl.u32 %v4048, 16
  %vm4054 = vc.u32 %v4046, %v4050
  %v4055 = vsel %vm4054, 1, 0
  %v4056 = vadd.s32 %v4046, %v4050
  %v4057 = vadd.s32 %v4049, %v4055
  %vm4058 = vc.u32 %v4056, %v4052
  %v4059 = vsel %vm4058, 1, 0
  %v4060 = vadd.s32 %v4056, %v4052
  %v4061 = vadd.s32 %v4057, %v4059
  %v4062 = vadd.s32 %v4061, %v4051
  %v4063 = vadd.s32 %v4062, %v4053
  %v4064 = vmul.u32 %v4019, %v4010
  %v4065 = vadd.s32 %v4041, %v4060
  %vm4066 = vc.u32 %v4041, %v4060
  %v4067 = vadd.s32 %v4063, 1
  %v4068 = vsel %vm4066, %v4067, %v4063
  %v4069 = vadd.s32 %v4064, %v4068
  %v4070 = vadd.s32 %v4069, 536870912
  %v4071 = vshrl.u32 %v4070, 30
  %v4072 = vshll.u32 %v4071, 30
  %v4073 = vsub.s32 %v4069, %v4072
  %vm4074 = vcmp.lt.s32.totalorder %v4073, 0
  %v4075 = vsub.s32 0, %v4073
  %v4076 = vsel %vm4074, %v4075, %v4073
  %v4077 = vclz %v4076
  %v4078 = vsub.s32 %v4077, 2
  %vm4079 = vcmp.gt.s32.totalorder 0, %v4078
  %v4080 = vsel %vm4079, 0, %v4078
  %v4081 = vsub.s32 32, %v4080
  %v4082 = vshll.u32 %v4073, %v4080
  %v4083 = vshrl.u32 %v4065, %v4081
  %v4084 = vor.u32 %v4082, %v4083
  %v4085 = vsub.s32 4294967266, %v4080
  %v4086 = vadd.s32 %v4085, 127
  %v4087 = vshll.u32 %v4086, 23
  %v4088 = vor.u32 4788187, %v4087
  %v4089 = vand.u32 2147483647, %v4088
  %v4091 = vcvt.s32.f32 %v4084
  %v4092 = vmul.f32 %v4091, %v4089
  %v4093 = vxor.u32 %v4092, 2147483648
  %v4094 = vsel %vm3973, %v4093, %v4092
  %v4095 = vsub.s32 4, %v4071
  %v4096 = vsel %vm3973, %v4095, %v4071
  %v4097 = vsel %vm3972, %v420, %v4094
  %v4098 = vsel %vm3972, 0, %v4096
  %v4099 = vmul.f32 %v4097, %v4097
  %v4100 = vmul.f32 %v4099, -0.001358992
  %v4101 = vadd.f32 %v4100, 0.041655596
  %v4102 = vmul.f32 %v4099, %v4101
  %v4103 = vadd.f32 %v4102, -0.4999988
  %v4104 = vmul.f32 %v4099, %v4103
  %v4105 = vadd.f32 1.0, %v4104
  %v4106 = vmul.f32 %v4097, %v4097
  %v4107 = vmul.f32 %v4106, -0.00019511016
  %v4108 = vadd.f32 %v4107, 0.008332121
  %v4109 = vmul.f32 %v4106, %v4108
  %v4110 = vadd.f32 %v4109, -0.16666654
  %v4111 = vmul.f32 %v4106, %v4110
  %v4112 = vadd.f32 %v4111, 1.0
  %v4113 = vmul.f32 %v4112, %v4097
  %vm4114 = vweird.f32 %v420
  %v4115 = vand.u32 %v4098, 3
  %vm4116 = vcmp.lt.s32.totalorder %v4115, 2
  %vm4117 = vcmp.eq.s32.totalorder %v4115, 0
  %v4118 = vxor.u32 %v4113, 2147483648
  %v4119 = vsel %vm4117, %v4105, %v4118
  %vm4120 = vcmp.eq.s32.totalorder %v4115, 2
  %v4121 = vxor.u32 %v4105, 2147483648
  %v4122 = vsel %vm4120, %v4121, %v4113
  %v4123 = vsel %vm4116, %v4119, %v4122
  %v4124 = vsel %vm4114, nan, %v4123
  %v4125 = vand.u32 2147483647, %v421
  %vm4126 = vcmp.le.f32.partialorder %v4125, 0.7853982
  %vm4127 = vcmp.lt.s32.totalorder %v421, 0
  %v4128 = vand.u32 %v421, 2139095040
  %v4129 = vshrl.u32 %v4128, 23
  %v4130 = vsub.s32 %v4129, 127
  %v4131 = vand.u32 2147483647, %v421
  %v4132 = vand.u32 %v4131, 8388607
  %v4133 = vor.u32 %v4132, 8388608
  %v4134 = vsub.s32 0, %v4133
  %v4135 = vadd.s32 %v4130, 1
  %vm4136 = vcmp.gt.s32.totalorder %v4135, 0
  %v4137 = vsel %vm4136, %v4135, 0
  %v4138 = vshrl.u32 %v4137, 5
  %v4139 = vand.u32 %v4137, 31
  %v4140 = vsub.s32 32, %v4139
  %v4141 = vshrl.u32 683565275, %v4140
  %v4142 = vshll.u32 683565275, %v4139
  %v4143 = vshrl.u32 2475754826, %v4140
  %v4144 = vor.u32 %v4142, %v4143
  %v4145 = vshll.u32 2475754826, %v4139
  %v4146 = vshrl.u32 2131351028, %v4140
  %v4147 = vor.u32 %v4145, %v4146
  %v4148 = vshll.u32 2131351028, %v4139
  %v4149 = vshrl.u32 2102212464, %v4140
  %v4150 = vor.u32 %v4148, %v4149
  %v4151 = vshll.u32 2102212464, %v4139
  %v4152 = vshrl.u32 920167782, %v4140
  %v4153 = vor.u32 %v4151, %v4152
  %v4154 = vshll.u32 920167782, %v4139
  %v4155 = vshrl.u32 1326507024, %v4140
  %v4156 = vor.u32 %v4154, %v4155
  %vm4157 = vcmp.lt.s32.totalorder %v4138, 1
  %vm4158 = vcmp.lt.s32.totalorder %v4138, 2
  %vm4159 = vcmp.lt.s32.totalorder %v4138, 3
  %vm4160 = vcmp.lt.s32.totalorder %v4138, 4
  %v4161 = vsel %vm4157, %v4141, %v4144
  %v4162 = vsel %vm4160, %v4150, 2102212464
  %v4163 = vsel %vm4159, %v4147, %v4162
  %v4164 = vsel %vm4158, %v4161, %v4163
  %v4165 = vsel %vm4157, %v4144, %v4147
  %v4166 = vsel %vm4160, %v4153, 920167782
  %v4167 = vsel %vm4159, %v4150, %v4166
  %v4168 = vsel %vm4158, %v4165, %v4167
  %v4169 = vsel %vm4157, %v4147, %v4150
  %v4170 = vsel %vm4160, %v4156, 1326507024
  %v4171 = vsel %vm4159, %v4153, %v4170
  %v4172 = vsel %vm4158, %v4169, %v4171
  %v4173 = vshll.u32 %v4133, 8
  %v4174 = vand.u32 %v4173, 65535
  %v4175 = vshrl.u32 %v4173, 16
  %v4176 = vand.u32 %v4172, 65535
  %v4177 = vshrl.u32 %v4172, 16
  %v4178 = vmul.u32 %v4174, %v4176
  %v4179 = vmul.u32 %v4174, %v4177
  %v4180 = vmul.u32 %v4175, %v4176
  %v4181 = vmul.u32 %v4175, %v4177
  %v4182 = vshll.u32 %v4179, 16
  %v4183 = vshrl.u32 %v4179, 16
  %v4184 = vshll.u32 %v4180, 16
  %v4185 = vshrl.u32 %v4180, 16
  %vm4186 = vc.u32 %v4178, %v4182
  %v4187 = vsel %vm4186, 1, 0
  %v4188 = vadd.s32 %v4178, %v4182
  %v4189 = vadd.s32 %v4181, %v4187
  %vm4190 = vc.u32 %v4188, %v4184
  %v4191 = vsel %vm4190, 1, 0
  %v4192 = vadd.s32 %v4188, %v4184
  %v4193 = vadd.s32 %v4189, %v4191
  %v4194 = vadd.s32 %v4193, %v4183
  %v4195 = vadd.s32 %v4194, %v4185
  %v4196 = vand.u32 %v4173, 65535
  %v4197 = vshrl.u32 %v4173, 16
  %v4198 = vand.u32 %v4168, 65535
  %v4199 = vshrl.u32 %v4168, 16
  %v4200 = vmul.u32 %v4196, %v4198
  %v4201 = vmul.u32 %v4196, %v4199
  %v4202 = vmul.u32 %v4197, %v4198
  %v4203 = vmul.u32 %v4197, %v4199
  %v4204 = vshll.u32 %v4201, 16
  %v4205 = vshrl.u32 %v4201, 16
  %v4206 = vshll.u32 %v4202, 16
  %v4207 = vshrl.u32 %v4202, 16
  %vm4208 = vc.u32 %v4200, %v4204
  %v4209 = vsel %vm4208, 1, 0
  %v4210 = vadd.s32 %v4200, %v4204
  %v4211 = vadd.s32 %v4203, %v4209
  %vm4212 = vc.u32 %v4210, %v4206
  %v4213 = vsel %vm4212, 1, 0
  %v4214 = vadd.s32 %v4210, %v4206
  %v4215 = vadd.s32 %v4211, %v4213
  %v4216 = vadd.s32 %v4215, %v4205
  %v4217 = vadd.s32 %v4216, %v4207
  %v4218 = vmul.u32 %v4173, %v4164
  %v4219 = vadd.s32 %v4195, %v4214
  %vm4220 = vc.u32 %v4195, %v4214
  %v4221 = vadd.s32 %v4217, 1
  %v4222 = vsel %vm4220, %v4221, %v4217
  %v4223 = vadd.s32 %v4218, %v4222
  %v4224 = vadd.s32 %v4223, 536870912
  %v4225 = vshrl.u32 %v4224, 30
  %v4226 = vshll.u32 %v4225, 30
  %v4227 = vsub.s32 %v4223, %v4226
  %vm4228 = vcmp.lt.s32.totalorder %v4227, 0
  %v4229 = vsub.s32 0, %v4227
  %v4230 = vsel %vm4228, %v4229, %v4227
  %v4231 = vclz %v4230
  %v4232 = vsub.s32 %v4231, 2
  %vm4233 = vcmp.gt.s32.totalorder 0, %v4232
  %v4234 = vsel %vm4233, 0, %v4232
  %v4235 = vsub.s32 32, %v4234
  %v4236 = vshll.u32 %v4227, %v4234
  %v4237 = vshrl.u32 %v4219, %v4235
  %v4238 = vor.u32 %v4236, %v4237
  %v4239 = vsub.s32 4294967266, %v4234
  %v4240 = vadd.s32 %v4239, 127
  %v4241 = vshll.u32 %v4240, 23
  %v4242 = vor.u32 4788187, %v4241
  %v4243 = vand.u32 2147483647, %v4242
  %v4245 = vcvt.s32.f32 %v4238
  %v4246 = vmul.f32 %v4245, %v4243
  %v4247 = vxor.u32 %v4246, 2147483648
  %v4248 = vsel %vm4127, %v4247, %v4246
  %v4249 = vsub.s32 4, %v4225
  %v4250 = vsel %vm4127, %v4249, %v4225
  %v4251 = vsel %vm4126, %v421, %v4248
  %v4252 = vsel %vm4126, 0, %v4250
  %v4253 = vmul.f32 %v4251, %v4251
  %v4254 = vmul.f32 %v4253, -0.001358992
  %v4255 = vadd.f32 %v4254, 0.041655596
  %v4256 = vmul.f32 %v4253, %v4255
  %v4257 = vadd.f32 %v4256, -0.4999988
  %v4258 = vmul.f32 %v4253, %v4257
  %v4259 = vadd.f32 1.0, %v4258
  %v4260 = vmul.f32 %v4251, %v4251
  %v4261 = vmul.f32 %v4260, -0.00019511016
  %v4262 = vadd.f32 %v4261, 0.008332121
  %v4263 = vmul.f32 %v4260, %v4262
  %v4264 = vadd.f32 %v4263, -0.16666654
  %v4265 = vmul.f32 %v4260, %v4264
  %v4266 = vadd.f32 %v4265, 1.0
  %v4267 = vmul.f32 %v4266, %v4251
  %vm4268 = vweird.f32 %v421
  %v4269 = vand.u32 %v4252, 3
  %vm4270 = vcmp.lt.s32.totalorder %v4269, 2
  %vm4271 = vcmp.eq.s32.totalorder %v4269, 0
  %v4272 = vxor.u32 %v4267, 2147483648
  %v4273 = vsel %vm4271, %v4259, %v4272
  %vm4274 = vcmp.eq.s32.totalorder %v4269, 2
  %v4275 = vxor.u32 %v4259, 2147483648
  %v4276 = vsel %vm4274, %v4275, %v4267
  %v4277 = vsel %vm4270, %v4273, %v4276
  %v4278 = vsel %vm4268, nan, %v4277
  %v4279 = vand.u32 2147483647, %v422
  %vm4280 = vcmp.le.f32.partialorder %v4279, 0.7853982
  %vm4281 = vcmp.lt.s32.totalorder %v422, 0
  %v4282 = vand.u32 %v422, 2139095040
  %v4283 = vshrl.u32 %v4282, 23
  %v4284 = vsub.s32 %v4283, 127
  %v4285 = vand.u32 2147483647, %v422
  %v4286 = vand.u32 %v4285, 8388607
  %v4287 = vor.u32 %v4286, 8388608
  %v4288 = vsub.s32 0, %v4287
  %v4289 = vadd.s32 %v4284, 1
  %vm4290 = vcmp.gt.s32.totalorder %v4289, 0
  %v4291 = vsel %vm4290, %v4289, 0
  %v4292 = vshrl.u32 %v4291, 5
  %v4293 = vand.u32 %v4291, 31
  %v4294 = vsub.s32 32, %v4293
  %v4295 = vshrl.u32 683565275, %v4294
  %v4296 = vshll.u32 683565275, %v4293
  %v4297 = vshrl.u32 2475754826, %v4294
  %v4298 = vor.u32 %v4296, %v4297
  %v4299 = vshll.u32 2475754826, %v4293
  %v4300 = vshrl.u32 2131351028, %v4294
  %v4301 = vor.u32 %v4299, %v4300
  %v4302 = vshll.u32 2131351028, %v4293
  %v4303 = vshrl.u32 2102212464, %v4294
  %v4304 = vor.u32 %v4302, %v4303
  %v4305 = vshll.u32 2102212464, %v4293
  %v4306 = vshrl.u32 920167782, %v4294
  %v4307 = vor.u32 %v4305, %v4306
  %v4308 = vshll.u32 920167782, %v4293
  %v4309 = vshrl.u32 1326507024, %v4294
  %v4310 = vor.u32 %v4308, %v4309
  %vm4311 = vcmp.lt.s32.totalorder %v4292, 1
  %vm4312 = vcmp.lt.s32.totalorder %v4292, 2
  %vm4313 = vcmp.lt.s32.totalorder %v4292, 3
  %vm4314 = vcmp.lt.s32.totalorder %v4292, 4
  %v4315 = vsel %vm4311, %v4295, %v4298
  %v4316 = vsel %vm4314, %v4304, 2102212464
  %v4317 = vsel %vm4313, %v4301, %v4316
  %v4318 = vsel %vm4312, %v4315, %v4317
  %v4319 = vsel %vm4311, %v4298, %v4301
  %v4320 = vsel %vm4314, %v4307, 920167782
  %v4321 = vsel %vm4313, %v4304, %v4320
  %v4322 = vsel %vm4312, %v4319, %v4321
  %v4323 = vsel %vm4311, %v4301, %v4304
  %v4324 = vsel %vm4314, %v4310, 1326507024
  %v4325 = vsel %vm4313, %v4307, %v4324
  %v4326 = vsel %vm4312, %v4323, %v4325
  %v4327 = vshll.u32 %v4287, 8
  %v4328 = vand.u32 %v4327, 65535
  %v4329 = vshrl.u32 %v4327, 16
  %v4330 = vand.u32 %v4326, 65535
  %v4331 = vshrl.u32 %v4326, 16
  %v4332 = vmul.u32 %v4328, %v4330
  %v4333 = vmul.u32 %v4328, %v4331
  %v4334 = vmul.u32 %v4329, %v4330
  %v4335 = vmul.u32 %v4329, %v4331
  %v4336 = vshll.u32 %v4333, 16
  %v4337 = vshrl.u32 %v4333, 16
  %v4338 = vshll.u32 %v4334, 16
  %v4339 = vshrl.u32 %v4334, 16
  %vm4340 = vc.u32 %v4332, %v4336
  %v4341 = vsel %vm4340, 1, 0
  %v4342 = vadd.s32 %v4332, %v4336
  %v4343 = vadd.s32 %v4335, %v4341
  %vm4344 = vc.u32 %v4342, %v4338
  %v4345 = vsel %vm4344, 1, 0
  %v4346 = vadd.s32 %v4342, %v4338
  %v4347 = vadd.s32 %v4343, %v4345
  %v4348 = vadd.s32 %v4347, %v4337
  %v4349 = vadd.s32 %v4348, %v4339
  %v4350 = vand.u32 %v4327, 65535
  %v4351 = vshrl.u32 %v4327, 16
  %v4352 = vand.u32 %v4322, 65535
  %v4353 = vshrl.u32 %v4322, 16
  %v4354 = vmul.u32 %v4350, %v4352
  %v4355 = vmul.u32 %v4350, %v4353
  %v4356 = vmul.u32 %v4351, %v4352
  %v4357 = vmul.u32 %v4351, %v4353
  %v4358 = vshll.u32 %v4355, 16
  %v4359 = vshrl.u32 %v4355, 16
  %v4360 = vshll.u32 %v4356, 16
  %v4361 = vshrl.u32 %v4356, 16
  %vm4362 = vc.u32 %v4354, %v4358
  %v4363 = vsel %vm4362, 1, 0
  %v4364 = vadd.s32 %v4354, %v4358
  %v4365 = vadd.s32 %v4357, %v4363
  %vm4366 = vc.u32 %v4364, %v4360
  %v4367 = vsel %vm4366, 1, 0
  %v4368 = vadd.s32 %v4364, %v4360
  %v4369 = vadd.s32 %v4365, %v4367
  %v4370 = vadd.s32 %v4369, %v4359
  %v4371 = vadd.s32 %v4370, %v4361
  %v4372 = vmul.u32 %v4327, %v4318
  %v4373 = vadd.s32 %v4349, %v4368
  %vm4374 = vc.u32 %v4349, %v4368
  %v4375 = vadd.s32 %v4371, 1
  %v4376 = vsel %vm4374, %v4375, %v4371
  %v4377 = vadd.s32 %v4372, %v4376
  %v4378 = vadd.s32 %v4377, 536870912
  %v4379 = vshrl.u32 %v4378, 30
  %v4380 = vshll.u32 %v4379, 30
  %v4381 = vsub.s32 %v4377, %v4380
  %vm4382 = vcmp.lt.s32.totalorder %v4381, 0
  %v4383 = vsub.s32 0, %v4381
  %v4384 = vsel %vm4382, %v4383, %v4381
  %v4385 = vclz %v4384
  %v4386 = vsub.s32 %v4385, 2
  %vm4387 = vcmp.gt.s32.totalorder 0, %v4386
  %v4388 = vsel %vm4387, 0, %v4386
  %v4389 = vsub.s32 32, %v4388
  %v4390 = vshll.u32 %v4381, %v4388
  %v4391 = vshrl.u32 %v4373, %v4389
  %v4392 = vor.u32 %v4390, %v4391
  %v4393 = vsub.s32 4294967266, %v4388
  %v4394 = vadd.s32 %v4393, 127
  %v4395 = vshll.u32 %v4394, 23
  %v4396 = vor.u32 4788187, %v4395
  %v4397 = vand.u32 2147483647, %v4396
  %v4399 = vcvt.s32.f32 %v4392
  %v4400 = vmul.f32 %v4399, %v4397
  %v4401 = vxor.u32 %v4400, 2147483648
  %v4402 = vsel %vm4281, %v4401, %v4400
  %v4403 = vsub.s32 4, %v4379
  %v4404 = vsel %vm4281, %v4403, %v4379
  %v4405 = vsel %vm4280, %v422, %v4402
  %v4406 = vsel %vm4280, 0, %v4404
  %v4407 = vmul.f32 %v4405, %v4405
  %v4408 = vmul.f32 %v4407, -0.001358992
  %v4409 = vadd.f32 %v4408, 0.041655596
  %v4410 = vmul.f32 %v4407, %v4409
  %v4411 = vadd.f32 %v4410, -0.4999988
  %v4412 = vmul.f32 %v4407, %v4411
  %v4413 = vadd.f32 1.0, %v4412
  %v4414 = vmul.f32 %v4405, %v4405
  %v4415 = vmul.f32 %v4414, -0.00019511016
  %v4416 = vadd.f32 %v4415, 0.008332121
  %v4417 = vmul.f32 %v4414, %v4416
  %v4418 = vadd.f32 %v4417, -0.16666654
  %v4419 = vmul.f32 %v4414, %v4418
  %v4420 = vadd.f32 %v4419, 1.0
  %v4421 = vmul.f32 %v4420, %v4405
  %vm4422 = vweird.f32 %v422
  %v4423 = vand.u32 %v4406, 3
  %vm4424 = vcmp.lt.s32.totalorder %v4423, 2
  %vm4425 = vcmp.eq.s32.totalorder %v4423, 0
  %v4426 = vxor.u32 %v4421, 2147483648
  %v4427 = vsel %vm4425, %v4413, %v4426
  %vm4428 = vcmp.eq.s32.totalorder %v4423, 2
  %v4429 = vxor.u32 %v4413, 2147483648
  %v4430 = vsel %vm4428, %v4429, %v4421
  %v4431 = vsel %vm4424, %v4427, %v4430
  %v4432 = vsel %vm4422, nan, %v4431
  %v4433 = vand.u32 2147483647, %v423
  %vm4434 = vcmp.le.f32.partialorder %v4433, 0.7853982
  %vm4435 = vcmp.lt.s32.totalorder %v423, 0
  %v4436 = vand.u32 %v423, 2139095040
  %v4437 = vshrl.u32 %v4436, 23
  %v4438 = vsub.s32 %v4437, 127
  %v4439 = vand.u32 2147483647, %v423
  %v4440 = vand.u32 %v4439, 8388607
  %v4441 = vor.u32 %v4440, 8388608
  %v4442 = vsub.s32 0, %v4441
  %v4443 = vadd.s32 %v4438, 1
  %vm4444 = vcmp.gt.s32.totalorder %v4443, 0
  %v4445 = vsel %vm4444, %v4443, 0
  %v4446 = vshrl.u32 %v4445, 5
  %v4447 = vand.u32 %v4445, 31
  %v4448 = vsub.s32 32, %v4447
  %v4449 = vshrl.u32 683565275, %v4448
  %v4450 = vshll.u32 683565275, %v4447
  %v4451 = vshrl.u32 2475754826, %v4448
  %v4452 = vor.u32 %v4450, %v4451
  %v4453 = vshll.u32 2475754826, %v4447
  %v4454 = vshrl.u32 2131351028, %v4448
  %v4455 = vor.u32 %v4453, %v4454
  %v4456 = vshll.u32 2131351028, %v4447
  %v4457 = vshrl.u32 2102212464, %v4448
  %v4458 = vor.u32 %v4456, %v4457
  %v4459 = vshll.u32 2102212464, %v4447
  %v4460 = vshrl.u32 920167782, %v4448
  %v4461 = vor.u32 %v4459, %v4460
  %v4462 = vshll.u32 920167782, %v4447
  %v4463 = vshrl.u32 1326507024, %v4448
  %v4464 = vor.u32 %v4462, %v4463
  %vm4465 = vcmp.lt.s32.totalorder %v4446, 1
  %vm4466 = vcmp.lt.s32.totalorder %v4446, 2
  %vm4467 = vcmp.lt.s32.totalorder %v4446, 3
  %vm4468 = vcmp.lt.s32.totalorder %v4446, 4
  %v4469 = vsel %vm4465, %v4449, %v4452
  %v4470 = vsel %vm4468, %v4458, 2102212464
  %v4471 = vsel %vm4467, %v4455, %v4470
  %v4472 = vsel %vm4466, %v4469, %v4471
  %v4473 = vsel %vm4465, %v4452, %v4455
  %v4474 = vsel %vm4468, %v4461, 920167782
  %v4475 = vsel %vm4467, %v4458, %v4474
  %v4476 = vsel %vm4466, %v4473, %v4475
  %v4477 = vsel %vm4465, %v4455, %v4458
  %v4478 = vsel %vm4468, %v4464, 1326507024
  %v4479 = vsel %vm4467, %v4461, %v4478
  %v4480 = vsel %vm4466, %v4477, %v4479
  %v4481 = vshll.u32 %v4441, 8
  %v4482 = vand.u32 %v4481, 65535
  %v4483 = vshrl.u32 %v4481, 16
  %v4484 = vand.u32 %v4480, 65535
  %v4485 = vshrl.u32 %v4480, 16
  %v4486 = vmul.u32 %v4482, %v4484
  %v4487 = vmul.u32 %v4482, %v4485
  %v4488 = vmul.u32 %v4483, %v4484
  %v4489 = vmul.u32 %v4483, %v4485
  %v4490 = vshll.u32 %v4487, 16
  %v4491 = vshrl.u32 %v4487, 16
  %v4492 = vshll.u32 %v4488, 16
  %v4493 = vshrl.u32 %v4488, 16
  %vm4494 = vc.u32 %v4486, %v4490
  %v4495 = vsel %vm4494, 1, 0
  %v4496 = vadd.s32 %v4486, %v4490
  %v4497 = vadd.s32 %v4489, %v4495
  %vm4498 = vc.u32 %v4496, %v4492
  %v4499 = vsel %vm4498, 1, 0
  %v4500 = vadd.s32 %v4496, %v4492
  %v4501 = vadd.s32 %v4497, %v4499
  %v4502 = vadd.s32 %v4501, %v4491
  %v4503 = vadd.s32 %v4502, %v4493
  %v4504 = vand.u32 %v4481, 65535
  %v4505 = vshrl.u32 %v4481, 16
  %v4506 = vand.u32 %v4476, 65535
  %v4507 = vshrl.u32 %v4476, 16
  %v4508 = vmul.u32 %v4504, %v4506
  %v4509 = vmul.u32 %v4504, %v4507
  %v4510 = vmul.u32 %v4505, %v4506
  %v4511 = vmul.u32 %v4505, %v4507
  %v4512 = vshll.u32 %v4509, 16
  %v4513 = vshrl.u32 %v4509, 16
  %v4514 = vshll.u32 %v4510, 16
  %v4515 = vshrl.u32 %v4510, 16
  %vm4516 = vc.u32 %v4508, %v4512
  %v4517 = vsel %vm4516, 1, 0
  %v4518 = vadd.s32 %v4508, %v4512
  %v4519 = vadd.s32 %v4511, %v4517
  %vm4520 = vc.u32 %v4518, %v4514
  %v4521 = vsel %vm4520, 1, 0
  %v4522 = vadd.s32 %v4518, %v4514
  %v4523 = vadd.s32 %v4519, %v4521
  %v4524 = vadd.s32 %v4523, %v4513
  %v4525 = vadd.s32 %v4524, %v4515
  %v4526 = vmul.u32 %v4481, %v4472
  %v4527 = vadd.s32 %v4503, %v4522
  %vm4528 = vc.u32 %v4503, %v4522
  %v4529 = vadd.s32 %v4525, 1
  %v4530 = vsel %vm4528, %v4529, %v4525
  %v4531 = vadd.s32 %v4526, %v4530
  %v4532 = vadd.s32 %v4531, 536870912
  %v4533 = vshrl.u32 %v4532, 30
  %v4534 = vshll.u32 %v4533, 30
  %v4535 = vsub.s32 %v4531, %v4534
  %vm4536 = vcmp.lt.s32.totalorder %v4535, 0
  %v4537 = vsub.s32 0, %v4535
  %v4538 = vsel %vm4536, %v4537, %v4535
  %v4539 = vclz %v4538
  %v4540 = vsub.s32 %v4539, 2
  %vm4541 = vcmp.gt.s32.totalorder 0, %v4540
  %v4542 = vsel %vm4541, 0, %v4540
  %v4543 = vsub.s32 32, %v4542
  %v4544 = vshll.u32 %v4535, %v4542
  %v4545 = vshrl.u32 %v4527, %v4543
  %v4546 = vor.u32 %v4544, %v4545
  %v4547 = vsub.s32 4294967266, %v4542
  %v4548 = vadd.s32 %v4547, 127
  %v4549 = vshll.u32 %v4548, 23
  %v4550 = vor.u32 4788187, %v4549
  %v4551 = vand.u32 2147483647, %v4550
  %v4553 = vcvt.s32.f32 %v4546
  %v4554 = vmul.f32 %v4553, %v4551
  %v4555 = vxor.u32 %v4554, 2147483648
  %v4556 = vsel %vm4435, %v4555, %v4554
  %v4557 = vsub.s32 4, %v4533
  %v4558 = vsel %vm4435, %v4557, %v4533
  %v4559 = vsel %vm4434, %v423, %v4556
  %v4560 = vsel %vm4434, 0, %v4558
  %v4561 = vmul.f32 %v4559, %v4559
  %v4562 = vmul.f32 %v4561, -0.001358992
  %v4563 = vadd.f32 %v4562, 0.041655596
  %v4564 = vmul.f32 %v4561, %v4563
  %v4565 = vadd.f32 %v4564, -0.4999988
  %v4566 = vmul.f32 %v4561, %v4565
  %v4567 = vadd.f32 1.0, %v4566
  %v4568 = vmul.f32 %v4559, %v4559
  %v4569 = vmul.f32 %v4568, -0.00019511016
  %v4570 = vadd.f32 %v4569, 0.008332121
  %v4571 = vmul.f32 %v4568, %v4570
  %v4572 = vadd.f32 %v4571, -0.16666654
  %v4573 = vmul.f32 %v4568, %v4572
  %v4574 = vadd.f32 %v4573, 1.0
  %v4575 = vmul.f32 %v4574, %v4559
  %vm4576 = vweird.f32 %v423
  %v4577 = vand.u32 %v4560, 3
  %vm4578 = vcmp.lt.s32.totalorder %v4577, 2
  %vm4579 = vcmp.eq.s32.totalorder %v4577, 0
  %v4580 = vxor.u32 %v4575, 2147483648
  %v4581 = vsel %vm4579, %v4567, %v4580
  %vm4582 = vcmp.eq.s32.totalorder %v4577, 2
  %v4583 = vxor.u32 %v4567, 2147483648
  %v4584 = vsel %vm4582, %v4583, %v4575
  %v4585 = vsel %vm4578, %v4581, %v4584
  %v4586 = vsel %vm4576, nan, %v4585
  %v4587 = vand.u32 2147483647, %v424
  %vm4588 = vcmp.le.f32.partialorder %v4587, 0.7853982
  %vm4589 = vcmp.lt.s32.totalorder %v424, 0
  %v4590 = vand.u32 %v424, 2139095040
  %v4591 = vshrl.u32 %v4590, 23
  %v4592 = vsub.s32 %v4591, 127
  %v4593 = vand.u32 2147483647, %v424
  %v4594 = vand.u32 %v4593, 8388607
  %v4595 = vor.u32 %v4594, 8388608
  %v4596 = vsub.s32 0, %v4595
  %v4597 = vadd.s32 %v4592, 1
  %vm4598 = vcmp.gt.s32.totalorder %v4597, 0
  %v4599 = vsel %vm4598, %v4597, 0
  %v4600 = vshrl.u32 %v4599, 5
  %v4601 = vand.u32 %v4599, 31
  %v4602 = vsub.s32 32, %v4601
  %v4603 = vshrl.u32 683565275, %v4602
  %v4604 = vshll.u32 683565275, %v4601
  %v4605 = vshrl.u32 2475754826, %v4602
  %v4606 = vor.u32 %v4604, %v4605
  %v4607 = vshll.u32 2475754826, %v4601
  %v4608 = vshrl.u32 2131351028, %v4602
  %v4609 = vor.u32 %v4607, %v4608
  %v4610 = vshll.u32 2131351028, %v4601
  %v4611 = vshrl.u32 2102212464, %v4602
  %v4612 = vor.u32 %v4610, %v4611
  %v4613 = vshll.u32 2102212464, %v4601
  %v4614 = vshrl.u32 920167782, %v4602
  %v4615 = vor.u32 %v4613, %v4614
  %v4616 = vshll.u32 920167782, %v4601
  %v4617 = vshrl.u32 1326507024, %v4602
  %v4618 = vor.u32 %v4616, %v4617
  %vm4619 = vcmp.lt.s32.totalorder %v4600, 1
  %vm4620 = vcmp.lt.s32.totalorder %v4600, 2
  %vm4621 = vcmp.lt.s32.totalorder %v4600, 3
  %vm4622 = vcmp.lt.s32.totalorder %v4600, 4
  %v4623 = vsel %vm4619, %v4603, %v4606
  %v4624 = vsel %vm4622, %v4612, 2102212464
  %v4625 = vsel %vm4621, %v4609, %v4624
  %v4626 = vsel %vm4620, %v4623, %v4625
  %v4627 = vsel %vm4619, %v4606, %v4609
  %v4628 = vsel %vm4622, %v4615, 920167782
  %v4629 = vsel %vm4621, %v4612, %v4628
  %v4630 = vsel %vm4620, %v4627, %v4629
  %v4631 = vsel %vm4619, %v4609, %v4612
  %v4632 = vsel %vm4622, %v4618, 1326507024
  %v4633 = vsel %vm4621, %v4615, %v4632
  %v4634 = vsel %vm4620, %v4631, %v4633
  %v4635 = vshll.u32 %v4595, 8
  %v4636 = vand.u32 %v4635, 65535
  %v4637 = vshrl.u32 %v4635, 16
  %v4638 = vand.u32 %v4634, 65535
  %v4639 = vshrl.u32 %v4634, 16
  %v4640 = vmul.u32 %v4636, %v4638
  %v4641 = vmul.u32 %v4636, %v4639
  %v4642 = vmul.u32 %v4637, %v4638
  %v4643 = vmul.u32 %v4637, %v4639
  %v4644 = vshll.u32 %v4641, 16
  %v4645 = vshrl.u32 %v4641, 16
  %v4646 = vshll.u32 %v4642, 16
  %v4647 = vshrl.u32 %v4642, 16
  %vm4648 = vc.u32 %v4640, %v4644
  %v4649 = vsel %vm4648, 1, 0
  %v4650 = vadd.s32 %v4640, %v4644
  %v4651 = vadd.s32 %v4643, %v4649
  %vm4652 = vc.u32 %v4650, %v4646
  %v4653 = vsel %vm4652, 1, 0
  %v4654 = vadd.s32 %v4650, %v4646
  %v4655 = vadd.s32 %v4651, %v4653
  %v4656 = vadd.s32 %v4655, %v4645
  %v4657 = vadd.s32 %v4656, %v4647
  %v4658 = vand.u32 %v4635, 65535
  %v4659 = vshrl.u32 %v4635, 16
  %v4660 = vand.u32 %v4630, 65535
  %v4661 = vshrl.u32 %v4630, 16
  %v4662 = vmul.u32 %v4658, %v4660
  %v4663 = vmul.u32 %v4658, %v4661
  %v4664 = vmul.u32 %v4659, %v4660
  %v4665 = vmul.u32 %v4659, %v4661
  %v4666 = vshll.u32 %v4663, 16
  %v4667 = vshrl.u32 %v4663, 16
  %v4668 = vshll.u32 %v4664, 16
  %v4669 = vshrl.u32 %v4664, 16
  %vm4670 = vc.u32 %v4662, %v4666
  %v4671 = vsel %vm4670, 1, 0
  %v4672 = vadd.s32 %v4662, %v4666
  %v4673 = vadd.s32 %v4665, %v4671
  %vm4674 = vc.u32 %v4672, %v4668
  %v4675 = vsel %vm4674, 1, 0
  %v4676 = vadd.s32 %v4672, %v4668
  %v4677 = vadd.s32 %v4673, %v4675
  %v4678 = vadd.s32 %v4677, %v4667
  %v4679 = vadd.s32 %v4678, %v4669
  %v4680 = vmul.u32 %v4635, %v4626
  %v4681 = vadd.s32 %v4657, %v4676
  %vm4682 = vc.u32 %v4657, %v4676
  %v4683 = vadd.s32 %v4679, 1
  %v4684 = vsel %vm4682, %v4683, %v4679
  %v4685 = vadd.s32 %v4680, %v4684
  %v4686 = vadd.s32 %v4685, 536870912
  %v4687 = vshrl.u32 %v4686, 30
  %v4688 = vshll.u32 %v4687, 30
  %v4689 = vsub.s32 %v4685, %v4688
  %vm4690 = vcmp.lt.s32.totalorder %v4689, 0
  %v4691 = vsub.s32 0, %v4689
  %v4692 = vsel %vm4690, %v4691, %v4689
  %v4693 = vclz %v4692
  %v4694 = vsub.s32 %v4693, 2
  %vm4695 = vcmp.gt.s32.totalorder 0, %v4694
  %v4696 = vsel %vm4695, 0, %v4694
  %v4697 = vsub.s32 32, %v4696
  %v4698 = vshll.u32 %v4689, %v4696
  %v4699 = vshrl.u32 %v4681, %v4697
  %v4700 = vor.u32 %v4698, %v4699
  %v4701 = vsub.s32 4294967266, %v4696
  %v4702 = vadd.s32 %v4701, 127
  %v4703 = vshll.u32 %v4702, 23
  %v4704 = vor.u32 4788187, %v4703
  %v4705 = vand.u32 2147483647, %v4704
  %v4707 = vcvt.s32.f32 %v4700
  %v4708 = vmul.f32 %v4707, %v4705
  %v4709 = vxor.u32 %v4708, 2147483648
  %v4710 = vsel %vm4589, %v4709, %v4708
  %v4711 = vsub.s32 4, %v4687
  %v4712 = vsel %vm4589, %v4711, %v4687
  %v4713 = vsel %vm4588, %v424, %v4710
  %v4714 = vsel %vm4588, 0, %v4712
  %v4715 = vmul.f32 %v4713, %v4713
  %v4716 = vmul.f32 %v4715, -0.001358992
  %v4717 = vadd.f32 %v4716, 0.041655596
  %v4718 = vmul.f32 %v4715, %v4717
  %v4719 = vadd.f32 %v4718, -0.4999988
  %v4720 = vmul.f32 %v4715, %v4719
  %v4721 = vadd.f32 1.0, %v4720
  %v4722 = vmul.f32 %v4713, %v4713
  %v4723 = vmul.f32 %v4722, -0.00019511016
  %v4724 = vadd.f32 %v4723, 0.008332121
  %v4725 = vmul.f32 %v4722, %v4724
  %v4726 = vadd.f32 %v4725, -0.16666654
  %v4727 = vmul.f32 %v4722, %v4726
  %v4728 = vadd.f32 %v4727, 1.0
  %v4729 = vmul.f32 %v4728, %v4713
  %vm4730 = vweird.f32 %v424
  %v4731 = vand.u32 %v4714, 3
  %vm4732 = vcmp.lt.s32.totalorder %v4731, 2
  %vm4733 = vcmp.eq.s32.totalorder %v4731, 0
  %v4734 = vxor.u32 %v4729, 2147483648
  %v4735 = vsel %vm4733, %v4721, %v4734
  %vm4736 = vcmp.eq.s32.totalorder %v4731, 2
  %v4737 = vxor.u32 %v4721, 2147483648
  %v4738 = vsel %vm4736, %v4737, %v4729
  %v4739 = vsel %vm4732, %v4735, %v4738
  %v4740 = vsel %vm4730, nan, %v4739
  %v4741 = vand.u32 2147483647, %v425
  %vm4742 = vcmp.le.f32.partialorder %v4741, 0.7853982
  %vm4743 = vcmp.lt.s32.totalorder %v425, 0
  %v4744 = vand.u32 %v425, 2139095040
  %v4745 = vshrl.u32 %v4744, 23
  %v4746 = vsub.s32 %v4745, 127
  %v4747 = vand.u32 2147483647, %v425
  %v4748 = vand.u32 %v4747, 8388607
  %v4749 = vor.u32 %v4748, 8388608
  %v4750 = vsub.s32 0, %v4749
  %v4751 = vadd.s32 %v4746, 1
  %vm4752 = vcmp.gt.s32.totalorder %v4751, 0
  %v4753 = vsel %vm4752, %v4751, 0
  %v4754 = vshrl.u32 %v4753, 5
  %v4755 = vand.u32 %v4753, 31
  %v4756 = vsub.s32 32, %v4755
  %v4757 = vshrl.u32 683565275, %v4756
  %v4758 = vshll.u32 683565275, %v4755
  %v4759 = vshrl.u32 2475754826, %v4756
  %v4760 = vor.u32 %v4758, %v4759
  %v4761 = vshll.u32 2475754826, %v4755
  %v4762 = vshrl.u32 2131351028, %v4756
  %v4763 = vor.u32 %v4761, %v4762
  %v4764 = vshll.u32 2131351028, %v4755
  %v4765 = vshrl.u32 2102212464, %v4756
  %v4766 = vor.u32 %v4764, %v4765
  %v4767 = vshll.u32 2102212464, %v4755
  %v4768 = vshrl.u32 920167782, %v4756
  %v4769 = vor.u32 %v4767, %v4768
  %v4770 = vshll.u32 920167782, %v4755
  %v4771 = vshrl.u32 1326507024, %v4756
  %v4772 = vor.u32 %v4770, %v4771
  %vm4773 = vcmp.lt.s32.totalorder %v4754, 1
  %vm4774 = vcmp.lt.s32.totalorder %v4754, 2
  %vm4775 = vcmp.lt.s32.totalorder %v4754, 3
  %vm4776 = vcmp.lt.s32.totalorder %v4754, 4
  %v4777 = vsel %vm4773, %v4757, %v4760
  %v4778 = vsel %vm4776, %v4766, 2102212464
  %v4779 = vsel %vm4775, %v4763, %v4778
  %v4780 = vsel %vm4774, %v4777, %v4779
  %v4781 = vsel %vm4773, %v4760, %v4763
  %v4782 = vsel %vm4776, %v4769, 920167782
  %v4783 = vsel %vm4775, %v4766, %v4782
  %v4784 = vsel %vm4774, %v4781, %v4783
  %v4785 = vsel %vm4773, %v4763, %v4766
  %v4786 = vsel %vm4776, %v4772, 1326507024
  %v4787 = vsel %vm4775, %v4769, %v4786
  %v4788 = vsel %vm4774, %v4785, %v4787
  %v4789 = vshll.u32 %v4749, 8
  %v4790 = vand.u32 %v4789, 65535
  %v4791 = vshrl.u32 %v4789, 16
  %v4792 = vand.u32 %v4788, 65535
  %v4793 = vshrl.u32 %v4788, 16
  %v4794 = vmul.u32 %v4790, %v4792
  %v4795 = vmul.u32 %v4790, %v4793
  %v4796 = vmul.u32 %v4791, %v4792
  %v4797 = vmul.u32 %v4791, %v4793
  %v4798 = vshll.u32 %v4795, 16
  %v4799 = vshrl.u32 %v4795, 16
  %v4800 = vshll.u32 %v4796, 16
  %v4801 = vshrl.u32 %v4796, 16
  %vm4802 = vc.u32 %v4794, %v4798
  %v4803 = vsel %vm4802, 1, 0
  %v4804 = vadd.s32 %v4794, %v4798
  %v4805 = vadd.s32 %v4797, %v4803
  %vm4806 = vc.u32 %v4804, %v4800
  %v4807 = vsel %vm4806, 1, 0
  %v4808 = vadd.s32 %v4804, %v4800
  %v4809 = vadd.s32 %v4805, %v4807
  %v4810 = vadd.s32 %v4809, %v4799
  %v4811 = vadd.s32 %v4810, %v4801
  %v4812 = vand.u32 %v4789, 65535
  %v4813 = vshrl.u32 %v4789, 16
  %v4814 = vand.u32 %v4784, 65535
  %v4815 = vshrl.u32 %v4784, 16
  %v4816 = vmul.u32 %v4812, %v4814
  %v4817 = vmul.u32 %v4812, %v4815
  %v4818 = vmul.u32 %v4813, %v4814
  %v4819 = vmul.u32 %v4813, %v4815
  %v4820 = vshll.u32 %v4817, 16
  %v4821 = vshrl.u32 %v4817, 16
  %v4822 = vshll.u32 %v4818, 16
  %v4823 = vshrl.u32 %v4818, 16
  %vm4824 = vc.u32 %v4816, %v4820
  %v4825 = vsel %vm4824, 1, 0
  %v4826 = vadd.s32 %v4816, %v4820
  %v4827 = vadd.s32 %v4819, %v4825
  %vm4828 = vc.u32 %v4826, %v4822
  %v4829 = vsel %vm4828, 1, 0
  %v4830 = vadd.s32 %v4826, %v4822
  %v4831 = vadd.s32 %v4827, %v4829
  %v4832 = vadd.s32 %v4831, %v4821
  %v4833 = vadd.s32 %v4832, %v4823
  %v4834 = vmul.u32 %v4789, %v4780
  %v4835 = vadd.s32 %v4811, %v4830
  %vm4836 = vc.u32 %v4811, %v4830
  %v4837 = vadd.s32 %v4833, 1
  %v4838 = vsel %vm4836, %v4837, %v4833
  %v4839 = vadd.s32 %v4834, %v4838
  %v4840 = vadd.s32 %v4839, 536870912
  %v4841 = vshrl.u32 %v4840, 30
  %v4842 = vshll.u32 %v4841, 30
  %v4843 = vsub.s32 %v4839, %v4842
  %vm4844 = vcmp.lt.s32.totalorder %v4843, 0
  %v4845 = vsub.s32 0, %v4843
  %v4846 = vsel %vm4844, %v4845, %v4843
  %v4847 = vclz %v4846
  %v4848 = vsub.s32 %v4847, 2
  %vm4849 = vcmp.gt.s32.totalorder 0, %v4848
  %v4850 = vsel %vm4849, 0, %v4848
  %v4851 = vsub.s32 32, %v4850
  %v4852 = vshll.u32 %v4843, %v4850
  %v4853 = vshrl.u32 %v4835, %v4851
  %v4854 = vor.u32 %v4852, %v4853
  %v4855 = vsub.s32 4294967266, %v4850
  %v4856 = vadd.s32 %v4855, 127
  %v4857 = vshll.u32 %v4856, 23
  %v4858 = vor.u32 4788187, %v4857
  %v4859 = vand.u32 2147483647, %v4858
  %v4861 = vcvt.s32.f32 %v4854
  %v4862 = vmul.f32 %v4861, %v4859
  %v4863 = vxor.u32 %v4862, 2147483648
  %v4864 = vsel %vm4743, %v4863, %v4862
  %v4865 = vsub.s32 4, %v4841
  %v4866 = vsel %vm4743, %v4865, %v4841
  %v4867 = vsel %vm4742, %v425, %v4864
  %v4868 = vsel %vm4742, 0, %v4866
  %v4869 = vmul.f32 %v4867, %v4867
  %v4870 = vmul.f32 %v4869, -0.001358992
  %v4871 = vadd.f32 %v4870, 0.041655596
  %v4872 = vmul.f32 %v4869, %v4871
  %v4873 = vadd.f32 %v4872, -0.4999988
  %v4874 = vmul.f32 %v4869, %v4873
  %v4875 = vadd.f32 1.0, %v4874
  %v4876 = vmul.f32 %v4867, %v4867
  %v4877 = vmul.f32 %v4876, -0.00019511016
  %v4878 = vadd.f32 %v4877, 0.008332121
  %v4879 = vmul.f32 %v4876, %v4878
  %v4880 = vadd.f32 %v4879, -0.16666654
  %v4881 = vmul.f32 %v4876, %v4880
  %v4882 = vadd.f32 %v4881, 1.0
  %v4883 = vmul.f32 %v4882, %v4867
  %vm4884 = vweird.f32 %v425
  %v4885 = vand.u32 %v4868, 3
  %vm4886 = vcmp.lt.s32.totalorder %v4885, 2
  %vm4887 = vcmp.eq.s32.totalorder %v4885, 0
  %v4888 = vxor.u32 %v4883, 2147483648
  %v4889 = vsel %vm4887, %v4875, %v4888
  %vm4890 = vcmp.eq.s32.totalorder %v4885, 2
  %v4891 = vxor.u32 %v4875, 2147483648
  %v4892 = vsel %vm4890, %v4891, %v4883
  %v4893 = vsel %vm4886, %v4889, %v4892
  %v4894 = vsel %vm4884, nan, %v4893
  %v4895 = vand.u32 2147483647, %v426
  %vm4896 = vcmp.le.f32.partialorder %v4895, 0.7853982
  %vm4897 = vcmp.lt.s32.totalorder %v426, 0
  %v4898 = vand.u32 %v426, 2139095040
  %v4899 = vshrl.u32 %v4898, 23
  %v4900 = vsub.s32 %v4899, 127
  %v4901 = vand.u32 2147483647, %v426
  %v4902 = vand.u32 %v4901, 8388607
  %v4903 = vor.u32 %v4902, 8388608
  %v4904 = vsub.s32 0, %v4903
  %v4905 = vadd.s32 %v4900, 1
  %vm4906 = vcmp.gt.s32.totalorder %v4905, 0
  %v4907 = vsel %vm4906, %v4905, 0
  %v4908 = vshrl.u32 %v4907, 5
  %v4909 = vand.u32 %v4907, 31
  %v4910 = vsub.s32 32, %v4909
  %v4911 = vshrl.u32 683565275, %v4910
  %v4912 = vshll.u32 683565275, %v4909
  %v4913 = vshrl.u32 2475754826, %v4910
  %v4914 = vor.u32 %v4912, %v4913
  %v4915 = vshll.u32 2475754826, %v4909
  %v4916 = vshrl.u32 2131351028, %v4910
  %v4917 = vor.u32 %v4915, %v4916
  %v4918 = vshll.u32 2131351028, %v4909
  %v4919 = vshrl.u32 2102212464, %v4910
  %v4920 = vor.u32 %v4918, %v4919
  %v4921 = vshll.u32 2102212464, %v4909
  %v4922 = vshrl.u32 920167782, %v4910
  %v4923 = vor.u32 %v4921, %v4922
  %v4924 = vshll.u32 920167782, %v4909
  %v4925 = vshrl.u32 1326507024, %v4910
  %v4926 = vor.u32 %v4924, %v4925
  %vm4927 = vcmp.lt.s32.totalorder %v4908, 1
  %vm4928 = vcmp.lt.s32.totalorder %v4908, 2
  %vm4929 = vcmp.lt.s32.totalorder %v4908, 3
  %vm4930 = vcmp.lt.s32.totalorder %v4908, 4
  %v4931 = vsel %vm4927, %v4911, %v4914
  %v4932 = vsel %vm4930, %v4920, 2102212464
  %v4933 = vsel %vm4929, %v4917, %v4932
  %v4934 = vsel %vm4928, %v4931, %v4933
  %v4935 = vsel %vm4927, %v4914, %v4917
  %v4936 = vsel %vm4930, %v4923, 920167782
  %v4937 = vsel %vm4929, %v4920, %v4936
  %v4938 = vsel %vm4928, %v4935, %v4937
  %v4939 = vsel %vm4927, %v4917, %v4920
  %v4940 = vsel %vm4930, %v4926, 1326507024
  %v4941 = vsel %vm4929, %v4923, %v4940
  %v4942 = vsel %vm4928, %v4939, %v4941
  %v4943 = vshll.u32 %v4903, 8
  %v4944 = vand.u32 %v4943, 65535
  %v4945 = vshrl.u32 %v4943, 16
  %v4946 = vand.u32 %v4942, 65535
  %v4947 = vshrl.u32 %v4942, 16
  %v4948 = vmul.u32 %v4944, %v4946
  %v4949 = vmul.u32 %v4944, %v4947
  %v4950 = vmul.u32 %v4945, %v4946
  %v4951 = vmul.u32 %v4945, %v4947
  %v4952 = vshll.u32 %v4949, 16
  %v4953 = vshrl.u32 %v4949, 16
  %v4954 = vshll.u32 %v4950, 16
  %v4955 = vshrl.u32 %v4950, 16
  %vm4956 = vc.u32 %v4948, %v4952
  %v4957 = vsel %vm4956, 1, 0
  %v4958 = vadd.s32 %v4948, %v4952
  %v4959 = vadd.s32 %v4951, %v4957
  %vm4960 = vc.u32 %v4958, %v4954
  %v4961 = vsel %vm4960, 1, 0
  %v4962 = vadd.s32 %v4958, %v4954
  %v4963 = vadd.s32 %v4959, %v4961
  %v4964 = vadd.s32 %v4963, %v4953
  %v4965 = vadd.s32 %v4964, %v4955
  %v4966 = vand.u32 %v4943, 65535
  %v4967 = vshrl.u32 %v4943, 16
  %v4968 = vand.u32 %v4938, 65535
  %v4969 = vshrl.u32 %v4938, 16
  %v4970 = vmul.u32 %v4966, %v4968
  %v4971 = vmul.u32 %v4966, %v4969
  %v4972 = vmul.u32 %v4967, %v4968
  %v4973 = vmul.u32 %v4967, %v4969
  %v4974 = vshll.u32 %v4971, 16
  %v4975 = vshrl.u32 %v4971, 16
  %v4976 = vshll.u32 %v4972, 16
  %v4977 = vshrl.u32 %v4972, 16
  %vm4978 = vc.u32 %v4970, %v4974
  %v4979 = vsel %vm4978, 1, 0
  %v4980 = vadd.s32 %v4970, %v4974
  %v4981 = vadd.s32 %v4973, %v4979
  %vm4982 = vc.u32 %v4980, %v4976
  %v4983 = vsel %vm4982, 1, 0
  %v4984 = vadd.s32 %v4980, %v4976
  %v4985 = vadd.s32 %v4981, %v4983
  %v4986 = vadd.s32 %v4985, %v4975
  %v4987 = vadd.s32 %v4986, %v4977
  %v4988 = vmul.u32 %v4943, %v4934
  %v4989 = vadd.s32 %v4965, %v4984
  %vm4990 = vc.u32 %v4965, %v4984
  %v4991 = vadd.s32 %v4987, 1
  %v4992 = vsel %vm4990, %v4991, %v4987
  %v4993 = vadd.s32 %v4988, %v4992
  %v4994 = vadd.s32 %v4993, 536870912
  %v4995 = vshrl.u32 %v4994, 30
  %v4996 = vshll.u32 %v4995, 30
  %v4997 = vsub.s32 %v4993, %v4996
  %vm4998 = vcmp.lt.s32.totalorder %v4997, 0
  %v4999 = vsub.s32 0, %v4997
  %v5000 = vsel %vm4998, %v4999, %v4997
  %v5001 = vclz %v5000
  %v5002 = vsub.s32 %v5001, 2
  %vm5003 = vcmp.gt.s32.totalorder 0, %v5002
  %v5004 = vsel %vm5003, 0, %v5002
  %v5005 = vsub.s32 32, %v5004
  %v5006 = vshll.u32 %v4997, %v5004
  %v5007 = vshrl.u32 %v4989, %v5005
  %v5008 = vor.u32 %v5006, %v5007
  %v5009 = vsub.s32 4294967266, %v5004
  %v5010 = vadd.s32 %v5009, 127
  %v5011 = vshll.u32 %v5010, 23
  %v5012 = vor.u32 4788187, %v5011
  %v5013 = vand.u32 2147483647, %v5012
  %v5015 = vcvt.s32.f32 %v5008
  %v5016 = vmul.f32 %v5015, %v5013
  %v5017 = vxor.u32 %v5016, 2147483648
  %v5018 = vsel %vm4897, %v5017, %v5016
  %v5019 = vsub.s32 4, %v4995
  %v5020 = vsel %vm4897, %v5019, %v4995
  %v5021 = vsel %vm4896, %v426, %v5018
  %v5022 = vsel %vm4896, 0, %v5020
  %v5023 = vmul.f32 %v5021, %v5021
  %v5024 = vmul.f32 %v5023, -0.001358992
  %v5025 = vadd.f32 %v5024, 0.041655596
  %v5026 = vmul.f32 %v5023, %v5025
  %v5027 = vadd.f32 %v5026, -0.4999988
  %v5028 = vmul.f32 %v5023, %v5027
  %v5029 = vadd.f32 1.0, %v5028
  %v5030 = vmul.f32 %v5021, %v5021
  %v5031 = vmul.f32 %v5030, -0.00019511016
  %v5032 = vadd.f32 %v5031, 0.008332121
  %v5033 = vmul.f32 %v5030, %v5032
  %v5034 = vadd.f32 %v5033, -0.16666654
  %v5035 = vmul.f32 %v5030, %v5034
  %v5036 = vadd.f32 %v5035, 1.0
  %v5037 = vmul.f32 %v5036, %v5021
  %vm5038 = vweird.f32 %v426
  %v5039 = vand.u32 %v5022, 3
  %vm5040 = vcmp.lt.s32.totalorder %v5039, 2
  %vm5041 = vcmp.eq.s32.totalorder %v5039, 0
  %v5042 = vxor.u32 %v5037, 2147483648
  %v5043 = vsel %vm5041, %v5029, %v5042
  %vm5044 = vcmp.eq.s32.totalorder %v5039, 2
  %v5045 = vxor.u32 %v5029, 2147483648
  %v5046 = vsel %vm5044, %v5045, %v5037
  %v5047 = vsel %vm5040, %v5043, %v5046
  %v5048 = vsel %vm5038, nan, %v5047
  %v5049 = vand.u32 2147483647, %v427
  %vm5050 = vcmp.le.f32.partialorder %v5049, 0.7853982
  %vm5051 = vcmp.lt.s32.totalorder %v427, 0
  %v5052 = vand.u32 %v427, 2139095040
  %v5053 = vshrl.u32 %v5052, 23
  %v5054 = vsub.s32 %v5053, 127
  %v5055 = vand.u32 2147483647, %v427
  %v5056 = vand.u32 %v5055, 8388607
  %v5057 = vor.u32 %v5056, 8388608
  %v5058 = vsub.s32 0, %v5057
  %v5059 = vadd.s32 %v5054, 1
  %vm5060 = vcmp.gt.s32.totalorder %v5059, 0
  %v5061 = vsel %vm5060, %v5059, 0
  %v5062 = vshrl.u32 %v5061, 5
  %v5063 = vand.u32 %v5061, 31
  %v5064 = vsub.s32 32, %v5063
  %v5065 = vshrl.u32 683565275, %v5064
  %v5066 = vshll.u32 683565275, %v5063
  %v5067 = vshrl.u32 2475754826, %v5064
  %v5068 = vor.u32 %v5066, %v5067
  %v5069 = vshll.u32 2475754826, %v5063
  %v5070 = vshrl.u32 2131351028, %v5064
  %v5071 = vor.u32 %v5069, %v5070
  %v5072 = vshll.u32 2131351028, %v5063
  %v5073 = vshrl.u32 2102212464, %v5064
  %v5074 = vor.u32 %v5072, %v5073
  %v5075 = vshll.u32 2102212464, %v5063
  %v5076 = vshrl.u32 920167782, %v5064
  %v5077 = vor.u32 %v5075, %v5076
  %v5078 = vshll.u32 920167782, %v5063
  %v5079 = vshrl.u32 1326507024, %v5064
  %v5080 = vor.u32 %v5078, %v5079
  %vm5081 = vcmp.lt.s32.totalorder %v5062, 1
  %vm5082 = vcmp.lt.s32.totalorder %v5062, 2
  %vm5083 = vcmp.lt.s32.totalorder %v5062, 3
  %vm5084 = vcmp.lt.s32.totalorder %v5062, 4
  %v5085 = vsel %vm5081, %v5065, %v5068
  %v5086 = vsel %vm5084, %v5074, 2102212464
  %v5087 = vsel %vm5083, %v5071, %v5086
  %v5088 = vsel %vm5082, %v5085, %v5087
  %v5089 = vsel %vm5081, %v5068, %v5071
  %v5090 = vsel %vm5084, %v5077, 920167782
  %v5091 = vsel %vm5083, %v5074, %v5090
  %v5092 = vsel %vm5082, %v5089, %v5091
  %v5093 = vsel %vm5081, %v5071, %v5074
  %v5094 = vsel %vm5084, %v5080, 1326507024
  %v5095 = vsel %vm5083, %v5077, %v5094
  %v5096 = vsel %vm5082, %v5093, %v5095
  %v5097 = vshll.u32 %v5057, 8
  %v5098 = vand.u32 %v5097, 65535
  %v5099 = vshrl.u32 %v5097, 16
  %v5100 = vand.u32 %v5096, 65535
  %v5101 = vshrl.u32 %v5096, 16
  %v5102 = vmul.u32 %v5098, %v5100
  %v5103 = vmul.u32 %v5098, %v5101
  %v5104 = vmul.u32 %v5099, %v5100
  %v5105 = vmul.u32 %v5099, %v5101
  %v5106 = vshll.u32 %v5103, 16
  %v5107 = vshrl.u32 %v5103, 16
  %v5108 = vshll.u32 %v5104, 16
  %v5109 = vshrl.u32 %v5104, 16
  %vm5110 = vc.u32 %v5102, %v5106
  %v5111 = vsel %vm5110, 1, 0
  %v5112 = vadd.s32 %v5102, %v5106
  %v5113 = vadd.s32 %v5105, %v5111
  %vm5114 = vc.u32 %v5112, %v5108
  %v5115 = vsel %vm5114, 1, 0
  %v5116 = vadd.s32 %v5112, %v5108
  %v5117 = vadd.s32 %v5113, %v5115
  %v5118 = vadd.s32 %v5117, %v5107
  %v5119 = vadd.s32 %v5118, %v5109
  %v5120 = vand.u32 %v5097, 65535
  %v5121 = vshrl.u32 %v5097, 16
  %v5122 = vand.u32 %v5092, 65535
  %v5123 = vshrl.u32 %v5092, 16
  %v5124 = vmul.u32 %v5120, %v5122
  %v5125 = vmul.u32 %v5120, %v5123
  %v5126 = vmul.u32 %v5121, %v5122
  %v5127 = vmul.u32 %v5121, %v5123
  %v5128 = vshll.u32 %v5125, 16
  %v5129 = vshrl.u32 %v5125, 16
  %v5130 = vshll.u32 %v5126, 16
  %v5131 = vshrl.u32 %v5126, 16
  %vm5132 = vc.u32 %v5124, %v5128
  %v5133 = vsel %vm5132, 1, 0
  %v5134 = vadd.s32 %v5124, %v5128
  %v5135 = vadd.s32 %v5127, %v5133
  %vm5136 = vc.u32 %v5134, %v5130
  %v5137 = vsel %vm5136, 1, 0
  %v5138 = vadd.s32 %v5134, %v5130
  %v5139 = vadd.s32 %v5135, %v5137
  %v5140 = vadd.s32 %v5139, %v5129
  %v5141 = vadd.s32 %v5140, %v5131
  %v5142 = vmul.u32 %v5097, %v5088
  %v5143 = vadd.s32 %v5119, %v5138
  %vm5144 = vc.u32 %v5119, %v5138
  %v5145 = vadd.s32 %v5141, 1
  %v5146 = vsel %vm5144, %v5145, %v5141
  %v5147 = vadd.s32 %v5142, %v5146
  %v5148 = vadd.s32 %v5147, 536870912
  %v5149 = vshrl.u32 %v5148, 30
  %v5150 = vshll.u32 %v5149, 30
  %v5151 = vsub.s32 %v5147, %v5150
  %vm5152 = vcmp.lt.s32.totalorder %v5151, 0
  %v5153 = vsub.s32 0, %v5151
  %v5154 = vsel %vm5152, %v5153, %v5151
  %v5155 = vclz %v5154
  %v5156 = vsub.s32 %v5155, 2
  %vm5157 = vcmp.gt.s32.totalorder 0, %v5156
  %v5158 = vsel %vm5157, 0, %v5156
  %v5159 = vsub.s32 32, %v5158
  %v5160 = vshll.u32 %v5151, %v5158
  %v5161 = vshrl.u32 %v5143, %v5159
  %v5162 = vor.u32 %v5160, %v5161
  %v5163 = vsub.s32 4294967266, %v5158
  %v5164 = vadd.s32 %v5163, 127
  %v5165 = vshll.u32 %v5164, 23
  %v5166 = vor.u32 4788187, %v5165
  %v5167 = vand.u32 2147483647, %v5166
  %v5169 = vcvt.s32.f32 %v5162
  %v5170 = vmul.f32 %v5169, %v5167
  %v5171 = vxor.u32 %v5170, 2147483648
  %v5172 = vsel %vm5051, %v5171, %v5170
  %v5173 = vsub.s32 4, %v5149
  %v5174 = vsel %vm5051, %v5173, %v5149
  %v5175 = vsel %vm5050, %v427, %v5172
  %v5176 = vsel %vm5050, 0, %v5174
  %v5177 = vmul.f32 %v5175, %v5175
  %v5178 = vmul.f32 %v5177, -0.001358992
  %v5179 = vadd.f32 %v5178, 0.041655596
  %v5180 = vmul.f32 %v5177, %v5179
  %v5181 = vadd.f32 %v5180, -0.4999988
  %v5182 = vmul.f32 %v5177, %v5181
  %v5183 = vadd.f32 1.0, %v5182
  %v5184 = vmul.f32 %v5175, %v5175
  %v5185 = vmul.f32 %v5184, -0.00019511016
  %v5186 = vadd.f32 %v5185, 0.008332121
  %v5187 = vmul.f32 %v5184, %v5186
  %v5188 = vadd.f32 %v5187, -0.16666654
  %v5189 = vmul.f32 %v5184, %v5188
  %v5190 = vadd.f32 %v5189, 1.0
  %v5191 = vmul.f32 %v5190, %v5175
  %vm5192 = vweird.f32 %v427
  %v5193 = vand.u32 %v5176, 3
  %vm5194 = vcmp.lt.s32.totalorder %v5193, 2
  %vm5195 = vcmp.eq.s32.totalorder %v5193, 0
  %v5196 = vxor.u32 %v5191, 2147483648
  %v5197 = vsel %vm5195, %v5183, %v5196
  %vm5198 = vcmp.eq.s32.totalorder %v5193, 2
  %v5199 = vxor.u32 %v5183, 2147483648
  %v5200 = vsel %vm5198, %v5199, %v5191
  %v5201 = vsel %vm5194, %v5197, %v5200
  %v5202 = vsel %vm5192, nan, %v5201
  %v5203 = vand.u32 2147483647, %v428
  %vm5204 = vcmp.le.f32.partialorder %v5203, 0.7853982
  %vm5205 = vcmp.lt.s32.totalorder %v428, 0
  %v5206 = vand.u32 %v428, 2139095040
  %v5207 = vshrl.u32 %v5206, 23
  %v5208 = vsub.s32 %v5207, 127
  %v5209 = vand.u32 2147483647, %v428
  %v5210 = vand.u32 %v5209, 8388607
  %v5211 = vor.u32 %v5210, 8388608
  %v5212 = vsub.s32 0, %v5211
  %v5213 = vadd.s32 %v5208, 1
  %vm5214 = vcmp.gt.s32.totalorder %v5213, 0
  %v5215 = vsel %vm5214, %v5213, 0
  %v5216 = vshrl.u32 %v5215, 5
  %v5217 = vand.u32 %v5215, 31
  %v5218 = vsub.s32 32, %v5217
  %v5219 = vshrl.u32 683565275, %v5218
  %v5220 = vshll.u32 683565275, %v5217
  %v5221 = vshrl.u32 2475754826, %v5218
  %v5222 = vor.u32 %v5220, %v5221
  %v5223 = vshll.u32 2475754826, %v5217
  %v5224 = vshrl.u32 2131351028, %v5218
  %v5225 = vor.u32 %v5223, %v5224
  %v5226 = vshll.u32 2131351028, %v5217
  %v5227 = vshrl.u32 2102212464, %v5218
  %v5228 = vor.u32 %v5226, %v5227
  %v5229 = vshll.u32 2102212464, %v5217
  %v5230 = vshrl.u32 920167782, %v5218
  %v5231 = vor.u32 %v5229, %v5230
  %v5232 = vshll.u32 920167782, %v5217
  %v5233 = vshrl.u32 1326507024, %v5218
  %v5234 = vor.u32 %v5232, %v5233
  %vm5235 = vcmp.lt.s32.totalorder %v5216, 1
  %vm5236 = vcmp.lt.s32.totalorder %v5216, 2
  %vm5237 = vcmp.lt.s32.totalorder %v5216, 3
  %vm5238 = vcmp.lt.s32.totalorder %v5216, 4
  %v5239 = vsel %vm5235, %v5219, %v5222
  %v5240 = vsel %vm5238, %v5228, 2102212464
  %v5241 = vsel %vm5237, %v5225, %v5240
  %v5242 = vsel %vm5236, %v5239, %v5241
  %v5243 = vsel %vm5235, %v5222, %v5225
  %v5244 = vsel %vm5238, %v5231, 920167782
  %v5245 = vsel %vm5237, %v5228, %v5244
  %v5246 = vsel %vm5236, %v5243, %v5245
  %v5247 = vsel %vm5235, %v5225, %v5228
  %v5248 = vsel %vm5238, %v5234, 1326507024
  %v5249 = vsel %vm5237, %v5231, %v5248
  %v5250 = vsel %vm5236, %v5247, %v5249
  %v5251 = vshll.u32 %v5211, 8
  %v5252 = vand.u32 %v5251, 65535
  %v5253 = vshrl.u32 %v5251, 16
  %v5254 = vand.u32 %v5250, 65535
  %v5255 = vshrl.u32 %v5250, 16
  %v5256 = vmul.u32 %v5252, %v5254
  %v5257 = vmul.u32 %v5252, %v5255
  %v5258 = vmul.u32 %v5253, %v5254
  %v5259 = vmul.u32 %v5253, %v5255
  %v5260 = vshll.u32 %v5257, 16
  %v5261 = vshrl.u32 %v5257, 16
  %v5262 = vshll.u32 %v5258, 16
  %v5263 = vshrl.u32 %v5258, 16
  %vm5264 = vc.u32 %v5256, %v5260
  %v5265 = vsel %vm5264, 1, 0
  %v5266 = vadd.s32 %v5256, %v5260
  %v5267 = vadd.s32 %v5259, %v5265
  %vm5268 = vc.u32 %v5266, %v5262
  %v5269 = vsel %vm5268, 1, 0
  %v5270 = vadd.s32 %v5266, %v5262
  %v5271 = vadd.s32 %v5267, %v5269
  %v5272 = vadd.s32 %v5271, %v5261
  %v5273 = vadd.s32 %v5272, %v5263
  %v5274 = vand.u32 %v5251, 65535
  %v5275 = vshrl.u32 %v5251, 16
  %v5276 = vand.u32 %v5246, 65535
  %v5277 = vshrl.u32 %v5246, 16
  %v5278 = vmul.u32 %v5274, %v5276
  %v5279 = vmul.u32 %v5274, %v5277
  %v5280 = vmul.u32 %v5275, %v5276
  %v5281 = vmul.u32 %v5275, %v5277
  %v5282 = vshll.u32 %v5279, 16
  %v5283 = vshrl.u32 %v5279, 16
  %v5284 = vshll.u32 %v5280, 16
  %v5285 = vshrl.u32 %v5280, 16
  %vm5286 = vc.u32 %v5278, %v5282
  %v5287 = vsel %vm5286, 1, 0
  %v5288 = vadd.s32 %v5278, %v5282
  %v5289 = vadd.s32 %v5281, %v5287
  %vm5290 = vc.u32 %v5288, %v5284
  %v5291 = vsel %vm5290, 1, 0
  %v5292 = vadd.s32 %v5288, %v5284
  %v5293 = vadd.s32 %v5289, %v5291
  %v5294 = vadd.s32 %v5293, %v5283
  %v5295 = vadd.s32 %v5294, %v5285
  %v5296 = vmul.u32 %v5251, %v5242
  %v5297 = vadd.s32 %v5273, %v5292
  %vm5298 = vc.u32 %v5273, %v5292
  %v5299 = vadd.s32 %v5295, 1
  %v5300 = vsel %vm5298, %v5299, %v5295
  %v5301 = vadd.s32 %v5296, %v5300
  %v5302 = vadd.s32 %v5301, 536870912
  %v5303 = vshrl.u32 %v5302, 30
  %v5304 = vshll.u32 %v5303, 30
  %v5305 = vsub.s32 %v5301, %v5304
  %vm5306 = vcmp.lt.s32.totalorder %v5305, 0
  %v5307 = vsub.s32 0, %v5305
  %v5308 = vsel %vm5306, %v5307, %v5305
  %v5309 = vclz %v5308
  %v5310 = vsub.s32 %v5309, 2
  %vm5311 = vcmp.gt.s32.totalorder 0, %v5310
  %v5312 = vsel %vm5311, 0, %v5310
  %v5313 = vsub.s32 32, %v5312
  %v5314 = vshll.u32 %v5305, %v5312
  %v5315 = vshrl.u32 %v5297, %v5313
  %v5316 = vor.u32 %v5314, %v5315
  %v5317 = vsub.s32 4294967266, %v5312
  %v5318 = vadd.s32 %v5317, 127
  %v5319 = vshll.u32 %v5318, 23
  %v5320 = vor.u32 4788187, %v5319
  %v5321 = vand.u32 2147483647, %v5320
  %v5323 = vcvt.s32.f32 %v5316
  %v5324 = vmul.f32 %v5323, %v5321
  %v5325 = vxor.u32 %v5324, 2147483648
  %v5326 = vsel %vm5205, %v5325, %v5324
  %v5327 = vsub.s32 4, %v5303
  %v5328 = vsel %vm5205, %v5327, %v5303
  %v5329 = vsel %vm5204, %v428, %v5326
  %v5330 = vsel %vm5204, 0, %v5328
  %v5331 = vmul.f32 %v5329, %v5329
  %v5332 = vmul.f32 %v5331, -0.001358992
  %v5333 = vadd.f32 %v5332, 0.041655596
  %v5334 = vmul.f32 %v5331, %v5333
  %v5335 = vadd.f32 %v5334, -0.4999988
  %v5336 = vmul.f32 %v5331, %v5335
  %v5337 = vadd.f32 1.0, %v5336
  %v5338 = vmul.f32 %v5329, %v5329
  %v5339 = vmul.f32 %v5338, -0.00019511016
  %v5340 = vadd.f32 %v5339, 0.008332121
  %v5341 = vmul.f32 %v5338, %v5340
  %v5342 = vadd.f32 %v5341, -0.16666654
  %v5343 = vmul.f32 %v5338, %v5342
  %v5344 = vadd.f32 %v5343, 1.0
  %v5345 = vmul.f32 %v5344, %v5329
  %vm5346 = vweird.f32 %v428
  %v5347 = vand.u32 %v5330, 3
  %vm5348 = vcmp.lt.s32.totalorder %v5347, 2
  %vm5349 = vcmp.eq.s32.totalorder %v5347, 0
  %v5350 = vxor.u32 %v5345, 2147483648
  %v5351 = vsel %vm5349, %v5337, %v5350
  %vm5352 = vcmp.eq.s32.totalorder %v5347, 2
  %v5353 = vxor.u32 %v5337, 2147483648
  %v5354 = vsel %vm5352, %v5353, %v5345
  %v5355 = vsel %vm5348, %v5351, %v5354
  %v5356 = vsel %vm5346, nan, %v5355
  %v5357 = vld [vmem:[%s9] sm:$0xff]
  %v5358 = vld [vmem:[%s9 + $0x8] sm:$0xff]
  %v5359 = vld [vmem:[%s9 + $0x10] sm:$0xff]
  %v5360 = vld [vmem:[%s9 + $0x18] sm:$0xff]
  %v5361 = vld [vmem:[%s9 + $0x20] sm:$0xff]
  %v5362 = vld [vmem:[%s9 + $0x28] sm:$0xff]
  %v5363 = vld [vmem:[%s9 + $0x30] sm:$0xff]
  %v5364 = vld [vmem:[%s9 + $0x38] sm:$0xff]
  %v5365 = vld [vmem:[%s10] sm:$0x1]
  %v5367 = vperm.slane %v5365, 0
  %vm5369 = vcmask 523264
  %v5371 = vsel %vm5369, %v582, 0
  %v5374 = vsel %vm5369, %v736, 0
  %v5377 = vsel %vm5369, %v890, 0
  %v5380 = vsel %vm5369, %v1044, 0
  %v5383 = vsel %vm5369, %v1198, 0
  %v5386 = vsel %vm5369, %v1352, 0
  %v5389 = vsel %vm5369, %v1506, 0
  %v5392 = vsel %vm5369, %v1660, 0
  %v5395 = vsel %vm5369, %v1814, 0
  %v5398 = vsel %vm5369, %v1968, 0
  %v5401 = vsel %vm5369, %v2122, 0
  %v5404 = vsel %vm5369, %v2276, 0
  %v5407 = vsel %vm5369, %v2430, 0
  %v5410 = vsel %vm5369, %v2584, 0
  %v5413 = vsel %vm5369, %v2738, 0
  %v5416 = vsel %vm5369, %v2892, 0
  %v5419 = vsel %vm5369, %v3046, 0
  %v5422 = vsel %vm5369, %v3200, 0
  %v5425 = vsel %vm5369, %v3354, 0
  %v5428 = vsel %vm5369, %v3508, 0
  %v5431 = vsel %vm5369, %v3662, 0
  %v5434 = vsel %vm5369, %v3816, 0
  %v5437 = vsel %vm5369, %v3970, 0
  %v5440 = vsel %vm5369, %v4124, 0
  %v5443 = vsel %vm5369, %v4278, 0
  %v5446 = vsel %vm5369, %v4432, 0
  %v5449 = vsel %vm5369, %v4586, 0
  %v5452 = vsel %vm5369, %v4740, 0
  %v5455 = vsel %vm5369, %v4894, 0
  %v5458 = vsel %vm5369, %v5048, 0
  %v5461 = vsel %vm5369, %v5202, 0
  %v5464 = vsel %vm5369, %v5356, 0
  %5466 = vmatpush.msra.mxu0 0.0
  %5467 = vmatpush.msra.mxu0 0.0
  %5468 = vmatpush.msra.mxu0 0.0
  %5469 = vmatpush.msra.mxu0 0.0
  %5470 = vmatpush.msra.mxu0 0.0
  %5471 = vmatpush.msra.mxu0 0.0
  %5472 = vmatpush.msra.mxu0 0.0
  %5473 = vmatpush.msra.mxu0 0.0
  %5474 = vmatpush.msra.mxu0 %v5364
  %5475 = vmatpush.msra.mxu0 %v5363
  %5476 = vmatpush.msra.mxu0 %v5362
  %5477 = vmatpush.msra.mxu0 %v5361
  %5478 = vmatpush.msra.mxu0 %v5360
  %5479 = vmatpush.msra.mxu0 %v5359
  %5480 = vmatpush.msra.mxu0 %v5358
  %5481 = vmatpush.msra.mxu0 %v5357
  %5482 = vmatmul.f32.gmra.mxu0 %v5371
  %v5483 = vpop.f32.mrf.mxu0
  %v5484 = vadd.f32 %v5367, %v5483
  %5485 = vmatmul.f32.gmra.mxu0 %v5374
  %v5486 = vpop.f32.mrf.mxu0
  %v5487 = vadd.f32 %v5367, %v5486
  %5488 = vmatmul.f32.gmra.mxu0 %v5377
  %v5489 = vpop.f32.mrf.mxu0
  %v5490 = vadd.f32 %v5367, %v5489
  %5491 = vmatmul.f32.gmra.mxu0 %v5380
  %v5492 = vpop.f32.mrf.mxu0
  %v5493 = vadd.f32 %v5367, %v5492
  %5494 = vmatmul.f32.gmra.mxu0 %v5383
  %v5495 = vpop.f32.mrf.mxu0
  %v5496 = vadd.f32 %v5367, %v5495
  %5497 = vmatmul.f32.gmra.mxu0 %v5386
  %v5498 = vpop.f32.mrf.mxu0
  %v5499 = vadd.f32 %v5367, %v5498
  %5500 = vmatmul.f32.gmra.mxu0 %v5389
  %v5501 = vpop.f32.mrf.mxu0
  %v5502 = vadd.f32 %v5367, %v5501
  %5503 = vmatmul.f32.gmra.mxu0 %v5392
  %v5504 = vpop.f32.mrf.mxu0
  %v5505 = vadd.f32 %v5367, %v5504
  %5506 = vmatmul.f32.gmra.mxu0 %v5395
  %v5507 = vpop.f32.mrf.mxu0
  %v5508 = vadd.f32 %v5367, %v5507
  %5509 = vmatmul.f32.gmra.mxu0 %v5398
  %v5510 = vpop.f32.mrf.mxu0
  %v5511 = vadd.f32 %v5367, %v5510
  %5512 = vmatmul.f32.gmra.mxu0 %v5401
  %v5513 = vpop.f32.mrf.mxu0
  %v5514 = vadd.f32 %v5367, %v5513
  %5515 = vmatmul.f32.gmra.mxu0 %v5404
  %v5516 = vpop.f32.mrf.mxu0
  %v5517 = vadd.f32 %v5367, %v5516
  %5518 = vmatmul.f32.gmra.mxu0 %v5407
  %v5519 = vpop.f32.mrf.mxu0
  %v5520 = vadd.f32 %v5367, %v5519
  %5521 = vmatmul.f32.gmra.mxu0 %v5410
  %v5522 = vpop.f32.mrf.mxu0
  %v5523 = vadd.f32 %v5367, %v5522
  %5524 = vmatmul.f32.gmra.mxu0 %v5413
  %v5525 = vpop.f32.mrf.mxu0
  %v5526 = vadd.f32 %v5367, %v5525
  %5527 = vmatmul.f32.gmra.mxu0 %v5416
  %v5528 = vpop.f32.mrf.mxu0
  %v5529 = vadd.f32 %v5367, %v5528
  %5530 = vmatmul.f32.gmra.mxu0 %v5419
  %v5531 = vpop.f32.mrf.mxu0
  %v5532 = vadd.f32 %v5367, %v5531
  %5533 = vmatmul.f32.gmra.mxu0 %v5422
  %v5534 = vpop.f32.mrf.mxu0
  %v5535 = vadd.f32 %v5367, %v5534
  %5536 = vmatmul.f32.gmra.mxu0 %v5425
  %v5537 = vpop.f32.mrf.mxu0
  %v5538 = vadd.f32 %v5367, %v5537
  %5539 = vmatmul.f32.gmra.mxu0 %v5428
  %v5540 = vpop.f32.mrf.mxu0
  %v5541 = vadd.f32 %v5367, %v5540
  %5542 = vmatmul.f32.gmra.mxu0 %v5431
  %v5543 = vpop.f32.mrf.mxu0
  %v5544 = vadd.f32 %v5367, %v5543
  %5545 = vmatmul.f32.gmra.mxu0 %v5434
  %v5546 = vpop.f32.mrf.mxu0
  %v5547 = vadd.f32 %v5367, %v5546
  %5548 = vmatmul.f32.gmra.mxu0 %v5437
  %v5549 = vpop.f32.mrf.mxu0
  %v5550 = vadd.f32 %v5367, %v5549
  %5551 = vmatmul.f32.gmra.mxu0 %v5440
  %v5552 = vpop.f32.mrf.mxu0
  %v5553 = vadd.f32 %v5367, %v5552
  %5554 = vmatmul.f32.gmra.mxu0 %v5443
  %v5555 = vpop.f32.mrf.mxu0
  %v5556 = vadd.f32 %v5367, %v5555
  %5557 = vmatmul.f32.gmra.mxu0 %v5446
  %v5558 = vpop.f32.mrf.mxu0
  %v5559 = vadd.f32 %v5367, %v5558
  %5560 = vmatmul.f32.gmra.mxu0 %v5449
  %v5561 = vpop.f32.mrf.mxu0
  %v5562 = vadd.f32 %v5367, %v5561
  %5563 = vmatmul.f32.gmra.mxu0 %v5452
  %v5564 = vpop.f32.mrf.mxu0
  %v5565 = vadd.f32 %v5367, %v5564
  %5566 = vmatmul.f32.gmra.mxu0 %v5455
  %v5567 = vpop.f32.mrf.mxu0
  %v5568 = vadd.f32 %v5367, %v5567
  %5569 = vmatmul.f32.gmra.mxu0 %v5458
  %v5570 = vpop.f32.mrf.mxu0
  %v5571 = vadd.f32 %v5367, %v5570
  %5572 = vmatmul.f32.gmra.mxu0 %v5461
  %v5573 = vpop.f32.mrf.mxu0
  %v5574 = vadd.f32 %v5367, %v5573
  %5575 = vmatmul.f32.gmra.mxu0 %v5464
  %v5576 = vpop.f32.mrf.mxu0
  %v5577 = vadd.f32 %v5367, %v5576
  %5578 = vdwg.mxu0
  %v5579 = vmax.f32 %v5484, 0.0
  %v5580 = vmax.f32 %v5487, 0.0
  %v5581 = vmax.f32 %v5490, 0.0
  %v5582 = vmax.f32 %v5493, 0.0
  %v5583 = vmax.f32 %v5496, 0.0
  %v5584 = vmax.f32 %v5499, 0.0
  %v5585 = vmax.f32 %v5502, 0.0
  %v5586 = vmax.f32 %v5505, 0.0
  %v5587 = vmax.f32 %v5508, 0.0
  %v5588 = vmax.f32 %v5511, 0.0
  %v5589 = vmax.f32 %v5514, 0.0
  %v5590 = vmax.f32 %v5517, 0.0
  %v5591 = vmax.f32 %v5520, 0.0
  %v5592 = vmax.f32 %v5523, 0.0
  %v5593 = vmax.f32 %v5526, 0.0
  %v5594 = vmax.f32 %v5529, 0.0
  %v5595 = vmax.f32 %v5532, 0.0
  %v5596 = vmax.f32 %v5535, 0.0
  %v5597 = vmax.f32 %v5538, 0.0
  %v5598 = vmax.f32 %v5541, 0.0
  %v5599 = vmax.f32 %v5544, 0.0
  %v5600 = vmax.f32 %v5547, 0.0
  %v5601 = vmax.f32 %v5550, 0.0
  %v5602 = vmax.f32 %v5553, 0.0
  %v5603 = vmax.f32 %v5556, 0.0
  %v5604 = vmax.f32 %v5559, 0.0
  %v5605 = vmax.f32 %v5562, 0.0
  %v5606 = vmax.f32 %v5565, 0.0
  %v5607 = vmax.f32 %v5568, 0.0
  %v5608 = vmax.f32 %v5571, 0.0
  %v5609 = vmax.f32 %v5574, 0.0
  %v5610 = vmax.f32 %v5577, 0.0
  %v5611 = vld [vmem:[%s11] sm:$0x1]
  %v5613 = vperm.slane %v5611, 0
  %v5615 = vmul.f32 %v107, %v5613
  %v5617 = vrot.slane %v5615, 1
  %v5618 = vrot.slane %v5615, 2
  %v5619 = vrot.slane %v5615, 3
  %v5620 = vrot.slane %v5615, 4
  %v5621 = vrot.slane %v5615, 5
  %v5622 = vrot.slane %v5615, 6
  %v5623 = vrot.slane %v5615, 7
  %v5624 = vperm.slane %v5615, 0
  %v5625 = vperm.slane %v5617, 0
  %v5626 = vperm.slane %v5618, 0
  %v5627 = vperm.slane %v5619, 0
  %v5628 = vperm.slane %v5620, 0
  %v5629 = vperm.slane %v5621, 0
  %v5630 = vperm.slane %v5622, 0
  %v5631 = vperm.slane %v5623, 0
  %v5640 = vmul.f32 %v5579, %v5624
  %v5641 = vmul.f32 %v5580, %v5624
  %v5642 = vmul.f32 %v5581, %v5624
  %v5643 = vmul.f32 %v5582, %v5624
  %v5644 = vmul.f32 %v5583, %v5625
  %v5645 = vmul.f32 %v5584, %v5625
  %v5646 = vmul.f32 %v5585, %v5625
  %v5647 = vmul.f32 %v5586, %v5625
  %v5648 = vmul.f32 %v5587, %v5626
  %v5649 = vmul.f32 %v5588, %v5626
  %v5650 = vmul.f32 %v5589, %v5626
  %v5651 = vmul.f32 %v5590, %v5626
  %v5652 = vmul.f32 %v5591, %v5627
  %v5653 = vmul.f32 %v5592, %v5627
  %v5654 = vmul.f32 %v5593, %v5627
  %v5655 = vmul.f32 %v5594, %v5627
  %v5656 = vmul.f32 %v5595, %v5628
  %v5657 = vmul.f32 %v5596, %v5628
  %v5658 = vmul.f32 %v5597, %v5628
  %v5659 = vmul.f32 %v5598, %v5628
  %v5660 = vmul.f32 %v5599, %v5629
  %v5661 = vmul.f32 %v5600, %v5629
  %v5662 = vmul.f32 %v5601, %v5629
  %v5663 = vmul.f32 %v5602, %v5629
  %v5664 = vmul.f32 %v5603, %v5630
  %v5665 = vmul.f32 %v5604, %v5630
  %v5666 = vmul.f32 %v5605, %v5630
  %v5667 = vmul.f32 %v5606, %v5630
  %v5668 = vmul.f32 %v5607, %v5631
  %v5669 = vmul.f32 %v5608, %v5631
  %v5670 = vmul.f32 %v5609, %v5631
  %v5671 = vmul.f32 %v5610, %v5631
  %v5672 = vsel %vm116, %v5640, 0.0
  %5673 = vadd.xlane.f32.xlu0 %v5672
  %v5674 = vpop.xlane.xlu0 %5673
  %v5675 = vsel %vm116, %v5641, 0.0
  %5676 = vadd.xlane.f32.xlu0 %v5675
  %v5677 = vpop.xlane.xlu0 %5676
  %v5678 = vsel %vm116, %v5642, 0.0
  %5679 = vadd.xlane.f32.xlu0 %v5678
  %v5680 = vpop.xlane.xlu0 %5679
  %v5681 = vsel %vm116, %v5643, 0.0
  %5682 = vadd.xlane.f32.xlu0 %v5681
  %v5683 = vpop.xlane.xlu0 %5682
  %v5684 = vsel %vm116, %v5644, 0.0
  %5685 = vadd.xlane.f32.xlu0 %v5684
  %v5686 = vpop.xlane.xlu0 %5685
  %v5687 = vsel %vm116, %v5645, 0.0
  %5688 = vadd.xlane.f32.xlu0 %v5687
  %v5689 = vpop.xlane.xlu0 %5688
  %v5690 = vsel %vm116, %v5646, 0.0
  %5691 = vadd.xlane.f32.xlu0 %v5690
  %v5692 = vpop.xlane.xlu0 %5691
  %v5693 = vsel %vm116, %v5647, 0.0
  %5694 = vadd.xlane.f32.xlu0 %v5693
  %v5695 = vpop.xlane.xlu0 %5694
  %v5696 = vsel %vm116, %v5648, 0.0
  %5697 = vadd.xlane.f32.xlu0 %v5696
  %v5698 = vpop.xlane.xlu0 %5697
  %v5699 = vsel %vm116, %v5649, 0.0
  %5700 = vadd.xlane.f32.xlu0 %v5699
  %v5701 = vpop.xlane.xlu0 %5700
  %v5702 = vsel %vm116, %v5650, 0.0
  %5703 = vadd.xlane.f32.xlu0 %v5702
  %v5704 = vpop.xlane.xlu0 %5703
  %v5705 = vsel %vm116, %v5651, 0.0
  %5706 = vadd.xlane.f32.xlu0 %v5705
  %v5707 = vpop.xlane.xlu0 %5706
  %v5708 = vsel %vm116, %v5652, 0.0
  %5709 = vadd.xlane.f32.xlu0 %v5708
  %v5710 = vpop.xlane.xlu0 %5709
  %v5711 = vsel %vm116, %v5653, 0.0
  %5712 = vadd.xlane.f32.xlu0 %v5711
  %v5713 = vpop.xlane.xlu0 %5712
  %v5714 = vsel %vm116, %v5654, 0.0
  %5715 = vadd.xlane.f32.xlu0 %v5714
  %v5716 = vpop.xlane.xlu0 %5715
  %v5717 = vsel %vm116, %v5655, 0.0
  %5718 = vadd.xlane.f32.xlu0 %v5717
  %v5719 = vpop.xlane.xlu0 %5718
  %v5720 = vsel %vm116, %v5656, 0.0
  %5721 = vadd.xlane.f32.xlu0 %v5720
  %v5722 = vpop.xlane.xlu0 %5721
  %v5723 = vsel %vm116, %v5657, 0.0
  %5724 = vadd.xlane.f32.xlu0 %v5723
  %v5725 = vpop.xlane.xlu0 %5724
  %v5726 = vsel %vm116, %v5658, 0.0
  %5727 = vadd.xlane.f32.xlu0 %v5726
  %v5728 = vpop.xlane.xlu0 %5727
  %v5729 = vsel %vm116, %v5659, 0.0
  %5730 = vadd.xlane.f32.xlu0 %v5729
  %v5731 = vpop.xlane.xlu0 %5730
  %v5732 = vsel %vm116, %v5660, 0.0
  %5733 = vadd.xlane.f32.xlu0 %v5732
  %v5734 = vpop.xlane.xlu0 %5733
  %v5735 = vsel %vm116, %v5661, 0.0
  %5736 = vadd.xlane.f32.xlu0 %v5735
  %v5737 = vpop.xlane.xlu0 %5736
  %v5738 = vsel %vm116, %v5662, 0.0
  %5739 = vadd.xlane.f32.xlu0 %v5738
  %v5740 = vpop.xlane.xlu0 %5739
  %v5741 = vsel %vm116, %v5663, 0.0
  %5742 = vadd.xlane.f32.xlu0 %v5741
  %v5743 = vpop.xlane.xlu0 %5742
  %v5744 = vsel %vm116, %v5664, 0.0
  %5745 = vadd.xlane.f32.xlu0 %v5744
  %v5746 = vpop.xlane.xlu0 %5745
  %v5747 = vsel %vm116, %v5665, 0.0
  %5748 = vadd.xlane.f32.xlu0 %v5747
  %v5749 = vpop.xlane.xlu0 %5748
  %v5750 = vsel %vm116, %v5666, 0.0
  %5751 = vadd.xlane.f32.xlu0 %v5750
  %v5752 = vpop.xlane.xlu0 %5751
  %v5753 = vsel %vm116, %v5667, 0.0
  %5754 = vadd.xlane.f32.xlu0 %v5753
  %v5755 = vpop.xlane.xlu0 %5754
  %v5756 = vsel %vm116, %v5668, 0.0
  %5757 = vadd.xlane.f32.xlu0 %v5756
  %v5758 = vpop.xlane.xlu0 %5757
  %v5759 = vsel %vm116, %v5669, 0.0
  %5760 = vadd.xlane.f32.xlu0 %v5759
  %v5761 = vpop.xlane.xlu0 %5760
  %v5762 = vsel %vm116, %v5670, 0.0
  %5763 = vadd.xlane.f32.xlu0 %v5762
  %v5764 = vpop.xlane.xlu0 %5763
  %v5765 = vsel %vm116, %v5671, 0.0
  %5766 = vadd.xlane.f32.xlu0 %v5765
  %v5767 = vpop.xlane.xlu0 %5766
  %s5768 = sld [smem:[#allocation2]]
  %v5769 = vstv %s5768
  %v5770 = vadd.f32 %v5674, %v5769
  %v5771 = vadd.f32 %v5677, %v5769
  %v5772 = vadd.f32 %v5680, %v5769
  %v5773 = vadd.f32 %v5683, %v5769
  %v5774 = vadd.f32 %v5686, %v5769
  %v5775 = vadd.f32 %v5689, %v5769
  %v5776 = vadd.f32 %v5692, %v5769
  %v5777 = vadd.f32 %v5695, %v5769
  %v5778 = vadd.f32 %v5698, %v5769
  %v5779 = vadd.f32 %v5701, %v5769
  %v5780 = vadd.f32 %v5704, %v5769
  %v5781 = vadd.f32 %v5707, %v5769
  %v5782 = vadd.f32 %v5710, %v5769
  %v5783 = vadd.f32 %v5713, %v5769
  %v5784 = vadd.f32 %v5716, %v5769
  %v5785 = vadd.f32 %v5719, %v5769
  %v5786 = vadd.f32 %v5722, %v5769
  %v5787 = vadd.f32 %v5725, %v5769
  %v5788 = vadd.f32 %v5728, %v5769
  %v5789 = vadd.f32 %v5731, %v5769
  %v5790 = vadd.f32 %v5734, %v5769
  %v5791 = vadd.f32 %v5737, %v5769
  %v5792 = vadd.f32 %v5740, %v5769
  %v5793 = vadd.f32 %v5743, %v5769
  %v5794 = vadd.f32 %v5746, %v5769
  %v5795 = vadd.f32 %v5749, %v5769
  %v5796 = vadd.f32 %v5752, %v5769
  %v5797 = vadd.f32 %v5755, %v5769
  %v5798 = vadd.f32 %v5758, %v5769
  %v5799 = vadd.f32 %v5761, %v5769
  %v5800 = vadd.f32 %v5764, %v5769
  %v5801 = vadd.f32 %v5767, %v5769
  %v5834 = vlaneseq
  %v5835 = vand.u32 %v5834, 127
  %v5836 = vperm.slane %v5770, %v5835
  %v5837 = vadd.s32 %v5835, 4294967288
  %v5838 = vperm.slane %v5771, %v5837
  %vm5839 = vcmask 130112
  %v5840 = vsel %vm5839, %v5838, %v5836
  %v5841 = vadd.s32 %v5835, 4294967280
  %v5842 = vperm.slane %v5772, %v5841
  %vm5843 = vcmask 195712
  %v5844 = vsel %vm5843, %v5842, %v5840
  %v5845 = vadd.s32 %v5835, 4294967272
  %v5846 = vperm.slane %v5773, %v5845
  %vm5847 = vcmask 261312
  %v5848 = vsel %vm5847, %v5846, %v5844
  %v5849 = vperm.slane %v5774, %v5835
  %v5850 = vperm.slane %v5775, %v5837
  %v5851 = vsel %vm5839, %v5850, %v5849
  %v5852 = vperm.slane %v5776, %v5841
  %v5853 = vsel %vm5843, %v5852, %v5851
  %v5854 = vperm.slane %v5777, %v5845
  %v5855 = vsel %vm5847, %v5854, %v5853
  %v5856 = vperm.slane %v5778, %v5835
  %v5857 = vperm.slane %v5779, %v5837
  %v5858 = vsel %vm5839, %v5857, %v5856
  %v5859 = vperm.slane %v5780, %v5841
  %v5860 = vsel %vm5843, %v5859, %v5858
  %v5861 = vperm.slane %v5781, %v5845
  %v5862 = vsel %vm5847, %v5861, %v5860
  %v5863 = vperm.slane %v5782, %v5835
  %v5864 = vperm.slane %v5783, %v5837
  %v5865 = vsel %vm5839, %v5864, %v5863
  %v5866 = vperm.slane %v5784, %v5841
  %v5867 = vsel %vm5843, %v5866, %v5865
  %v5868 = vperm.slane %v5785, %v5845
  %v5869 = vsel %vm5847, %v5868, %v5867
  %v5870 = vperm.slane %v5786, %v5835
  %v5871 = vperm.slane %v5787, %v5837
  %v5872 = vsel %vm5839, %v5871, %v5870
  %v5873 = vperm.slane %v5788, %v5841
  %v5874 = vsel %vm5843, %v5873, %v5872
  %v5875 = vperm.slane %v5789, %v5845
  %v5876 = vsel %vm5847, %v5875, %v5874
  %v5877 = vperm.slane %v5790, %v5835
  %v5878 = vperm.slane %v5791, %v5837
  %v5879 = vsel %vm5839, %v5878, %v5877
  %v5880 = vperm.slane %v5792, %v5841
  %v5881 = vsel %vm5843, %v5880, %v5879
  %v5882 = vperm.slane %v5793, %v5845
  %v5883 = vsel %vm5847, %v5882, %v5881
  %v5884 = vperm.slane %v5794, %v5835
  %v5885 = vperm.slane %v5795, %v5837
  %v5886 = vsel %vm5839, %v5885, %v5884
  %v5887 = vperm.slane %v5796, %v5841
  %v5888 = vsel %vm5843, %v5887, %v5886
  %v5889 = vperm.slane %v5797, %v5845
  %v5890 = vsel %vm5847, %v5889, %v5888
  %v5891 = vperm.slane %v5798, %v5835
  %v5892 = vperm.slane %v5799, %v5837
  %v5893 = vsel %vm5839, %v5892, %v5891
  %v5894 = vperm.slane %v5800, %v5841
  %v5895 = vsel %vm5843, %v5894, %v5893
  %v5896 = vperm.slane %v5801, %v5845
  %v5897 = vsel %vm5847, %v5896, %v5895
  %vm5898 = vcmask 1041409
  %v5899 = vsel %vm5898, %v5855, %v5848
  %vm5900 = vcmask 1042434
  %v5901 = vsel %vm5900, %v5862, %v5899
  %vm5902 = vcmask 1043459
  %v5903 = vsel %vm5902, %v5869, %v5901
  %vm5904 = vcmask 1044484
  %v5905 = vsel %vm5904, %v5876, %v5903
  %vm5906 = vcmask 1045509
  %v5907 = vsel %vm5906, %v5883, %v5905
  %vm5908 = vcmask 1046534
  %v5909 = vsel %vm5908, %v5890, %v5907
  %vm5910 = vcmask 1047559
  %v5911 = vsel %vm5910, %v5897, %v5909
  %v5913 = vmul.f32 %v163, %v5911
  %v5914 = vsel %vm116, %v5913, 0.0
  %5915 = vadd.xlane.f32.xlu0 %v5914
  %v5916 = vpop.xlane.xlu0 %5915
  %vm5917 = vcmask 7168
  %5918 = vst.msk [vmem:[%s13] sm:$0xff] %vm5917, %v5916
  // Predicated region
  $region54: #{tpu_custom_call.1} parent=0 // pred_check
    _
  $region55: #{tpu_custom_call.1} parent=0 // pred_check_branch
    %5920 = sbr.rel (0) target = $region57
  $region56: #{tpu_custom_call.1} parent=0 // pred_region
    _
  $region57: #{tpu_custom_call.1} parent=0 // pred_fallthru
    _
  // Predicated region
  $region58: #{tpu_custom_call.1} parent=0 // pred_check
    _
  $region59: #{tpu_custom_call.1} parent=0 // pred_check_branch
    %5922 = sbr.rel (0) target = $region61
  $region60: #{tpu_custom_call.1} parent=0 // pred_region
    _
  $region61: #{tpu_custom_call.1} parent=0 // pred_fallthru
    _

</llo_original>
